<compile_context>
chip_gen: v7x
topology: tpu7x:2x2x1
jax: 0.10.0
libtpu: 0.0.40
codegen_flags: <defaults>
</compile_context>

<pallas_src>
import functools

import jax
import jax.numpy as jnp
from jax.experimental import pallas as pl
from jax.experimental.pallas import tpu as pltpu

# ----------------------------------------------------------------------------
# Hyperparameters ("args") -- small, forward-consistent shapes
# ----------------------------------------------------------------------------
VOCAB_SIZE    = 50
SEQ_LENGTH    = 8          # stands in for the hard-coded 2048 in the reference
D_MODEL       = 32
D_FF          = 64
NUM_HEADS     = 4          # D_MODEL % NUM_HEADS == 0
NUM_HEADS_GAT = 2
INIT_NODE_F   = 16
NODE_F        = D_MODEL    # GAT1 output dim == d_model, consumed by GAT2
N_NODES       = 16
BATCH         = 2
NUM_LAYERS    = 6
LN_EPS        = 1e-5


# ----------------------------------------------------------------------------
# Pallas kernel: fused transformer stack (6 encoder layers + both aggregators)
# ----------------------------------------------------------------------------
def _stack_kernel(embed_ref, pair1_ref, pair2_ref,
                  wqkv_ref, bqkv_ref, wo_ref, w1_ref, b1_ref, w2_ref, vec_ref,
                  a1w_ref, a1b_ref, a2w_ref, a2b_ref,
                  o_ref, h_ref, *, num_heads):
    l = pl.program_id(1)                       # layer index (innermost grid axis)
    last = pl.num_programs(1) - 1
    bt, S, D = embed_ref.shape
    BS = bt * S
    H = num_heads
    Dh = D // H
    scale = 1.0 / float(Dh) ** 0.5
    bf16 = jnp.bfloat16

    # layer-0: load the embedding into the resident VMEM state
    @pl.when(l == 0)
    def _init():
        h_ref[...] = embed_ref[...].reshape(BS, D)

    x = h_ref[...]                             # (BS, D) f32, resident across layers

    # packed per-layer vectors: rows = [bo, ln1_g, ln1_b, b2, ln2_g, ln2_b]
    vec = vec_ref[0]                           # (6, D) f32
    bo, g1, be1, b2v, g2, be2 = (vec[0:1], vec[1:2], vec[2:3],
                                 vec[3:4], vec[4:5], vec[5:6])

    # ---- multi-head self-attention -----------------------------------------
    # fused QKV projection: one (BS,D)@(D,3D) matmul, bf16 operands, f32 accum
    qkv = jnp.dot(x.astype(bf16), wqkv_ref[0],
                  preferred_element_type=jnp.float32) + bqkv_ref[0]   # (BS, 3D)

    def split_heads(m):                        # (BS, D) -> (H*bt, S, Dh)
        return jnp.concatenate(
            [m[:, h * Dh:(h + 1) * Dh].reshape(bt, S, Dh) for h in range(H)],
            axis=0)

    q = split_heads(qkv[:, 0 * D:1 * D]) * scale
    k = split_heads(qkv[:, 1 * D:2 * D])
    v = split_heads(qkv[:, 2 * D:3 * D])

    # heads x batch folded into the einsum batch axis -> single batched matmuls
    s = jnp.einsum('bqd,bkd->bqk', q.astype(bf16), k.astype(bf16),
                   preferred_element_type=jnp.float32)                # (H*bt, S, S)
    s = s - jnp.max(s, axis=-1, keepdims=True)
    p = jnp.exp(s)
    p = p * pl.reciprocal(jnp.sum(p, axis=-1, keepdims=True), approx=True)
    pv = jnp.einsum('bqk,bkd->bqd', p.astype(bf16), v.astype(bf16),
                    preferred_element_type=jnp.float32)               # (H*bt, S, Dh)

    # re-assemble heads lane-dense and apply the output projection as one matmul
    attn = jnp.concatenate([pv[h * bt:(h + 1) * bt] for h in range(H)],
                           axis=-1).reshape(BS, D)
    attn = jnp.dot(attn.astype(bf16), wo_ref[0],
                   preferred_element_type=jnp.float32) + bo
    # TODO(synk): encoder dropout (p=0.1) treated as inference-mode identity.

    # ---- residual + LayerNorm 1 (post-LN, f32 math) -------------------------
    x1 = x + attn
    mu = jnp.mean(x1, axis=-1, keepdims=True)
    xc = x1 - mu
    var = jnp.mean(xc * xc, axis=-1, keepdims=True)
    x1 = xc * jax.lax.rsqrt(var + LN_EPS) * g1 + be1

    # ---- feed-forward (ReLU) ------------------------------------------------
    hmid = jnp.dot(x1.astype(bf16), w1_ref[0],
                   preferred_element_type=jnp.float32) + b1_ref[0]
    hmid = jnp.maximum(hmid, 0.0)
    ff = jnp.dot(hmid.astype(bf16), w2_ref[0],
                 preferred_element_type=jnp.float32) + b2v

    # ---- residual + LayerNorm 2 ---------------------------------------------
    x2 = x1 + ff
    mu2 = jnp.mean(x2, axis=-1, keepdims=True)
    xc2 = x2 - mu2
    var2 = jnp.mean(xc2 * xc2, axis=-1, keepdims=True)
    y = xc2 * jax.lax.rsqrt(var2 + LN_EPS) * g2 + be2                 # (BS, D)

    # ---- layer epilogue: aggregator1 after layer 0, plain carry otherwise ---
    @pl.when(l == 0)
    def _agg1():
        p1 = pair1_ref[...].reshape(BS, D)
        z = jnp.dot(jnp.concatenate([y, p1], axis=-1).astype(bf16), a1w_ref[...],
                    preferred_element_type=jnp.float32) + a1b_ref[...]
        h_ref[...] = jnp.maximum(z, 0.0)

    @pl.when(l > 0)
    def _carry():
        h_ref[...] = y

    # ---- after the last layer: aggregator2, write the output ----------------
    @pl.when(l == last)
    def _agg2():
        p2 = pair2_ref[...].reshape(BS, D)
        z = jnp.dot(jnp.concatenate([y, p2], axis=-1).astype(bf16), a2w_ref[...],
                    preferred_element_type=jnp.float32) + a2b_ref[...]
        o_ref[...] = jnp.maximum(z, 0.0).reshape(bt, S, D)


def transformer_stack(embed, pair1, pair2, params):
    """Runs Transformer1 -> agg1 -> Transformer2..6 -> agg2 in ONE pallas_call."""
    B, S, D = embed.shape
    Dff = D_FF
    tp = params['tr']
    L = tp['wqkv'].shape[0]
    # whole batch per grid step (B*S rows fill the sublanes at these shapes);
    # the batch axis stays a 'parallel' grid dim so larger B splits across cores.
    b_tile = B
    grid = (B // b_tile, L)

    act = lambda: pl.BlockSpec((b_tile, S, D), lambda bi, l: (bi, 0, 0))
    lyr = lambda shape: pl.BlockSpec((1,) + shape, lambda bi, l: (l, 0, 0))
    cst = lambda shape: pl.BlockSpec(shape, lambda bi, l: (0, 0))

    # TODO(synk): at the reference seq_length=2048 the dense (S,S) scores must be
    # flash/KV-tiled (online softmax) to stay inside VMEM; fine at S=8.
    return pl.pallas_call(
        functools.partial(_stack_kernel, num_heads=NUM_HEADS),
        out_shape=jax.ShapeDtypeStruct((B, S, D), jnp.float32),
        grid=grid,
        in_specs=[
            act(), act(), act(),
            lyr((D, 3 * D)), lyr((1, 3 * D)),
            lyr((D, D)),
            lyr((D, Dff)), lyr((1, Dff)),
            lyr((Dff, D)),
            lyr((6, D)),
            cst((2 * D, D)), cst((1, D)),
            cst((2 * D, D)), cst((1, D)),
        ],
        out_specs=act(),
        scratch_shapes=[pltpu.VMEM((b_tile * S, D), jnp.float32)],
        compiler_params=pltpu.CompilerParams(
            dimension_semantics=("parallel", "arbitrary")),
    )(embed, pair1, pair2,
      tp['wqkv'], tp['bqkv'], tp['wo'], tp['w1'], tp['b1'], tp['w2'], tp['vec'],
      params['agg1_w'], params['agg1_b'], params['agg2_w'], params['agg2_b'])


# ----------------------------------------------------------------------------
# Pallas kernel: fused bottleneck + classifier head
# ----------------------------------------------------------------------------
def _head_kernel(x_ref, wb_ref, bb_ref, wc_ref, bc_ref, o_ref):
    # TODO(synk): at the real seq_length=2048 (K = 65536) the bottleneck matmul
    # should be K-tiled with an 'arbitrary' grid axis + f32 VMEM accumulator.
    x = x_ref[...].astype(jnp.bfloat16)
    h = jnp.dot(x, wb_ref[...], preferred_element_type=jnp.float32) + bb_ref[...]
    out = jnp.dot(h.astype(jnp.bfloat16), wc_ref[...],
                  preferred_element_type=jnp.float32) + bc_ref[...]
    o_ref[...] = out.astype(o_ref.dtype)


def head_forward(x, params):
    B, K = x.shape
    return pl.pallas_call(
        _head_kernel,
        out_shape=jax.ShapeDtypeStruct((B, 2), jnp.float32),
        grid=(1,),
        in_specs=[
            pl.BlockSpec((B, K), lambda i: (0, 0)),
            pl.BlockSpec((K, 32), lambda i: (0, 0)),
            pl.BlockSpec((1, 32), lambda i: (0, 0)),
            pl.BlockSpec((32, 2), lambda i: (0, 0)),
            pl.BlockSpec((1, 2), lambda i: (0, 0)),
        ],
        out_specs=pl.BlockSpec((B, 2), lambda i: (0, 0)),
    )(x, params['bottleneck_w'], params['bottleneck_b'],
      params['clf_w'], params['clf_b'])


# ----------------------------------------------------------------------------
# GAT (GATConv + Linear head) -- left in plain JAX per review (N=16 nodes is far
# below any tile size; XLA overlaps this with the Pallas transformer stack).
# ----------------------------------------------------------------------------
def gat_forward(p, x, edge_index, edge_weights):
    # TODO(synk): GATConv with edge_dim=None ignores edge_weights; mirrored here.
    del edge_weights
    N = x.shape[0]
    H, C = NUM_HEADS_GAT, D_MODEL

    x_lin = (x @ p['lin_w']).reshape(N, H, C)              # (N, H, C)
    a_src = jnp.sum(x_lin * p['att_src'], axis=-1)         # (N, H)
    a_dst = jnp.sum(x_lin * p['att_dst'], axis=-1)         # (N, H)

    # adjacency: adj[i, j] == True iff edge j -> i (plus self loops)
    adj = jnp.zeros((N, N), dtype=bool).at[edge_index[1], edge_index[0]].set(True)
    adj = adj | jnp.eye(N, dtype=bool)

    s = a_dst[:, None, :] + a_src[None, :, :]              # (N_dst, N_src, H)
    s = jnp.where(s >= 0, s, 0.2 * s)                      # LeakyReLU(0.2)
    s = jnp.where(adj[:, :, None], s, -jnp.inf)
    attn = jax.nn.softmax(s, axis=1)                       # softmax over sources
    out = jnp.einsum('ijh,jhc->ihc', attn, x_lin).reshape(N, H * C) + p['conv_bias']

    out = jnp.maximum(out, 0.0)                            # F.relu
    # TODO(synk): F.dropout(p=0.1) treated as inference-mode identity (no RNG).
    return out @ p['l_w'] + p['l_b']                       # (N, D_MODEL)


# ----------------------------------------------------------------------------
# Parameter initialization (deterministic, synthetic)
# ----------------------------------------------------------------------------
def _dense(key, shape, scale=0.05):
    return jax.random.normal(key, shape, jnp.float32) * scale


def init_stacked_transformer_params(key, num_layers):
    ks = jax.random.split(key, 8)
    L, D, Dff = num_layers, D_MODEL, D_FF
    # packed per-layer vectors: rows = [bo, ln1_g, ln1_b, b2, ln2_g, ln2_b]
    vec = jnp.zeros((L, 6, D), jnp.float32)
    vec = vec.at[:, 0].set(_dense(ks[0], (L, D)))          # attention out bias
    vec = vec.at[:, 1].set(1.0)                            # LN1 gamma
    vec = vec.at[:, 3].set(_dense(ks[1], (L, D)))          # FF second bias
    vec = vec.at[:, 4].set(1.0)                            # LN2 gamma
    return {
        'wqkv': _dense(ks[2], (L, D, 3 * D)).astype(jnp.bfloat16),
        'bqkv': _dense(ks[3], (L, 1, 3 * D)),
        'wo':   _dense(ks[4], (L, D, D)).astype(jnp.bfloat16),
        'w1':   _dense(ks[5], (L, D, Dff)).astype(jnp.bfloat16),
        'b1':   _dense(ks[6], (L, 1, Dff)),
        'w2':   _dense(ks[7], (L, Dff, D)).astype(jnp.bfloat16),
        'vec':  vec,
    }


def init_gat_params(key, in_dims):
    ks = jax.random.split(key, 5)
    H, C = NUM_HEADS_GAT, D_MODEL
    return {
        'lin_w': _dense(ks[0], (in_dims, H * C)),
        'att_src': _dense(ks[1], (1, H, C)),
        'att_dst': _dense(ks[2], (1, H, C)),
        'conv_bias': jnp.zeros((H * C,), jnp.float32),
        'l_w': _dense(ks[3], (H * C, C)),
        'l_b': _dense(ks[4], (C,)),
    }


def init_params(key):
    ks = jax.random.split(key, 12)
    return {
        'word_embed': _dense(ks[0], (VOCAB_SIZE, D_MODEL), scale=0.1),
        'pos_embed': _dense(ks[1], (SEQ_LENGTH, D_MODEL), scale=0.1),
        'gat1': init_gat_params(ks[2], INIT_NODE_F),
        'gat2': init_gat_params(ks[3], NODE_F),
        'tr': init_stacked_transformer_params(ks[4], NUM_LAYERS),
        'agg1_w': _dense(ks[5], (2 * D_MODEL, D_MODEL)).astype(jnp.bfloat16),
        'agg1_b': _dense(ks[6], (1, D_MODEL)),
        'agg2_w': _dense(ks[7], (2 * D_MODEL, D_MODEL)).astype(jnp.bfloat16),
        'agg2_b': _dense(ks[8], (1, D_MODEL)),
        'bottleneck_w': _dense(ks[9], (SEQ_LENGTH * D_MODEL, 32)).astype(jnp.bfloat16),
        'bottleneck_b': jnp.zeros((1, 32), jnp.float32),
        'clf_w': _dense(ks[10], (32, 2)).astype(jnp.bfloat16),
        'clf_b': jnp.zeros((1, 2), jnp.float32),
    }


# ----------------------------------------------------------------------------
# Full CellDSFormer forward
# ----------------------------------------------------------------------------
def cell_dsformer_forward(params, seq, gdata):
    B, S = seq.shape
    D = D_MODEL

    # --- GAT path first (no dependence on the transformer stack) ------------
    graphf1 = gat_forward(params['gat1'], gdata['x'],
                          gdata['edge_index'], gdata['edge_weights'])   # (N, D)
    graphf2 = gat_forward(params['gat2'], graphf1,
                          gdata['edge_index'], gdata['edge_weights'])   # (N, D)
    seq_c = jnp.clip(seq, 0, graphf1.shape[0] - 1)          # torch.clamp(max=N-1)
    pair1 = graphf1[seq_c]                                  # (B, S, D)
    pair2 = graphf2[seq_c]                                  # (B, S, D)

    # --- embeddings: clamp indices before the gather, mask -9999 rows after --
    safe_idx = jnp.clip(seq, 0, VOCAB_SIZE - 1)
    word_emb = params['word_embed'][safe_idx]               # (B, S, D)
    pos_emb = params['pos_embed'][jnp.arange(S)][None]      # (1, S, D)
    embed = jnp.where(seq[..., None] == -9999, 0.0, word_emb + pos_emb)

    # --- fused Pallas transformer stack (T1, agg1, T2..T6, agg2) -------------
    fused2 = transformer_stack(embed, pair1, pair2, params)  # (B, S, D)

    # --- fused Pallas bottleneck + classifier head ----------------------------
    x = fused2.reshape(B, S * D)
    return head_forward(x, params)                           # (B, 2)


# ----------------------------------------------------------------------------
# Driver
# ----------------------------------------------------------------------------
if __name__ == "__main__":
    key = jax.random.PRNGKey(0)
    k_par, k_seq, k_x, k_w = jax.random.split(key, 4)

    params = init_params(k_par)

    seq = jax.random.randint(k_seq, (BATCH, SEQ_LENGTH), 0, VOCAB_SIZE,
                             dtype=jnp.int32)

    # small ring graph (bidirectional), N_NODES nodes, 2*N_NODES edges
    src = jnp.arange(N_NODES, dtype=jnp.int32)
    dst = (src + 1) % N_NODES
    edge_index = jnp.concatenate(
        [jnp.stack([src, dst], axis=0), jnp.stack([dst, src], axis=0)], axis=1)
    gdata = {
        'x': jax.random.normal(k_x, (N_NODES, INIT_NODE_F), jnp.float32),
        'edge_index': edge_index,
        'edge_weights': jax.random.uniform(k_w, (edge_index.shape[1],), jnp.float32),
    }

    fwd = jax.jit(cell_dsformer_forward)
    out = fwd(params, seq, gdata)
    out = jax.block_until_ready(out)
    assert out.shape == (BATCH, 2) and out.dtype == jnp.float32
    print("KERNEL_OK")
</pallas_src>

<mosaic_0001>
module attributes {stable_mosaic.version = 11 : i64} {
  func.func @_stack_kernel(%arg0: i32, %arg1: i32, %arg2: memref<2x8x32xf32, #tpu.memory_space<vmem>>, %arg3: memref<2x8x32xf32, #tpu.memory_space<vmem>>, %arg4: memref<2x8x32xf32, #tpu.memory_space<vmem>>, %arg5: memref<1x32x96xbf16, #tpu.memory_space<vmem>>, %arg6: memref<1x1x96xf32, #tpu.memory_space<vmem>>, %arg7: memref<1x32x32xbf16, #tpu.memory_space<vmem>>, %arg8: memref<1x32x64xbf16, #tpu.memory_space<vmem>>, %arg9: memref<1x1x64xf32, #tpu.memory_space<vmem>>, %arg10: memref<1x64x32xbf16, #tpu.memory_space<vmem>>, %arg11: memref<1x6x32xf32, #tpu.memory_space<vmem>>, %arg12: memref<64x32xbf16, #tpu.memory_space<vmem>>, %arg13: memref<1x32xf32, #tpu.memory_space<vmem>>, %arg14: memref<64x32xbf16, #tpu.memory_space<vmem>>, %arg15: memref<1x32xf32, #tpu.memory_space<vmem>>, %arg16: memref<2x8x32xf32, #tpu.memory_space<vmem>>, %arg17: memref<16x32xf32, #tpu.memory_space<vmem>>) attributes {dimension_semantics = [#tpu.dimension_semantics<parallel>, #tpu.dimension_semantics<arbitrary>], iteration_bounds = array<i64: 1, 6>, scalar_prefetch = 0 : i64, scratch_operands = 1 : i64, tpu.core_type = #tpu.core_type<tc>, window_params = [{transform_indices = @transform_0, window_bounds = array<i64: 2, 8, 32>}, {transform_indices = @transform_1, window_bounds = array<i64: 2, 8, 32>}, {transform_indices = @transform_2, window_bounds = array<i64: 2, 8, 32>}, {transform_indices = @transform_3, window_bounds = array<i64: 1, 32, 96>}, {transform_indices = @transform_4, window_bounds = array<i64: 1, 1, 96>}, {transform_indices = @transform_5, window_bounds = array<i64: 1, 32, 32>}, {transform_indices = @transform_6, window_bounds = array<i64: 1, 32, 64>}, {transform_indices = @transform_7, window_bounds = array<i64: 1, 1, 64>}, {transform_indices = @transform_8, window_bounds = array<i64: 1, 64, 32>}, {transform_indices = @transform_9, window_bounds = array<i64: 1, 6, 32>}, {pipeline_mode = #tpu.pipeline_mode<synchronous>, transform_indices = @transform_10, window_bounds = array<i64: 64, 32>}, {pipeline_mode = #tpu.pipeline_mode<synchronous>, transform_indices = @transform_11, window_bounds = array<i64: 1, 32>}, {pipeline_mode = #tpu.pipeline_mode<synchronous>, transform_indices = @transform_12, window_bounds = array<i64: 64, 32>}, {pipeline_mode = #tpu.pipeline_mode<synchronous>, transform_indices = @transform_13, window_bounds = array<i64: 1, 32>}, {transform_indices = @transform_14, window_bounds = array<i64: 2, 8, 32>}]} {
    %c0_i32 = arith.constant 0 : i32
    %0 = arith.cmpi eq, %arg1, %c0_i32 : i32
    %1 = arith.extui %0 : i1 to i32
    %c0_i32_0 = arith.constant 0 : i32
    %2 = arith.cmpi ne, %1, %c0_i32_0 : i32
    scf.if %2 {
      %c0_47 = arith.constant 0 : index
      %c0_48 = arith.constant 0 : index
      %c0_49 = arith.constant 0 : index
      %147 = vector.load %arg2[%c0_47, %c0_48, %c0_49] : memref<2x8x32xf32, #tpu.memory_space<vmem>>, vector<2x8x32xf32>
      %148 = vector.shape_cast %147 : vector<2x8x32xf32> to vector<16x32xf32>
      %c0_50 = arith.constant 0 : index
      %c0_51 = arith.constant 0 : index
      %149 = vector.load %arg17[%c0_50, %c0_51] : memref<16x32xf32, #tpu.memory_space<vmem>>, vector<16x32xf32>
      tpu.vector_store %arg17[%c0_50, %c0_51], %148 {strides = array<i32>} : memref<16x32xf32, #tpu.memory_space<vmem>>, vector<16x32xf32>,
    } else {
    }
    %c0 = arith.constant 0 : index
    %c0_1 = arith.constant 0 : index
    %3 = vector.load %arg17[%c0, %c0_1] : memref<16x32xf32, #tpu.memory_space<vmem>>, vector<16x32xf32>
    %c0_2 = arith.constant 0 : index
    %c0_3 = arith.constant 0 : index
    %c0_4 = arith.constant 0 : index
    %4 = vector.load %arg11[%c0_2, %c0_3, %c0_4] : memref<1x6x32xf32, #tpu.memory_space<vmem>>, vector<1x6x32xf32>
    %5 = vector.shape_cast %4 : vector<1x6x32xf32> to vector<6x32xf32>
    %6 = vector.extract_strided_slice %5 {offsets = [0, 0], sizes = [1, 32], strides = [1, 1]} : vector<6x32xf32> to vector<1x32xf32>
    %7 = vector.extract_strided_slice %5 {offsets = [1, 0], sizes = [1, 32], strides = [1, 1]} : vector<6x32xf32> to vector<1x32xf32>
    %8 = vector.extract_strided_slice %5 {offsets = [2, 0], sizes = [1, 32], strides = [1, 1]} : vector<6x32xf32> to vector<1x32xf32>
    %9 = vector.extract_strided_slice %5 {offsets = [3, 0], sizes = [1, 32], strides = [1, 1]} : vector<6x32xf32> to vector<1x32xf32>
    %10 = vector.extract_strided_slice %5 {offsets = [4, 0], sizes = [1, 32], strides = [1, 1]} : vector<6x32xf32> to vector<1x32xf32>
    %11 = vector.extract_strided_slice %5 {offsets = [5, 0], sizes = [1, 32], strides = [1, 1]} : vector<6x32xf32> to vector<1x32xf32>
    %12 = arith.truncf %3 : vector<16x32xf32> to vector<16x32xbf16>
    %c0_5 = arith.constant 0 : index
    %c0_6 = arith.constant 0 : index
    %c0_7 = arith.constant 0 : index
    %13 = vector.load %arg5[%c0_5, %c0_6, %c0_7] : memref<1x32x96xbf16, #tpu.memory_space<vmem>>, vector<1x32x96xbf16>
    %14 = vector.shape_cast %13 : vector<1x32x96xbf16> to vector<32x96xbf16>
    %cst = arith.constant dense<0.000000e+00> : vector<16x96xf32>
    %15 = tpu.matmul %12, %14, %cst {dimension_numbers = #tpu.dot_dimension_numbers<[1], [0], [0], [1], [0, 0, 1, 1], [], []>} : vector<16x32xbf16>, vector<32x96xbf16>, vector<16x96xf32> -> vector<16x96xf32>
    %c0_8 = arith.constant 0 : index
    %c0_9 = arith.constant 0 : index
    %c0_10 = arith.constant 0 : index
    %16 = vector.load %arg6[%c0_8, %c0_9, %c0_10] : memref<1x1x96xf32, #tpu.memory_space<vmem>>, vector<1x1x96xf32>
    %17 = vector.shape_cast %16 : vector<1x1x96xf32> to vector<1x96xf32>
    %18 = vector.broadcast %17 : vector<1x96xf32> to vector<16x96xf32>
    %19 = arith.addf %15, %18 : vector<16x96xf32>
    %20 = vector.extract_strided_slice %19 {offsets = [0, 0], sizes = [16, 32], strides = [1, 1]} : vector<16x96xf32> to vector<16x32xf32>
    %21 = vector.extract_strided_slice %20 {offsets = [0, 0], sizes = [16, 8], strides = [1, 1]} : vector<16x32xf32> to vector<16x8xf32>
    %22 = vector.shape_cast %21 : vector<16x8xf32> to vector<2x8x8xf32>
    %23 = vector.extract_strided_slice %20 {offsets = [0, 8], sizes = [16, 8], strides = [1, 1]} : vector<16x32xf32> to vector<16x8xf32>
    %24 = vector.shape_cast %23 : vector<16x8xf32> to vector<2x8x8xf32>
    %25 = vector.extract_strided_slice %20 {offsets = [0, 16], sizes = [16, 8], strides = [1, 1]} : vector<16x32xf32> to vector<16x8xf32>
    %26 = vector.shape_cast %25 : vector<16x8xf32> to vector<2x8x8xf32>
    %27 = vector.extract_strided_slice %20 {offsets = [0, 24], sizes = [16, 8], strides = [1, 1]} : vector<16x32xf32> to vector<16x8xf32>
    %28 = vector.shape_cast %27 : vector<16x8xf32> to vector<2x8x8xf32>
    %29 = tpu.concatenate %22, %24, %26, %28 in 0 : vector<2x8x8xf32>, vector<2x8x8xf32>, vector<2x8x8xf32>, vector<2x8x8xf32> -> vector<8x8x8xf32>
    %cst_11 = arith.constant 0.353553385 : f32
    %30 = vector.broadcast %cst_11 : f32 to vector<8x8x8xf32>
    %31 = arith.mulf %29, %30 : vector<8x8x8xf32>
    %32 = vector.extract_strided_slice %19 {offsets = [0, 32], sizes = [16, 32], strides = [1, 1]} : vector<16x96xf32> to vector<16x32xf32>
    %33 = vector.extract_strided_slice %32 {offsets = [0, 0], sizes = [16, 8], strides = [1, 1]} : vector<16x32xf32> to vector<16x8xf32>
    %34 = vector.shape_cast %33 : vector<16x8xf32> to vector<2x8x8xf32>
    %35 = vector.extract_strided_slice %32 {offsets = [0, 8], sizes = [16, 8], strides = [1, 1]} : vector<16x32xf32> to vector<16x8xf32>
    %36 = vector.shape_cast %35 : vector<16x8xf32> to vector<2x8x8xf32>
    %37 = vector.extract_strided_slice %32 {offsets = [0, 16], sizes = [16, 8], strides = [1, 1]} : vector<16x32xf32> to vector<16x8xf32>
    %38 = vector.shape_cast %37 : vector<16x8xf32> to vector<2x8x8xf32>
    %39 = vector.extract_strided_slice %32 {offsets = [0, 24], sizes = [16, 8], strides = [1, 1]} : vector<16x32xf32> to vector<16x8xf32>
    %40 = vector.shape_cast %39 : vector<16x8xf32> to vector<2x8x8xf32>
    %41 = tpu.concatenate %34, %36, %38, %40 in 0 : vector<2x8x8xf32>, vector<2x8x8xf32>, vector<2x8x8xf32>, vector<2x8x8xf32> -> vector<8x8x8xf32>
    %42 = vector.extract_strided_slice %19 {offsets = [0, 64], sizes = [16, 32], strides = [1, 1]} : vector<16x96xf32> to vector<16x32xf32>
    %43 = vector.extract_strided_slice %42 {offsets = [0, 0], sizes = [16, 8], strides = [1, 1]} : vector<16x32xf32> to vector<16x8xf32>
    %44 = vector.shape_cast %43 : vector<16x8xf32> to vector<2x8x8xf32>
    %45 = vector.extract_strided_slice %42 {offsets = [0, 8], sizes = [16, 8], strides = [1, 1]} : vector<16x32xf32> to vector<16x8xf32>
    %46 = vector.shape_cast %45 : vector<16x8xf32> to vector<2x8x8xf32>
    %47 = vector.extract_strided_slice %42 {offsets = [0, 16], sizes = [16, 8], strides = [1, 1]} : vector<16x32xf32> to vector<16x8xf32>
    %48 = vector.shape_cast %47 : vector<16x8xf32> to vector<2x8x8xf32>
    %49 = vector.extract_strided_slice %42 {offsets = [0, 24], sizes = [16, 8], strides = [1, 1]} : vector<16x32xf32> to vector<16x8xf32>
    %50 = vector.shape_cast %49 : vector<16x8xf32> to vector<2x8x8xf32>
    %51 = tpu.concatenate %44, %46, %48, %50 in 0 : vector<2x8x8xf32>, vector<2x8x8xf32>, vector<2x8x8xf32>, vector<2x8x8xf32> -> vector<8x8x8xf32>
    %52 = arith.truncf %31 : vector<8x8x8xf32> to vector<8x8x8xbf16>
    %53 = arith.truncf %41 : vector<8x8x8xf32> to vector<8x8x8xbf16>
    "tpu.trace_start"() <{level = 10 : i32, message = "bqd,bkd->bqk"}> : () -> ()
    %cst_12 = arith.constant dense<0.000000e+00> : vector<8x8x8xf32>
    %54 = tpu.matmul %52, %53, %cst_12 {dimension_numbers = #tpu.dot_dimension_numbers<[2], [2], [1], [1], [0, 0, 0, 1, 1, 1], [0], [0]>} : vector<8x8x8xbf16>, vector<8x8x8xbf16>, vector<8x8x8xf32> -> vector<8x8x8xf32>
    "tpu.trace_stop"() : () -> ()
    %cst_13 = arith.constant dense<0xFF800000> : vector<8x8xf32>
    %55 = vector.multi_reduction <maximumf>, %54, %cst_13 [2] : vector<8x8x8xf32> to vector<8x8xf32>
    %56 = vector.shape_cast %55 : vector<8x8xf32> to vector<8x8x1xf32>
    %57 = vector.broadcast %56 : vector<8x8x1xf32> to vector<8x8x8xf32>
    %58 = arith.subf %54, %57 : vector<8x8x8xf32>
    %59 = math.exp %58 : vector<8x8x8xf32>
    %cst_14 = arith.constant dense<0.000000e+00> : vector<8x8xf32>
    %60 = vector.multi_reduction <add>, %59, %cst_14 [2] : vector<8x8x8xf32> to vector<8x8xf32>
    %61 = vector.shape_cast %60 : vector<8x8xf32> to vector<8x8x1xf32>
    %62 = tpu.reciprocal %61 {approx = true} : vector<8x8x1xf32> -> vector<8x8x1xf32>
    %63 = vector.broadcast %62 : vector<8x8x1xf32> to vector<8x8x8xf32>
    %64 = arith.mulf %59, %63 : vector<8x8x8xf32>
    %65 = arith.truncf %64 : vector<8x8x8xf32> to vector<8x8x8xbf16>
    %66 = arith.truncf %51 : vector<8x8x8xf32> to vector<8x8x8xbf16>
    "tpu.trace_start"() <{level = 10 : i32, message = "bqk,bkd->bqd"}> : () -> ()
    %cst_15 = arith.constant dense<0.000000e+00> : vector<8x8x8xf32>
    %67 = tpu.matmul %65, %66, %cst_15 {dimension_numbers = #tpu.dot_dimension_numbers<[2], [1], [1], [2], [0, 0, 0, 1, 1, 2], [0], [0]>} : vector<8x8x8xbf16>, vector<8x8x8xbf16>, vector<8x8x8xf32> -> vector<8x8x8xf32>
    "tpu.trace_stop"() : () -> ()
    %68 = vector.extract_strided_slice %67 {offsets = [0, 0, 0], sizes = [2, 8, 8], strides = [1, 1, 1]} : vector<8x8x8xf32> to vector<2x8x8xf32>
    %69 = vector.extract_strided_slice %67 {offsets = [2, 0, 0], sizes = [2, 8, 8], strides = [1, 1, 1]} : vector<8x8x8xf32> to vector<2x8x8xf32>
    %70 = vector.extract_strided_slice %67 {offsets = [4, 0, 0], sizes = [2, 8, 8], strides = [1, 1, 1]} : vector<8x8x8xf32> to vector<2x8x8xf32>
    %71 = vector.extract_strided_slice %67 {offsets = [6, 0, 0], sizes = [2, 8, 8], strides = [1, 1, 1]} : vector<8x8x8xf32> to vector<2x8x8xf32>
    %72 = tpu.concatenate %68, %69, %70, %71 in 2 : vector<2x8x8xf32>, vector<2x8x8xf32>, vector<2x8x8xf32>, vector<2x8x8xf32> -> vector<2x8x32xf32>
    %73 = vector.shape_cast %72 : vector<2x8x32xf32> to vector<16x32xf32>
    %74 = arith.truncf %73 : vector<16x32xf32> to vector<16x32xbf16>
    %c0_16 = arith.constant 0 : index
    %c0_17 = arith.constant 0 : index
    %c0_18 = arith.constant 0 : index
    %75 = vector.load %arg7[%c0_16, %c0_17, %c0_18] : memref<1x32x32xbf16, #tpu.memory_space<vmem>>, vector<1x32x32xbf16>
    %76 = vector.shape_cast %75 : vector<1x32x32xbf16> to vector<32x32xbf16>
    %cst_19 = arith.constant dense<0.000000e+00> : vector<16x32xf32>
    %77 = tpu.matmul %74, %76, %cst_19 {dimension_numbers = #tpu.dot_dimension_numbers<[1], [0], [0], [1], [0, 0, 1, 1], [], []>} : vector<16x32xbf16>, vector<32x32xbf16>, vector<16x32xf32> -> vector<16x32xf32>
    %78 = vector.broadcast %6 : vector<1x32xf32> to vector<16x32xf32>
    %79 = arith.addf %77, %78 : vector<16x32xf32>
    %80 = arith.addf %3, %79 : vector<16x32xf32>
    %cst_20 = arith.constant dense<0.000000e+00> : vector<16xf32>
    %81 = vector.multi_reduction <add>, %80, %cst_20 [1] : vector<16x32xf32> to vector<16xf32>
    %82 = vector.shape_cast %81 : vector<16xf32> to vector<16x1xf32>
    %cst_21 = arith.constant 3.200000e+01 : f32
    %83 = vector.broadcast %cst_21 : f32 to vector<16x1xf32>
    %84 = arith.divf %82, %83 : vector<16x1xf32>
    %85 = vector.broadcast %84 : vector<16x1xf32> to vector<16x32xf32>
    %86 = arith.subf %80, %85 : vector<16x32xf32>
    %87 = arith.mulf %86, %86 : vector<16x32xf32>
    %cst_22 = arith.constant dense<0.000000e+00> : vector<16xf32>
    %88 = vector.multi_reduction <add>, %87, %cst_22 [1] : vector<16x32xf32> to vector<16xf32>
    %89 = vector.shape_cast %88 : vector<16xf32> to vector<16x1xf32>
    %cst_23 = arith.constant 3.200000e+01 : f32
    %90 = vector.broadcast %cst_23 : f32 to vector<16x1xf32>
    %91 = arith.divf %89, %90 : vector<16x1xf32>
    %cst_24 = arith.constant 9.99999974E-6 : f32
    %92 = vector.broadcast %cst_24 : f32 to vector<16x1xf32>
    %93 = arith.addf %91, %92 : vector<16x1xf32>
    %94 = math.rsqrt %93 : vector<16x1xf32>
    %95 = vector.broadcast %94 : vector<16x1xf32> to vector<16x32xf32>
    %96 = arith.mulf %86, %95 : vector<16x32xf32>
    %97 = vector.broadcast %7 : vector<1x32xf32> to vector<16x32xf32>
    %98 = arith.mulf %96, %97 : vector<16x32xf32>
    %99 = vector.broadcast %8 : vector<1x32xf32> to vector<16x32xf32>
    %100 = arith.addf %98, %99 : vector<16x32xf32>
    %101 = arith.truncf %100 : vector<16x32xf32> to vector<16x32xbf16>
    %c0_25 = arith.constant 0 : index
    %c0_26 = arith.constant 0 : index
    %c0_27 = arith.constant 0 : index
    %102 = vector.load %arg8[%c0_25, %c0_26, %c0_27] : memref<1x32x64xbf16, #tpu.memory_space<vmem>>, vector<1x32x64xbf16>
    %103 = vector.shape_cast %102 : vector<1x32x64xbf16> to vector<32x64xbf16>
    %cst_28 = arith.constant dense<0.000000e+00> : vector<16x64xf32>
    %104 = tpu.matmul %101, %103, %cst_28 {dimension_numbers = #tpu.dot_dimension_numbers<[1], [0], [0], [1], [0, 0, 1, 1], [], []>} : vector<16x32xbf16>, vector<32x64xbf16>, vector<16x64xf32> -> vector<16x64xf32>
    %c0_29 = arith.constant 0 : index
    %c0_30 = arith.constant 0 : index
    %c0_31 = arith.constant 0 : index
    %105 = vector.load %arg9[%c0_29, %c0_30, %c0_31] : memref<1x1x64xf32, #tpu.memory_space<vmem>>, vector<1x1x64xf32>
    %106 = vector.shape_cast %105 : vector<1x1x64xf32> to vector<1x64xf32>
    %107 = vector.broadcast %106 : vector<1x64xf32> to vector<16x64xf32>
    %108 = arith.addf %104, %107 : vector<16x64xf32>
    %cst_32 = arith.constant 0.000000e+00 : f32
    %109 = vector.broadcast %cst_32 : f32 to vector<16x64xf32>
    %110 = arith.maximumf %108, %109 : vector<16x64xf32>
    %111 = arith.truncf %110 : vector<16x64xf32> to vector<16x64xbf16>
    %c0_33 = arith.constant 0 : index
    %c0_34 = arith.constant 0 : index
    %c0_35 = arith.constant 0 : index
    %112 = vector.load %arg10[%c0_33, %c0_34, %c0_35] : memref<1x64x32xbf16, #tpu.memory_space<vmem>>, vector<1x64x32xbf16>
    %113 = vector.shape_cast %112 : vector<1x64x32xbf16> to vector<64x32xbf16>
    %cst_36 = arith.constant dense<0.000000e+00> : vector<16x32xf32>
    %114 = tpu.matmul %111, %113, %cst_36 {dimension_numbers = #tpu.dot_dimension_numbers<[1], [0], [0], [1], [0, 0, 1, 1], [], []>} : vector<16x64xbf16>, vector<64x32xbf16>, vector<16x32xf32> -> vector<16x32xf32>
    %115 = vector.broadcast %9 : vector<1x32xf32> to vector<16x32xf32>
    %116 = arith.addf %114, %115 : vector<16x32xf32>
    %117 = arith.addf %100, %116 : vector<16x32xf32>
    %cst_37 = arith.constant dense<0.000000e+00> : vector<16xf32>
    %118 = vector.multi_reduction <add>, %117, %cst_37 [1] : vector<16x32xf32> to vector<16xf32>
    %119 = vector.shape_cast %118 : vector<16xf32> to vector<16x1xf32>
    %cst_38 = arith.constant 3.200000e+01 : f32
    %120 = vector.broadcast %cst_38 : f32 to vector<16x1xf32>
    %121 = arith.divf %119, %120 : vector<16x1xf32>
    %122 = vector.broadcast %121 : vector<16x1xf32> to vector<16x32xf32>
    %123 = arith.subf %117, %122 : vector<16x32xf32>
    %124 = arith.mulf %123, %123 : vector<16x32xf32>
    %cst_39 = arith.constant dense<0.000000e+00> : vector<16xf32>
    %125 = vector.multi_reduction <add>, %124, %cst_39 [1] : vector<16x32xf32> to vector<16xf32>
    %126 = vector.shape_cast %125 : vector<16xf32> to vector<16x1xf32>
    %cst_40 = arith.constant 3.200000e+01 : f32
    %127 = vector.broadcast %cst_40 : f32 to vector<16x1xf32>
    %128 = arith.divf %126, %127 : vector<16x1xf32>
    %cst_41 = arith.constant 9.99999974E-6 : f32
    %129 = vector.broadcast %cst_41 : f32 to vector<16x1xf32>
    %130 = arith.addf %128, %129 : vector<16x1xf32>
    %131 = math.rsqrt %130 : vector<16x1xf32>
    %132 = vector.broadcast %131 : vector<16x1xf32> to vector<16x32xf32>
    %133 = arith.mulf %123, %132 : vector<16x32xf32>
    %134 = vector.broadcast %10 : vector<1x32xf32> to vector<16x32xf32>
    %135 = arith.mulf %133, %134 : vector<16x32xf32>
    %136 = vector.broadcast %11 : vector<1x32xf32> to vector<16x32xf32>
    %137 = arith.addf %135, %136 : vector<16x32xf32>
    %c0_i32_42 = arith.constant 0 : i32
    %138 = arith.cmpi eq, %arg1, %c0_i32_42 : i32
    %139 = arith.extui %138 : i1 to i32
    %c0_i32_43 = arith.constant 0 : i32
    %140 = arith.cmpi ne, %139, %c0_i32_43 : i32
    scf.if %140 {
      %c0_47 = arith.constant 0 : index
      %c0_48 = arith.constant 0 : index
      %c0_49 = arith.constant 0 : index
      %147 = vector.load %arg3[%c0_47, %c0_48, %c0_49] : memref<2x8x32xf32, #tpu.memory_space<vmem>>, vector<2x8x32xf32>
      %148 = vector.shape_cast %147 : vector<2x8x32xf32> to vector<16x32xf32>
      %149 = tpu.concatenate %137, %148 in 1 : vector<16x32xf32>, vector<16x32xf32> -> vector<16x64xf32>
      %150 = arith.truncf %149 : vector<16x64xf32> to vector<16x64xbf16>
      %c0_50 = arith.constant 0 : index
      %c0_51 = arith.constant 0 : index
      %151 = vector.load %arg12[%c0_50, %c0_51] : memref<64x32xbf16, #tpu.memory_space<vmem>>, vector<64x32xbf16>
      %cst_52 = arith.constant dense<0.000000e+00> : vector<16x32xf32>
      %152 = tpu.matmul %150, %151, %cst_52 {dimension_numbers = #tpu.dot_dimension_numbers<[1], [0], [0], [1], [0, 0, 1, 1], [], []>} : vector<16x64xbf16>, vector<64x32xbf16>, vector<16x32xf32> -> vector<16x32xf32>
      %c0_53 = arith.constant 0 : index
      %c0_54 = arith.constant 0 : index
      %153 = vector.load %arg13[%c0_53, %c0_54] : memref<1x32xf32, #tpu.memory_space<vmem>>, vector<1x32xf32>
      %154 = vector.broadcast %153 : vector<1x32xf32> to vector<16x32xf32>
      %155 = arith.addf %152, %154 : vector<16x32xf32>
      %cst_55 = arith.constant 0.000000e+00 : f32
      %156 = vector.broadcast %cst_55 : f32 to vector<16x32xf32>
      %157 = arith.maximumf %155, %156 : vector<16x32xf32>
      %c0_56 = arith.constant 0 : index
      %c0_57 = arith.constant 0 : index
      %158 = vector.load %arg17[%c0_56, %c0_57] : memref<16x32xf32, #tpu.memory_space<vmem>>, vector<16x32xf32>
      tpu.vector_store %arg17[%c0_56, %c0_57], %157 {strides = array<i32>} : memref<16x32xf32, #tpu.memory_space<vmem>>, vector<16x32xf32>,
    } else {
    }
    %c0_i32_44 = arith.constant 0 : i32
    %141 = arith.cmpi sgt, %arg1, %c0_i32_44 : i32
    %142 = arith.extui %141 : i1 to i32
    %c0_i32_45 = arith.constant 0 : i32
    %143 = arith.cmpi ne, %142, %c0_i32_45 : i32
    scf.if %143 {
      %c0_47 = arith.constant 0 : index
      %c0_48 = arith.constant 0 : index
      %147 = vector.load %arg17[%c0_47, %c0_48] : memref<16x32xf32, #tpu.memory_space<vmem>>, vector<16x32xf32>
      tpu.vector_store %arg17[%c0_47, %c0_48], %137 {strides = array<i32>} : memref<16x32xf32, #tpu.memory_space<vmem>>, vector<16x32xf32>,
    } else {
    }
    %c5_i32 = arith.constant 5 : i32
    %144 = arith.cmpi eq, %arg1, %c5_i32 : i32
    %145 = arith.extui %144 : i1 to i32
    %c0_i32_46 = arith.constant 0 : i32
    %146 = arith.cmpi ne, %145, %c0_i32_46 : i32
    scf.if %146 {
      %c0_47 = arith.constant 0 : index
      %c0_48 = arith.constant 0 : index
      %c0_49 = arith.constant 0 : index
      %147 = vector.load %arg4[%c0_47, %c0_48, %c0_49] : memref<2x8x32xf32, #tpu.memory_space<vmem>>, vector<2x8x32xf32>
      %148 = vector.shape_cast %147 : vector<2x8x32xf32> to vector<16x32xf32>
      %149 = tpu.concatenate %137, %148 in 1 : vector<16x32xf32>, vector<16x32xf32> -> vector<16x64xf32>
      %150 = arith.truncf %149 : vector<16x64xf32> to vector<16x64xbf16>
      %c0_50 = arith.constant 0 : index
      %c0_51 = arith.constant 0 : index
      %151 = vector.load %arg14[%c0_50, %c0_51] : memref<64x32xbf16, #tpu.memory_space<vmem>>, vector<64x32xbf16>
      %cst_52 = arith.constant dense<0.000000e+00> : vector<16x32xf32>
      %152 = tpu.matmul %150, %151, %cst_52 {dimension_numbers = #tpu.dot_dimension_numbers<[1], [0], [0], [1], [0, 0, 1, 1], [], []>} : vector<16x64xbf16>, vector<64x32xbf16>, vector<16x32xf32> -> vector<16x32xf32>
      %c0_53 = arith.constant 0 : index
      %c0_54 = arith.constant 0 : index
      %153 = vector.load %arg15[%c0_53, %c0_54] : memref<1x32xf32, #tpu.memory_space<vmem>>, vector<1x32xf32>
      %154 = vector.broadcast %153 : vector<1x32xf32> to vector<16x32xf32>
      %155 = arith.addf %152, %154 : vector<16x32xf32>
      %cst_55 = arith.constant 0.000000e+00 : f32
      %156 = vector.broadcast %cst_55 : f32 to vector<16x32xf32>
      %157 = arith.maximumf %155, %156 : vector<16x32xf32>
      %158 = vector.shape_cast %157 : vector<16x32xf32> to vector<2x8x32xf32>
      %c0_56 = arith.constant 0 : index
      %c0_57 = arith.constant 0 : index
      %c0_58 = arith.constant 0 : index
      %159 = vector.load %arg16[%c0_56, %c0_57, %c0_58] : memref<2x8x32xf32, #tpu.memory_space<vmem>>, vector<2x8x32xf32>
      tpu.vector_store %arg16[%c0_56, %c0_57, %c0_58], %158 {strides = array<i32>} : memref<2x8x32xf32, #tpu.memory_space<vmem>>, vector<2x8x32xf32>,
    } else {
    }
    return
  }
  func.func @transform_0(%arg0: i32, %arg1: i32) -> (i32, i32, i32) {
    %c0_i32 = arith.constant 0 : i32
    %c0_i32_0 = arith.constant 0 : i32
    %c0_i32_1 = arith.constant 0 : i32
    return %arg0, %c0_i32, %c0_i32_0 : i32, i32, i32
  }
  func.func @transform_1(%arg0: i32, %arg1: i32) -> (i32, i32, i32) {
    %c0_i32 = arith.constant 0 : i32
    %c0_i32_0 = arith.constant 0 : i32
    %c0_i32_1 = arith.constant 0 : i32
    return %arg0, %c0_i32, %c0_i32_0 : i32, i32, i32
  }
  func.func @transform_2(%arg0: i32, %arg1: i32) -> (i32, i32, i32) {
    %c0_i32 = arith.constant 0 : i32
    %c0_i32_0 = arith.constant 0 : i32
    %c0_i32_1 = arith.constant 0 : i32
    return %arg0, %c0_i32, %c0_i32_0 : i32, i32, i32
  }
  func.func @transform_3(%arg0: i32, %arg1: i32) -> (i32, i32, i32) {
    %c0_i32 = arith.constant 0 : i32
    %c0_i32_0 = arith.constant 0 : i32
    %c0_i32_1 = arith.constant 0 : i32
    return %arg1, %c0_i32, %c0_i32_0 : i32, i32, i32
  }
  func.func @transform_4(%arg0: i32, %arg1: i32) -> (i32, i32, i32) {
    %c0_i32 = arith.constant 0 : i32
    %c0_i32_0 = arith.constant 0 : i32
    %c0_i32_1 = arith.constant 0 : i32
    return %arg1, %c0_i32, %c0_i32_0 : i32, i32, i32
  }
  func.func @transform_5(%arg0: i32, %arg1: i32) -> (i32, i32, i32) {
    %c0_i32 = arith.constant 0 : i32
    %c0_i32_0 = arith.constant 0 : i32
    %c0_i32_1 = arith.constant 0 : i32
    return %arg1, %c0_i32, %c0_i32_0 : i32, i32, i32
  }
  func.func @transform_6(%arg0: i32, %arg1: i32) -> (i32, i32, i32) {
    %c0_i32 = arith.constant 0 : i32
    %c0_i32_0 = arith.constant 0 : i32
    %c0_i32_1 = arith.constant 0 : i32
    return %arg1, %c0_i32, %c0_i32_0 : i32, i32, i32
  }
  func.func @transform_7(%arg0: i32, %arg1: i32) -> (i32, i32, i32) {
    %c0_i32 = arith.constant 0 : i32
    %c0_i32_0 = arith.constant 0 : i32
    %c0_i32_1 = arith.constant 0 : i32
    return %arg1, %c0_i32, %c0_i32_0 : i32, i32, i32
  }
  func.func @transform_8(%arg0: i32, %arg1: i32) -> (i32, i32, i32) {
    %c0_i32 = arith.constant 0 : i32
    %c0_i32_0 = arith.constant 0 : i32
    %c0_i32_1 = arith.constant 0 : i32
    return %arg1, %c0_i32, %c0_i32_0 : i32, i32, i32
  }
  func.func @transform_9(%arg0: i32, %arg1: i32) -> (i32, i32, i32) {
    %c0_i32 = arith.constant 0 : i32
    %c0_i32_0 = arith.constant 0 : i32
    %c0_i32_1 = arith.constant 0 : i32
    return %arg1, %c0_i32, %c0_i32_0 : i32, i32, i32
  }
  func.func @transform_10(%arg0: i32, %arg1: i32) -> (i32, i32) {
    %c0_i32 = arith.constant 0 : i32
    %c0_i32_0 = arith.constant 0 : i32
    %c0_i32_1 = arith.constant 0 : i32
    return %c0_i32, %c0_i32_0 : i32, i32
  }
  func.func @transform_11(%arg0: i32, %arg1: i32) -> (i32, i32) {
    %c0_i32 = arith.constant 0 : i32
    %c0_i32_0 = arith.constant 0 : i32
    %c0_i32_1 = arith.constant 0 : i32
    return %c0_i32, %c0_i32_0 : i32, i32
  }
  func.func @transform_12(%arg0: i32, %arg1: i32) -> (i32, i32) {
    %c0_i32 = arith.constant 0 : i32
    %c0_i32_0 = arith.constant 0 : i32
    %c0_i32_1 = arith.constant 0 : i32
    return %c0_i32, %c0_i32_0 : i32, i32
  }
  func.func @transform_13(%arg0: i32, %arg1: i32) -> (i32, i32) {
    %c0_i32 = arith.constant 0 : i32
    %c0_i32_0 = arith.constant 0 : i32
    %c0_i32_1 = arith.constant 0 : i32
    return %c0_i32, %c0_i32_0 : i32, i32
  }
  func.func @transform_14(%arg0: i32, %arg1: i32) -> (i32, i32, i32) {
    %c0_i32 = arith.constant 0 : i32
    %c0_i32_0 = arith.constant 0 : i32
    %c0_i32_1 = arith.constant 0 : i32
    return %arg0, %c0_i32, %c0_i32_0 : i32, i32, i32
  }
}

module attributes {stable_mosaic.version = 11 : i64} {
  func.func @_head_kernel(%arg0: i32, %arg1: memref<2x256xf32, #tpu.memory_space<vmem>>, %arg2: memref<256x32xbf16, #tpu.memory_space<vmem>>, %arg3: memref<1x32xf32, #tpu.memory_space<vmem>>, %arg4: memref<32x2xbf16, #tpu.memory_space<vmem>>, %arg5: memref<1x2xf32, #tpu.memory_space<vmem>>, %arg6: memref<2x2xf32, #tpu.memory_space<vmem>>) attributes {dimension_semantics = [#tpu.dimension_semantics<arbitrary>], iteration_bounds = array<i64: 1>, scalar_prefetch = 0 : i64, scratch_operands = 0 : i64, tpu.core_type = #tpu.core_type<tc>, window_params = [{pipeline_mode = #tpu.pipeline_mode<synchronous>, transform_indices = @transform_0, window_bounds = array<i64: 2, 256>}, {pipeline_mode = #tpu.pipeline_mode<synchronous>, transform_indices = @transform_1, window_bounds = array<i64: 256, 32>}, {pipeline_mode = #tpu.pipeline_mode<synchronous>, transform_indices = @transform_2, window_bounds = array<i64: 1, 32>}, {pipeline_mode = #tpu.pipeline_mode<synchronous>, transform_indices = @transform_3, window_bounds = array<i64: 32, 2>}, {pipeline_mode = #tpu.pipeline_mode<synchronous>, transform_indices = @transform_4, window_bounds = array<i64: 1, 2>}, {pipeline_mode = #tpu.pipeline_mode<synchronous>, transform_indices = @transform_5, window_bounds = array<i64: 2, 2>}]} {
    %c0 = arith.constant 0 : index
    %c0_0 = arith.constant 0 : index
    %0 = vector.load %arg1[%c0, %c0_0] : memref<2x256xf32, #tpu.memory_space<vmem>>, vector<2x256xf32>
    %1 = arith.truncf %0 : vector<2x256xf32> to vector<2x256xbf16>
    %c0_1 = arith.constant 0 : index
    %c0_2 = arith.constant 0 : index
    %2 = vector.load %arg2[%c0_1, %c0_2] : memref<256x32xbf16, #tpu.memory_space<vmem>>, vector<256x32xbf16>
    %cst = arith.constant dense<0.000000e+00> : vector<2x32xf32>
    %3 = tpu.matmul %1, %2, %cst {dimension_numbers = #tpu.dot_dimension_numbers<[1], [0], [0], [1], [0, 0, 1, 1], [], []>} : vector<2x256xbf16>, vector<256x32xbf16>, vector<2x32xf32> -> vector<2x32xf32>
    %c0_3 = arith.constant 0 : index
    %c0_4 = arith.constant 0 : index
    %4 = vector.load %arg3[%c0_3, %c0_4] : memref<1x32xf32, #tpu.memory_space<vmem>>, vector<1x32xf32>
    %5 = vector.broadcast %4 : vector<1x32xf32> to vector<2x32xf32>
    %6 = arith.addf %3, %5 : vector<2x32xf32>
    %7 = arith.truncf %6 : vector<2x32xf32> to vector<2x32xbf16>
    %c0_5 = arith.constant 0 : index
    %c0_6 = arith.constant 0 : index
    %8 = vector.load %arg4[%c0_5, %c0_6] : memref<32x2xbf16, #tpu.memory_space<vmem>>, vector<32x2xbf16>
    %cst_7 = arith.constant dense<0.000000e+00> : vector<2x2xf32>
    %9 = tpu.matmul %7, %8, %cst_7 {dimension_numbers = #tpu.dot_dimension_numbers<[1], [0], [0], [1], [0, 0, 1, 1], [], []>} : vector<2x32xbf16>, vector<32x2xbf16>, vector<2x2xf32> -> vector<2x2xf32>
    %c0_8 = arith.constant 0 : index
    %c0_9 = arith.constant 0 : index
    %10 = vector.load %arg5[%c0_8, %c0_9] : memref<1x2xf32, #tpu.memory_space<vmem>>, vector<1x2xf32>
    %11 = vector.broadcast %10 : vector<1x2xf32> to vector<2x2xf32>
    %12 = arith.addf %9, %11 : vector<2x2xf32>
    %c0_10 = arith.constant 0 : index
    %c0_11 = arith.constant 0 : index
    %13 = vector.load %arg6[%c0_10, %c0_11] : memref<2x2xf32, #tpu.memory_space<vmem>>, vector<2x2xf32>
    tpu.vector_store %arg6[%c0_10, %c0_11], %12 {strides = array<i32>} : memref<2x2xf32, #tpu.memory_space<vmem>>, vector<2x2xf32>,
    return
  }
  func.func @transform_0(%arg0: i32) -> (i32, i32) {
    %c0_i32 = arith.constant 0 : i32
    %c0_i32_0 = arith.constant 0 : i32
    %c0_i32_1 = arith.constant 0 : i32
    return %c0_i32, %c0_i32_0 : i32, i32
  }
  func.func @transform_1(%arg0: i32) -> (i32, i32) {
    %c0_i32 = arith.constant 0 : i32
    %c0_i32_0 = arith.constant 0 : i32
    %c0_i32_1 = arith.constant 0 : i32
    return %c0_i32, %c0_i32_0 : i32, i32
  }
  func.func @transform_2(%arg0: i32) -> (i32, i32) {
    %c0_i32 = arith.constant 0 : i32
    %c0_i32_0 = arith.constant 0 : i32
    %c0_i32_1 = arith.constant 0 : i32
    return %c0_i32, %c0_i32_0 : i32, i32
  }
  func.func @transform_3(%arg0: i32) -> (i32, i32) {
    %c0_i32 = arith.constant 0 : i32
    %c0_i32_0 = arith.constant 0 : i32
    %c0_i32_1 = arith.constant 0 : i32
    return %c0_i32, %c0_i32_0 : i32, i32
  }
  func.func @transform_4(%arg0: i32) -> (i32, i32) {
    %c0_i32 = arith.constant 0 : i32
    %c0_i32_0 = arith.constant 0 : i32
    %c0_i32_1 = arith.constant 0 : i32
    return %c0_i32, %c0_i32_0 : i32, i32
  }
  func.func @transform_5(%arg0: i32) -> (i32, i32) {
    %c0_i32 = arith.constant 0 : i32
    %c0_i32_0 = arith.constant 0 : i32
    %c0_i32_1 = arith.constant 0 : i32
    return %c0_i32, %c0_i32_0 : i32, i32
  }
}

</mosaic_0001>

<llo_original>
// kernel: cell_dsformer_forward.3
$region0: #{cell_dsformer_forward.3}
  #allocation0 [shape = 'u32[]', space=smem, size = 0x4, offset = 0x4, fixed_abs, tag = 'smem constant byte address 0x4 - core index']
  #allocation1 [shape = 'u32[144,128]{1,0:T(1,128)}', space=vmem, size = 0x12000, scoped, tag = 'internal scratch']
  %s0 = inlined_call_operand.vmem [shape: f32[2,256], index: 0, kind: input, shape index: {}]
  %s1 = inlined_call_operand.vmem [shape: bf16[256,32], index: 1, kind: input, shape index: {}]
  %s2 = inlined_call_operand.vmem [shape: f32[1,32], index: 2, kind: input, shape index: {}]
  %s3 = inlined_call_operand.vmem [shape: bf16[32,2], index: 3, kind: input, shape index: {}]
  %s4 = inlined_call_operand.vmem [shape: f32[1,2], index: 4, kind: input, shape index: {}]
  %s5 = inlined_call_operand.hbm [shape: f32[2,2], index: 5, kind: output, shape index: {}]
  %s6 = sld [smem:[#allocation0]]
  $region30: #{cell_dsformer_forward.3} parent=0
    _
  %s8 = ssub.s32 1, %s6
  %s9 = scalar_select 0, %s8, %s6
  $region1: #{cell_dsformer_forward.3} parent=0
    #allocation2 [shape = 'u8[1024]{0}', space=vmem, size = 0x400, scoped, tag = 'output window, operand 0, single buffered']
    #allocation3 [shape = 's32[1]{0}', space=sflag, size = 0x4, scoped, tag = 'scoped memory for cell_dsformer_forward.3']
    %10 = vsyncpa [#allocation3], 0
    // Predicated region
    $region2: #{cell_dsformer_forward.3} parent=1 // pred_check
      _
    $region3: #{cell_dsformer_forward.3} parent=1 // pred_check_branch
      %12 = sbr.rel (0) target = $region5
    $region4: #{cell_dsformer_forward.3} parent=1 // pred_region
      _
    $region5: #{cell_dsformer_forward.3} parent=1 // pred_fallthru
      _
    // Predicated region
    $region6: #{cell_dsformer_forward.3} parent=1 // pred_check
      _
    $region7: #{cell_dsformer_forward.3} parent=1 // pred_check_branch
      %14 = sbr.rel (0) target = $region9
    $region8: #{cell_dsformer_forward.3} parent=1 // pred_region
      _
    $region9: #{cell_dsformer_forward.3} parent=1 // pred_fallthru
      _
    // Predicated region
    $region10: #{cell_dsformer_forward.3} parent=1 // pred_check
      _
    $region11: #{cell_dsformer_forward.3} parent=1 // pred_check_branch
      %16 = sbr.rel (0) target = $region13
    $region12: #{cell_dsformer_forward.3} parent=1 // pred_region
      _
    $region13: #{cell_dsformer_forward.3} parent=1 // pred_fallthru
      _
    // Predicated region
    $region14: #{cell_dsformer_forward.3} parent=1 // pred_check
      _
    $region15: #{cell_dsformer_forward.3} parent=1 // pred_check_branch
      %18 = sbr.rel (0) target = $region17
    $region16: #{cell_dsformer_forward.3} parent=1 // pred_region
      _
    $region17: #{cell_dsformer_forward.3} parent=1 // pred_fallthru
      _
    // Predicated region
    $region18: #{cell_dsformer_forward.3} parent=1 // pred_check
      _
    $region19: #{cell_dsformer_forward.3} parent=1 // pred_check_branch
      %20 = sbr.rel (0) target = $region21
    $region20: #{cell_dsformer_forward.3} parent=1 // pred_region
      _
    $region21: #{cell_dsformer_forward.3} parent=1 // pred_fallthru
      _
    %v22 = vld [vmem:[%s0] sm:$0xf]
    %v25 = vunpack.c.l.s4 1983009808
    %v26 = vunpack.c.0.s8 %v25
    %v27 = vlaneseq
    %v28 = vshrl.u32 %v27, 7
    %v29 = vsub.s32 %v26, %v28
    %v30 = vrot.slane %v22, %v29
    %v31 = vcombine.high %v30, %v30
    %v34 = vpack.c.bf16 %v30, %v30
    %v35 = vpack.c.bf16 %v31, %v31
    %v36 = vld [vmem:[%s1] sm:$0xf]
    %v37 = vld [vmem:[%s1 + $0x4] sm:$0xf]
    %v38 = vld [vmem:[%s1 + $0x8] sm:$0xf]
    %v39 = vld [vmem:[%s1 + $0xc] sm:$0xf]
    %v40 = vld [vmem:[%s1 + $0x10] sm:$0xf]
    %v41 = vld [vmem:[%s1 + $0x14] sm:$0xf]
    %v42 = vld [vmem:[%s1 + $0x18] sm:$0xf]
    %v43 = vld [vmem:[%s1 + $0x1c] sm:$0xf]
    %v44 = vld [vmem:[%s1 + $0x20] sm:$0xf]
    %v45 = vld [vmem:[%s1 + $0x24] sm:$0xf]
    %v46 = vld [vmem:[%s1 + $0x28] sm:$0xf]
    %v47 = vld [vmem:[%s1 + $0x2c] sm:$0xf]
    %v48 = vld [vmem:[%s1 + $0x30] sm:$0xf]
    %v49 = vld [vmem:[%s1 + $0x34] sm:$0xf]
    %v50 = vld [vmem:[%s1 + $0x38] sm:$0xf]
    %v51 = vld [vmem:[%s1 + $0x3c] sm:$0xf]
    %v52 = vld [vmem:[%s1 + $0x40] sm:$0xf]
    %v53 = vld [vmem:[%s1 + $0x44] sm:$0xf]
    %v54 = vld [vmem:[%s1 + $0x48] sm:$0xf]
    %v55 = vld [vmem:[%s1 + $0x4c] sm:$0xf]
    %v56 = vld [vmem:[%s1 + $0x50] sm:$0xf]
    %v57 = vld [vmem:[%s1 + $0x54] sm:$0xf]
    %v58 = vld [vmem:[%s1 + $0x58] sm:$0xf]
    %v59 = vld [vmem:[%s1 + $0x5c] sm:$0xf]
    %v60 = vld [vmem:[%s1 + $0x60] sm:$0xf]
    %v61 = vld [vmem:[%s1 + $0x64] sm:$0xf]
    %v62 = vld [vmem:[%s1 + $0x68] sm:$0xf]
    %v63 = vld [vmem:[%s1 + $0x6c] sm:$0xf]
    %v64 = vld [vmem:[%s1 + $0x70] sm:$0xf]
    %v65 = vld [vmem:[%s1 + $0x74] sm:$0xf]
    %v66 = vld [vmem:[%s1 + $0x78] sm:$0xf]
    %v67 = vld [vmem:[%s1 + $0x7c] sm:$0xf]
    %v68 = vld [vmem:[%s2] sm:$0x1]
    %v70 = vlaneseq
    %v71 = vshrl.u32 %v70, 7
    %v72 = vsub.s32 0, %v71
    %v73 = vrot.slane %v68, %v72
    %v107 = vunpack.c.l.b16 %v36
    %v108 = vunpack.c.l.b16 %v37
    %v109 = vunpack.c.l.b16 %v38
    %v110 = vunpack.c.l.b16 %v39
    %v111 = vunpack.c.l.b16 %v40
    %v112 = vunpack.c.l.b16 %v41
    %v113 = vunpack.c.l.b16 %v42
    %v114 = vunpack.c.l.b16 %v43
    %v115 = vunpack.c.l.b16 %v44
    %v116 = vunpack.c.l.b16 %v45
    %v117 = vunpack.c.l.b16 %v46
    %v118 = vunpack.c.l.b16 %v47
    %v119 = vunpack.c.l.b16 %v48
    %v120 = vunpack.c.l.b16 %v49
    %v121 = vunpack.c.l.b16 %v50
    %v122 = vunpack.c.l.b16 %v51
    %v123 = vunpack.c.l.b16 %v52
    %v124 = vunpack.c.l.b16 %v53
    %v125 = vunpack.c.l.b16 %v54
    %v126 = vunpack.c.l.b16 %v55
    %v127 = vunpack.c.l.b16 %v56
    %v128 = vunpack.c.l.b16 %v57
    %v129 = vunpack.c.l.b16 %v58
    %v130 = vunpack.c.l.b16 %v59
    %v131 = vunpack.c.l.b16 %v60
    %v132 = vunpack.c.l.b16 %v61
    %v133 = vunpack.c.l.b16 %v62
    %v134 = vunpack.c.l.b16 %v63
    %v135 = vunpack.c.l.b16 %v64
    %v136 = vunpack.c.l.b16 %v65
    %v137 = vunpack.c.l.b16 %v66
    %v138 = vunpack.c.l.b16 %v67
    %v139 = vpack.c.b16 %v108, %v107
    %v140 = vpack.c.b16 %v110, %v109
    %v141 = vpack.c.b16 %v112, %v111
    %v142 = vpack.c.b16 %v114, %v113
    %v143 = vpack.c.b16 %v116, %v115
    %v144 = vpack.c.b16 %v118, %v117
    %v145 = vpack.c.b16 %v120, %v119
    %v146 = vpack.c.b16 %v122, %v121
    %v147 = vpack.c.b16 %v124, %v123
    %v148 = vpack.c.b16 %v126, %v125
    %v149 = vpack.c.b16 %v128, %v127
    %v150 = vpack.c.b16 %v130, %v129
    %v151 = vpack.c.b16 %v132, %v131
    %v152 = vpack.c.b16 %v134, %v133
    %v153 = vpack.c.b16 %v136, %v135
    %v154 = vpack.c.b16 %v138, %v137
    %171 = vmatprep.subr.bf16.mxu0 0
    %172 = vmatpush1.bf16.msra.mxu0 %v139
    %173 = vmatprep.subr.bf16.mxu0 0
    %174 = vmatpush1.bf16.msra.mxu0 %v140
    %175 = vmatprep.subr.bf16.mxu0 0
    %176 = vmatpush1.bf16.msra.mxu0 %v141
    %177 = vmatprep.subr.bf16.mxu0 0
    %178 = vmatpush1.bf16.msra.mxu0 %v142
    %179 = vmatprep.subr.bf16.mxu0 0
    %180 = vmatpush1.bf16.msra.mxu0 %v143
    %181 = vmatprep.subr.bf16.mxu0 0
    %182 = vmatpush1.bf16.msra.mxu0 %v144
    %183 = vmatprep.subr.bf16.mxu0 0
    %184 = vmatpush1.bf16.msra.mxu0 %v145
    %185 = vmatprep.subr.bf16.mxu0 0
    %186 = vmatpush1.bf16.msra.mxu0 %v146
    %187 = vmatprep.subr.bf16.mxu0 0
    %188 = vmatpush1.bf16.msra.mxu0 %v147
    %189 = vmatprep.subr.bf16.mxu0 0
    %190 = vmatpush1.bf16.msra.mxu0 %v148
    %191 = vmatprep.subr.bf16.mxu0 0
    %192 = vmatpush1.bf16.msra.mxu0 %v149
    %193 = vmatprep.subr.bf16.mxu0 0
    %194 = vmatpush1.bf16.msra.mxu0 %v150
    %195 = vmatprep.subr.bf16.mxu0 0
    %196 = vmatpush1.bf16.msra.mxu0 %v151
    %197 = vmatprep.subr.bf16.mxu0 0
    %198 = vmatpush1.bf16.msra.mxu0 %v152
    %199 = vmatprep.subr.bf16.mxu0 0
    %200 = vmatpush1.bf16.msra.mxu0 %v153
    %201 = vmatprep.subr.bf16.mxu0 0
    %202 = vmatpush1.bf16.msra.mxu0 %v154
    %203 = vmatprep.mubr.bf16.mxu0 %v35
    %204 = vmatmul.mubr.bf16.gmra.mrb[0].mxu0 %v34
    %v205 = vpop.f32.mrb[0].mxu0
    %v206 = vadd.f32 %v73, %v205
    %v207 = vpop.f32.mrb[0].mxu0
    %v208 = vpop.f32.mrb[0].mxu0
    %v209 = vpop.f32.mrb[0].mxu0
    %210 = vdwg.mxu0
    %v211 = vpack.c.bf16 %v206, %v206
    %v212 = vld [vmem:[%s3] sm:$0xf]
    %v213 = vld [vmem:[%s3 + $0x4] sm:$0xf]
    %v214 = vld [vmem:[%s3 + $0x8] sm:$0xf]
    %v215 = vld [vmem:[%s3 + $0xc] sm:$0xf]
    %v216 = vld [vmem:[%s4] sm:$0x1]
    %v218 = vlaneseq
    %v219 = vshrl.u32 %v218, 7
    %v220 = vsub.s32 0, %v219
    %v221 = vrot.slane %v216, %v220
    %v227 = vunpack.c.l.b16 %v212
    %v228 = vunpack.c.l.b16 %v213
    %v229 = vunpack.c.l.b16 %v214
    %v230 = vunpack.c.l.b16 %v215
    %v231 = vpack.c.b16 %v228, %v227
    %v232 = vpack.c.b16 %v230, %v229
    %vm235 = vcmask 261120
    %v237 = vsel %vm235, %v211, 0
    %239 = vmatprep.subr.bf16.mxu0 0
    %240 = vmatpush1.bf16.msra.mxu0 %v231
    %241 = vmatprep.subr.bf16.mxu0 0
    %242 = vmatpush1.bf16.msra.mxu0 %v232
    %243 = vmatprep.subr.bf16.mxu0 0
    %244 = vmatpush1.bf16.msra.mxu0 0
    %245 = vmatprep.subr.bf16.mxu0 0
    %246 = vmatpush1.bf16.msra.mxu0 0
    %247 = vmatprep.subr.bf16.mxu0 0
    %248 = vmatpush1.bf16.msra.mxu0 0
    %249 = vmatprep.subr.bf16.mxu0 0
    %250 = vmatpush1.bf16.msra.mxu0 0
    %251 = vmatprep.subr.bf16.mxu0 0
    %252 = vmatpush1.bf16.msra.mxu0 0
    %253 = vmatprep.subr.bf16.mxu0 0
    %254 = vmatpush1.bf16.msra.mxu0 0
    %255 = vmatprep.subr.bf16.mxu0 0
    %256 = vmatpush1.bf16.msra.mxu0 0
    %257 = vmatprep.subr.bf16.mxu0 0
    %258 = vmatpush1.bf16.msra.mxu0 0
    %259 = vmatprep.subr.bf16.mxu0 0
    %260 = vmatpush1.bf16.msra.mxu0 0
    %261 = vmatprep.subr.bf16.mxu0 0
    %262 = vmatpush1.bf16.msra.mxu0 0
    %263 = vmatprep.subr.bf16.mxu0 0
    %264 = vmatpush1.bf16.msra.mxu0 0
    %265 = vmatprep.subr.bf16.mxu0 0
    %266 = vmatpush1.bf16.msra.mxu0 0
    %267 = vmatprep.subr.bf16.mxu0 0
    %268 = vmatpush1.bf16.msra.mxu0 0
    %269 = vmatprep.subr.bf16.mxu0 0
    %270 = vmatpush1.bf16.msra.mxu0 0
    %271 = vmatprep.mubr.bf16.mxu0 0
    %272 = vmatmul.mubr.bf16.gmra.mrb[0].mxu0 %v237
    %v273 = vpop.f32.mrb[0].mxu0
    %v274 = vadd.f32 %v221, %v273
    %v275 = vpop.f32.mrb[0].mxu0
    %v276 = vpop.f32.mrb[0].mxu0
    %v277 = vpop.f32.mrb[0].mxu0
    %278 = vdwg.mxu0
    %vm279 = vcmask 9216
    %280 = vst.msk [vmem:[#allocation2] sm:$0x3] %vm279, %v274
    // Predicated region
    $region22: #{cell_dsformer_forward.3} parent=1 // pred_check
      _
    $region23: #{cell_dsformer_forward.3} parent=1 // pred_check_branch
      %282 = sbr.rel (0) target = $region25
    $region24: #{cell_dsformer_forward.3} parent=1 // pred_region
      %s284 = ssub.s32 32, 32
      %285 = vsyncadd [#allocation3], %s284
      %s287 = sshll.u32 [#allocation2], 4
      %s288 = int_to_ptr.vmem [resolvable:$true] %s287
      %290 = dma.vmem_to_hbm [thread:$0]  %s288, 32, %s5, [#allocation3]
    $region25: #{cell_dsformer_forward.3} parent=1 // pred_fallthru
      _
    // Predicated region
    $region26: #{cell_dsformer_forward.3} parent=1 // pred_check
      _
    $region27: #{cell_dsformer_forward.3} parent=1 // pred_check_branch
      %292 = sbr.rel (0) target = $region29
    $region28: #{cell_dsformer_forward.3} parent=1 // pred_region
      %293 = dma.done [#allocation3], 32
    $region29: #{cell_dsformer_forward.3} parent=1 // pred_fallthru
      _
    %294 = vsyncpa [#allocation3], 1

// kernel: cell_dsformer_forward.2
$region0: #{cell_dsformer_forward.2}
  #allocation0 [shape = 'u32[]', space=smem, size = 0x4, offset = 0x4, fixed_abs, tag = 'smem constant byte address 0x4 - core index']
  #allocation1 [shape = 'u32[144,128]{1,0:T(1,128)}', space=vmem, size = 0x12000, scoped, tag = 'internal scratch']
  #allocation2 [shape = 'f32[16,32]{1,0:T(8,128)}', space=vmem, size = 0x2000, scoped, tag = 'scratch operand']
  %s0 = inlined_call_operand.vmem [shape: f32[2,8,32], index: 0, kind: input, shape index: {}]
  %s1 = inlined_call_operand.vmem [shape: f32[2,8,32], index: 1, kind: input, shape index: {}]
  %s2 = inlined_call_operand.vmem [shape: f32[2,8,32], index: 2, kind: input, shape index: {}]
  %s3 = inlined_call_operand.vmem [shape: bf16[6,32,96], index: 3, kind: input, shape index: {}]
  %s4 = inlined_call_operand.vmem [shape: f32[6,1,96], index: 4, kind: input, shape index: {}]
  %s5 = inlined_call_operand.vmem [shape: bf16[6,32,32], index: 5, kind: input, shape index: {}]
  %s6 = inlined_call_operand.vmem [shape: bf16[6,32,64], index: 6, kind: input, shape index: {}]
  %s7 = inlined_call_operand.vmem [shape: f32[6,1,64], index: 7, kind: input, shape index: {}]
  %s8 = inlined_call_operand.vmem [shape: bf16[6,64,32], index: 8, kind: input, shape index: {}]
  %s9 = inlined_call_operand.vmem [shape: f32[6,6,32], index: 9, kind: input, shape index: {}]
  %s10 = inlined_call_operand.vmem [shape: bf16[64,32], index: 10, kind: input, shape index: {}]
  %s11 = inlined_call_operand.vmem [shape: f32[1,32], index: 11, kind: input, shape index: {}]
  %s12 = inlined_call_operand.vmem [shape: bf16[64,32], index: 12, kind: input, shape index: {}]
  %s13 = inlined_call_operand.vmem [shape: f32[1,32], index: 13, kind: input, shape index: {}]
  %s14 = inlined_call_operand.vmem [shape: f32[2,8,32], index: 14, kind: output, shape index: {}]
  %s15 = sld [smem:[#allocation0]]
  $region105: #{cell_dsformer_forward.2} parent=0
    _
  %s17 = ssub.s32 1, %s15
  %s18 = scalar_select 0, %s17, %s15
  loop: start=0, step=1, limit=8
  $region2: #{cell_dsformer_forward.2} parent=0 // loop_pre_header
    _
  $region3: #{cell_dsformer_forward.2} parent=0 // loop_header
    %s20 = sphi 0, %s24
    %p21 = scmp.ge.s32.totalorder %s20, 8
    %s27 = sphi 0, %s39
    %s28 = sphi 0, %s35
    %s29 = sphi 0, %s27
    %s30 = sphi 0, %s28
    %s31 = sphi 0, %s29
    %s32 = sphi 0, %s30
    %s42 = sphi 0, %s44
    %s45 = sphi 0, %s42
    %s46 = sphi 0, %s45
    %s62 = sphi 0, %s46
    %s68 = sphi 0, %s70
    %s71 = sphi 0, %s68
    %s72 = sphi 0, %s71
    %s88 = sphi 0, %s72
    %s94 = sphi 0, %s96
    %s97 = sphi 0, %s94
    %s98 = sphi 0, %s97
    %s114 = sphi 0, %s98
    %s120 = sphi 0, %s122
    %s123 = sphi 0, %s120
    %s124 = sphi 0, %s123
    %s140 = sphi 0, %s124
    %s146 = sphi 0, %s148
    %s149 = sphi 0, %s146
    %s150 = sphi 0, %s149
    %s166 = sphi 0, %s150
    %s172 = sphi 0, %s174
    %s175 = sphi 0, %s172
    %s176 = sphi 0, %s175
    %s192 = sphi 0, %s176
    %s198 = sphi 0, %s200
    %s201 = sphi 0, %s198
    %s202 = sphi 0, %s201
    %s218 = sphi 0, %s202
    %s224 = sphi 0, %s226
    %s227 = sphi 0, %s224
    %s228 = sphi 0, %s227
    %s244 = sphi 0, %s228
    %s250 = sphi 0, %s252
    %s253 = sphi 0, %s250
    %s254 = sphi 0, %s253
    %s270 = sphi 0, %s254
    %s276 = sphi 0, %s278
    %s279 = sphi 0, %s276
    %s280 = sphi 0, %s279
    %s296 = sphi 0, %s280
    %s300 = sphi 0, %s300
    %s302 = sphi 0, %s300
    %s303 = sphi 0, %s302
    %s317 = sphi 0, %s303
    %s321 = sphi 0, %s321
    %s323 = sphi 0, %s321
    %s324 = sphi 0, %s323
    %s338 = sphi 0, %s324
    %s342 = sphi 0, %s342
    %s344 = sphi 0, %s342
    %s345 = sphi 0, %s344
    %s359 = sphi 0, %s345
    %s363 = sphi 0, %s363
    %s365 = sphi 0, %s363
    %s366 = sphi 0, %s365
    %s380 = sphi 0, %s366
    %s386 = sphi 0, %s388
    %s389 = sphi 0, %s386
    %s390 = sphi 0, %s389
    %s406 = sphi 0, %s390
  $region4: #{cell_dsformer_forward.2} parent=0 // loop_header_branch
    %23 = sbr.rel (%p21) target = $region8
  $region5: #{cell_dsformer_forward.2} parent=0 // loop_body
    %s25 = ssub.s32 %s20, 1
    %s26 = ssub.s32 %s20, 2
    %s33 = sadd.s32 1, %s28
    %p34 = scmp.ge.s32.totalorder %s33, 6
    %s35 = scalar_select %p34, 0, %s33
    %s36 = sadd.s32 1, %s27
    %s37 = scalar_select %p34, %s36, %s27
    %p38 = scmp.ge.s32.totalorder %s37, 1
    %s39 = scalar_select %p38, 0, %s37
    %s40 = ssub.s32 %s27, %s39
    %p41 = scmp.eq.s32.totalorder %s40, 0
    %s43 = sadd.s32 %s42, 1
    %s44 = scalar_select %p41, %s42, %s43
    %p47 = pneg %p41
    %p48 = scmp.eq.s32.totalorder %s20, 5
    %p49 = por %p47, %p48
    %p50 = scmp.ne.s32.totalorder %s42, %s45
    %p51 = scmp.eq.s32.totalorder %s20, 0
    %p52 = por %p50, %p51
    %p53 = scmp.ne.s32.totalorder %s42, %s45
    %p54 = scmp.eq.s32.totalorder %s25, 5
    %p55 = por %p53, %p54
    %p56 = scmp.ne.s32.totalorder %s45, %s46
    %p57 = scmp.eq.s32.totalorder %s25, 0
    %p58 = por %p56, %p57
    %p59 = scmp.ne.s32.totalorder %s45, %s46
    %p60 = scmp.eq.s32.totalorder %s26, 5
    %p61 = por %p59, %p60
    %p63 = scmp.ne.s32.totalorder %s46, %s62
    %p64 = scmp.eq.s32.totalorder %s26, 0
    %p65 = por %p63, %p64
    %s66 = ssub.s32 %s27, %s39
    %p67 = scmp.eq.s32.totalorder %s66, 0
    %s69 = sadd.s32 %s68, 1
    %s70 = scalar_select %p67, %s68, %s69
    %p73 = pneg %p67
    %p74 = scmp.eq.s32.totalorder %s20, 5
    %p75 = por %p73, %p74
    %p76 = scmp.ne.s32.totalorder %s68, %s71
    %p77 = scmp.eq.s32.totalorder %s20, 0
    %p78 = por %p76, %p77
    %p79 = scmp.ne.s32.totalorder %s68, %s71
    %p80 = scmp.eq.s32.totalorder %s25, 5
    %p81 = por %p79, %p80
    %p82 = scmp.ne.s32.totalorder %s71, %s72
    %p83 = scmp.eq.s32.totalorder %s25, 0
    %p84 = por %p82, %p83
    %p85 = scmp.ne.s32.totalorder %s71, %s72
    %p86 = scmp.eq.s32.totalorder %s26, 5
    %p87 = por %p85, %p86
    %p89 = scmp.ne.s32.totalorder %s72, %s88
    %p90 = scmp.eq.s32.totalorder %s26, 0
    %p91 = por %p89, %p90
    %s92 = ssub.s32 %s27, %s39
    %p93 = scmp.eq.s32.totalorder %s92, 0
    %s95 = sadd.s32 %s94, 1
    %s96 = scalar_select %p93, %s94, %s95
    %p99 = pneg %p93
    %p100 = scmp.eq.s32.totalorder %s20, 5
    %p101 = por %p99, %p100
    %p102 = scmp.ne.s32.totalorder %s94, %s97
    %p103 = scmp.eq.s32.totalorder %s20, 0
    %p104 = por %p102, %p103
    %p105 = scmp.ne.s32.totalorder %s94, %s97
    %p106 = scmp.eq.s32.totalorder %s25, 5
    %p107 = por %p105, %p106
    %p108 = scmp.ne.s32.totalorder %s97, %s98
    %p109 = scmp.eq.s32.totalorder %s25, 0
    %p110 = por %p108, %p109
    %p111 = scmp.ne.s32.totalorder %s97, %s98
    %p112 = scmp.eq.s32.totalorder %s26, 5
    %p113 = por %p111, %p112
    %p115 = scmp.ne.s32.totalorder %s98, %s114
    %p116 = scmp.eq.s32.totalorder %s26, 0
    %p117 = por %p115, %p116
    %s118 = ssub.s32 %s28, %s35
    %p119 = scmp.eq.s32.totalorder %s118, 0
    %s121 = sadd.s32 %s120, 1
    %s122 = scalar_select %p119, %s120, %s121
    %p125 = pneg %p119
    %p126 = scmp.eq.s32.totalorder %s20, 5
    %p127 = por %p125, %p126
    %p128 = scmp.ne.s32.totalorder %s120, %s123
    %p129 = scmp.eq.s32.totalorder %s20, 0
    %p130 = por %p128, %p129
    %p131 = scmp.ne.s32.totalorder %s120, %s123
    %p132 = scmp.eq.s32.totalorder %s25, 5
    %p133 = por %p131, %p132
    %p134 = scmp.ne.s32.totalorder %s123, %s124
    %p135 = scmp.eq.s32.totalorder %s25, 0
    %p136 = por %p134, %p135
    %p137 = scmp.ne.s32.totalorder %s123, %s124
    %p138 = scmp.eq.s32.totalorder %s26, 5
    %p139 = por %p137, %p138
    %p141 = scmp.ne.s32.totalorder %s124, %s140
    %p142 = scmp.eq.s32.totalorder %s26, 0
    %p143 = por %p141, %p142
    %s144 = ssub.s32 %s28, %s35
    %p145 = scmp.eq.s32.totalorder %s144, 0
    %s147 = sadd.s32 %s146, 1
    %s148 = scalar_select %p145, %s146, %s147
    %p151 = pneg %p145
    %p152 = scmp.eq.s32.totalorder %s20, 5
    %p153 = por %p151, %p152
    %p154 = scmp.ne.s32.totalorder %s146, %s149
    %p155 = scmp.eq.s32.totalorder %s20, 0
    %p156 = por %p154, %p155
    %p157 = scmp.ne.s32.totalorder %s146, %s149
    %p158 = scmp.eq.s32.totalorder %s25, 5
    %p159 = por %p157, %p158
    %p160 = scmp.ne.s32.totalorder %s149, %s150
    %p161 = scmp.eq.s32.totalorder %s25, 0
    %p162 = por %p160, %p161
    %p163 = scmp.ne.s32.totalorder %s149, %s150
    %p164 = scmp.eq.s32.totalorder %s26, 5
    %p165 = por %p163, %p164
    %p167 = scmp.ne.s32.totalorder %s150, %s166
    %p168 = scmp.eq.s32.totalorder %s26, 0
    %p169 = por %p167, %p168
    %s170 = ssub.s32 %s28, %s35
    %p171 = scmp.eq.s32.totalorder %s170, 0
    %s173 = sadd.s32 %s172, 1
    %s174 = scalar_select %p171, %s172, %s173
    %p177 = pneg %p171
    %p178 = scmp.eq.s32.totalorder %s20, 5
    %p179 = por %p177, %p178
    %p180 = scmp.ne.s32.totalorder %s172, %s175
    %p181 = scmp.eq.s32.totalorder %s20, 0
    %p182 = por %p180, %p181
    %p183 = scmp.ne.s32.totalorder %s172, %s175
    %p184 = scmp.eq.s32.totalorder %s25, 5
    %p185 = por %p183, %p184
    %p186 = scmp.ne.s32.totalorder %s175, %s176
    %p187 = scmp.eq.s32.totalorder %s25, 0
    %p188 = por %p186, %p187
    %p189 = scmp.ne.s32.totalorder %s175, %s176
    %p190 = scmp.eq.s32.totalorder %s26, 5
    %p191 = por %p189, %p190
    %p193 = scmp.ne.s32.totalorder %s176, %s192
    %p194 = scmp.eq.s32.totalorder %s26, 0
    %p195 = por %p193, %p194
    %s196 = ssub.s32 %s28, %s35
    %p197 = scmp.eq.s32.totalorder %s196, 0
    %s199 = sadd.s32 %s198, 1
    %s200 = scalar_select %p197, %s198, %s199
    %p203 = pneg %p197
    %p204 = scmp.eq.s32.totalorder %s20, 5
    %p205 = por %p203, %p204
    %p206 = scmp.ne.s32.totalorder %s198, %s201
    %p207 = scmp.eq.s32.totalorder %s20, 0
    %p208 = por %p206, %p207
    %p209 = scmp.ne.s32.totalorder %s198, %s201
    %p210 = scmp.eq.s32.totalorder %s25, 5
    %p211 = por %p209, %p210
    %p212 = scmp.ne.s32.totalorder %s201, %s202
    %p213 = scmp.eq.s32.totalorder %s25, 0
    %p214 = por %p212, %p213
    %p215 = scmp.ne.s32.totalorder %s201, %s202
    %p216 = scmp.eq.s32.totalorder %s26, 5
    %p217 = por %p215, %p216
    %p219 = scmp.ne.s32.totalorder %s202, %s218
    %p220 = scmp.eq.s32.totalorder %s26, 0
    %p221 = por %p219, %p220
    %s222 = ssub.s32 %s28, %s35
    %p223 = scmp.eq.s32.totalorder %s222, 0
    %s225 = sadd.s32 %s224, 1
    %s226 = scalar_select %p223, %s224, %s225
    %p229 = pneg %p223
    %p230 = scmp.eq.s32.totalorder %s20, 5
    %p231 = por %p229, %p230
    %p232 = scmp.ne.s32.totalorder %s224, %s227
    %p233 = scmp.eq.s32.totalorder %s20, 0
    %p234 = por %p232, %p233
    %p235 = scmp.ne.s32.totalorder %s224, %s227
    %p236 = scmp.eq.s32.totalorder %s25, 5
    %p237 = por %p235, %p236
    %p238 = scmp.ne.s32.totalorder %s227, %s228
    %p239 = scmp.eq.s32.totalorder %s25, 0
    %p240 = por %p238, %p239
    %p241 = scmp.ne.s32.totalorder %s227, %s228
    %p242 = scmp.eq.s32.totalorder %s26, 5
    %p243 = por %p241, %p242
    %p245 = scmp.ne.s32.totalorder %s228, %s244
    %p246 = scmp.eq.s32.totalorder %s26, 0
    %p247 = por %p245, %p246
    %s248 = ssub.s32 %s28, %s35
    %p249 = scmp.eq.s32.totalorder %s248, 0
    %s251 = sadd.s32 %s250, 1
    %s252 = scalar_select %p249, %s250, %s251
    %p255 = pneg %p249
    %p256 = scmp.eq.s32.totalorder %s20, 5
    %p257 = por %p255, %p256
    %p258 = scmp.ne.s32.totalorder %s250, %s253
    %p259 = scmp.eq.s32.totalorder %s20, 0
    %p260 = por %p258, %p259
    %p261 = scmp.ne.s32.totalorder %s250, %s253
    %p262 = scmp.eq.s32.totalorder %s25, 5
    %p263 = por %p261, %p262
    %p264 = scmp.ne.s32.totalorder %s253, %s254
    %p265 = scmp.eq.s32.totalorder %s25, 0
    %p266 = por %p264, %p265
    %p267 = scmp.ne.s32.totalorder %s253, %s254
    %p268 = scmp.eq.s32.totalorder %s26, 5
    %p269 = por %p267, %p268
    %p271 = scmp.ne.s32.totalorder %s254, %s270
    %p272 = scmp.eq.s32.totalorder %s26, 0
    %p273 = por %p271, %p272
    %s274 = ssub.s32 %s28, %s35
    %p275 = scmp.eq.s32.totalorder %s274, 0
    %s277 = sadd.s32 %s276, 1
    %s278 = scalar_select %p275, %s276, %s277
    %p281 = pneg %p275
    %p282 = scmp.eq.s32.totalorder %s20, 5
    %p283 = por %p281, %p282
    %p284 = scmp.ne.s32.totalorder %s276, %s279
    %p285 = scmp.eq.s32.totalorder %s20, 0
    %p286 = por %p284, %p285
    %p287 = scmp.ne.s32.totalorder %s276, %s279
    %p288 = scmp.eq.s32.totalorder %s25, 5
    %p289 = por %p287, %p288
    %p290 = scmp.ne.s32.totalorder %s279, %s280
    %p291 = scmp.eq.s32.totalorder %s25, 0
    %p292 = por %p290, %p291
    %p293 = scmp.ne.s32.totalorder %s279, %s280
    %p294 = scmp.eq.s32.totalorder %s26, 5
    %p295 = por %p293, %p294
    %p297 = scmp.ne.s32.totalorder %s280, %s296
    %p298 = scmp.eq.s32.totalorder %s26, 0
    %p299 = por %p297, %p298
    %s301 = sadd.s32 %s300, 1
    %p304 = scmp.eq.s32.totalorder %s20, 5
    %p305 = scmp.ne.s32.totalorder %s300, %s302
    %p306 = scmp.eq.s32.totalorder %s20, 0
    %p307 = por %p305, %p306
    %p308 = scmp.ne.s32.totalorder %s300, %s302
    %p309 = scmp.eq.s32.totalorder %s25, 5
    %p310 = por %p308, %p309
    %p311 = scmp.ne.s32.totalorder %s302, %s303
    %p312 = scmp.eq.s32.totalorder %s25, 0
    %p313 = por %p311, %p312
    %p314 = scmp.ne.s32.totalorder %s302, %s303
    %p315 = scmp.eq.s32.totalorder %s26, 5
    %p316 = por %p314, %p315
    %p318 = scmp.ne.s32.totalorder %s303, %s317
    %p319 = scmp.eq.s32.totalorder %s26, 0
    %p320 = por %p318, %p319
    %s322 = sadd.s32 %s321, 1
    %p325 = scmp.eq.s32.totalorder %s20, 5
    %p326 = scmp.ne.s32.totalorder %s321, %s323
    %p327 = scmp.eq.s32.totalorder %s20, 0
    %p328 = por %p326, %p327
    %p329 = scmp.ne.s32.totalorder %s321, %s323
    %p330 = scmp.eq.s32.totalorder %s25, 5
    %p331 = por %p329, %p330
    %p332 = scmp.ne.s32.totalorder %s323, %s324
    %p333 = scmp.eq.s32.totalorder %s25, 0
    %p334 = por %p332, %p333
    %p335 = scmp.ne.s32.totalorder %s323, %s324
    %p336 = scmp.eq.s32.totalorder %s26, 5
    %p337 = por %p335, %p336
    %p339 = scmp.ne.s32.totalorder %s324, %s338
    %p340 = scmp.eq.s32.totalorder %s26, 0
    %p341 = por %p339, %p340
    %s343 = sadd.s32 %s342, 1
    %p346 = scmp.eq.s32.totalorder %s20, 5
    %p347 = scmp.ne.s32.totalorder %s342, %s344
    %p348 = scmp.eq.s32.totalorder %s20, 0
    %p349 = por %p347, %p348
    %p350 = scmp.ne.s32.totalorder %s342, %s344
    %p351 = scmp.eq.s32.totalorder %s25, 5
    %p352 = por %p350, %p351
    %p353 = scmp.ne.s32.totalorder %s344, %s345
    %p354 = scmp.eq.s32.totalorder %s25, 0
    %p355 = por %p353, %p354
    %p356 = scmp.ne.s32.totalorder %s344, %s345
    %p357 = scmp.eq.s32.totalorder %s26, 5
    %p358 = por %p356, %p357
    %p360 = scmp.ne.s32.totalorder %s345, %s359
    %p361 = scmp.eq.s32.totalorder %s26, 0
    %p362 = por %p360, %p361
    %s364 = sadd.s32 %s363, 1
    %p367 = scmp.eq.s32.totalorder %s20, 5
    %p368 = scmp.ne.s32.totalorder %s363, %s365
    %p369 = scmp.eq.s32.totalorder %s20, 0
    %p370 = por %p368, %p369
    %p371 = scmp.ne.s32.totalorder %s363, %s365
    %p372 = scmp.eq.s32.totalorder %s25, 5
    %p373 = por %p371, %p372
    %p374 = scmp.ne.s32.totalorder %s365, %s366
    %p375 = scmp.eq.s32.totalorder %s25, 0
    %p376 = por %p374, %p375
    %p377 = scmp.ne.s32.totalorder %s365, %s366
    %p378 = scmp.eq.s32.totalorder %s26, 5
    %p379 = por %p377, %p378
    %p381 = scmp.ne.s32.totalorder %s366, %s380
    %p382 = scmp.eq.s32.totalorder %s26, 0
    %p383 = por %p381, %p382
    %s384 = ssub.s32 %s27, %s39
    %p385 = scmp.eq.s32.totalorder %s384, 0
    %s387 = sadd.s32 %s386, 1
    %s388 = scalar_select %p385, %s386, %s387
    %p391 = pneg %p385
    %p392 = scmp.eq.s32.totalorder %s20, 5
    %p393 = por %p391, %p392
    %p394 = scmp.ne.s32.totalorder %s386, %s389
    %p395 = scmp.eq.s32.totalorder %s20, 0
    %p396 = por %p394, %p395
    %p397 = scmp.ne.s32.totalorder %s386, %s389
    %p398 = scmp.eq.s32.totalorder %s25, 5
    %p399 = por %p397, %p398
    %p400 = scmp.ne.s32.totalorder %s389, %s390
    %p401 = scmp.eq.s32.totalorder %s25, 0
    %p402 = por %p400, %p401
    %p403 = scmp.ne.s32.totalorder %s389, %s390
    %p404 = scmp.eq.s32.totalorder %s26, 5
    %p405 = por %p403, %p404
    %p407 = scmp.ne.s32.totalorder %s390, %s406
    %p408 = scmp.eq.s32.totalorder %s26, 0
    %p409 = por %p407, %p408
    %p410 = scmp.le.s32.totalorder 1, %s20
    %p411 = scmp.lt.s32.totalorder %s20, 7
    %p412 = pnand %p410, %p411
    %p413 = pneg %p412
    // Predicated region
    $region9: #{cell_dsformer_forward.2} parent=5 // pred_check
      _
    $region10: #{cell_dsformer_forward.2} parent=5 // pred_check_branch
      %415 = sbr.rel (%p412) target = $region12
    $region11: #{cell_dsformer_forward.2} parent=5 // pred_region
      %s416 = ssub.s32 %s20, 1
      // Predicated region
      $region13: #{cell_dsformer_forward.2} parent=11 // pred_check
        %p417 = pneg %p58
      $region14: #{cell_dsformer_forward.2} parent=11 // pred_check_branch
        %419 = sbr.rel (%p417) target = $region16
      $region15: #{cell_dsformer_forward.2} parent=11 // pred_region
        %s420 = smul.u32 2, %s29
        %p421 = scmp.lt.s32.totalorder %s420, 1
        %s422 = scalar_select %p421, %s420, 1
        %s423 = smul.addr %s422, 8
        %s424 = scalar_lea.vmem %s0, %s423
        %s425 = smul.u32 2, %s29
      $region16: #{cell_dsformer_forward.2} parent=11 // pred_fallthru
        _
      // Predicated region
      $region17: #{cell_dsformer_forward.2} parent=11 // pred_check
        %p426 = pneg %p84
      $region18: #{cell_dsformer_forward.2} parent=11 // pred_check_branch
        %428 = sbr.rel (%p426) target = $region20
      $region19: #{cell_dsformer_forward.2} parent=11 // pred_region
        %s429 = smul.u32 2, %s29
        %p430 = scmp.lt.s32.totalorder %s429, 1
        %s431 = scalar_select %p430, %s429, 1
        %s432 = smul.addr %s431, 8
        %s433 = scalar_lea.vmem %s1, %s432
        %s434 = smul.u32 2, %s29
      $region20: #{cell_dsformer_forward.2} parent=11 // pred_fallthru
        _
      // Predicated region
      $region21: #{cell_dsformer_forward.2} parent=11 // pred_check
        %p435 = pneg %p110
      $region22: #{cell_dsformer_forward.2} parent=11 // pred_check_branch
        %437 = sbr.rel (%p435) target = $region24
      $region23: #{cell_dsformer_forward.2} parent=11 // pred_region
        %s438 = smul.u32 2, %s29
        %p439 = scmp.lt.s32.totalorder %s438, 1
        %s440 = scalar_select %p439, %s438, 1
        %s441 = smul.addr %s440, 8
        %s442 = scalar_lea.vmem %s2, %s441
        %s443 = smul.u32 2, %s29
      $region24: #{cell_dsformer_forward.2} parent=11 // pred_fallthru
        _
      // Predicated region
      $region25: #{cell_dsformer_forward.2} parent=11 // pred_check
        %p444 = pneg %p313
      $region26: #{cell_dsformer_forward.2} parent=11 // pred_check_branch
        %446 = sbr.rel (%p444) target = $region28
      $region27: #{cell_dsformer_forward.2} parent=11 // pred_region
        _
      $region28: #{cell_dsformer_forward.2} parent=11 // pred_fallthru
        _
      // Predicated region
      $region29: #{cell_dsformer_forward.2} parent=11 // pred_check
        %p447 = pneg %p334
      $region30: #{cell_dsformer_forward.2} parent=11 // pred_check_branch
        %449 = sbr.rel (%p447) target = $region32
      $region31: #{cell_dsformer_forward.2} parent=11 // pred_region
        _
      $region32: #{cell_dsformer_forward.2} parent=11 // pred_fallthru
        _
      // Predicated region
      $region33: #{cell_dsformer_forward.2} parent=11 // pred_check
        %p450 = pneg %p355
      $region34: #{cell_dsformer_forward.2} parent=11 // pred_check_branch
        %452 = sbr.rel (%p450) target = $region36
      $region35: #{cell_dsformer_forward.2} parent=11 // pred_region
        _
      $region36: #{cell_dsformer_forward.2} parent=11 // pred_fallthru
        _
      // Predicated region
      $region37: #{cell_dsformer_forward.2} parent=11 // pred_check
        %p453 = pneg %p376
      $region38: #{cell_dsformer_forward.2} parent=11 // pred_check_branch
        %455 = sbr.rel (%p453) target = $region40
      $region39: #{cell_dsformer_forward.2} parent=11 // pred_region
        _
      $region40: #{cell_dsformer_forward.2} parent=11 // pred_fallthru
        _
    $region12: #{cell_dsformer_forward.2} parent=5 // pred_fallthru
      _
    %p456 = scmp.lt.s32.totalorder %s20, 6
    // Predicated region
    $region41: #{cell_dsformer_forward.2} parent=5 // pred_check
      %p457 = pneg %p456
    $region42: #{cell_dsformer_forward.2} parent=5 // pred_check_branch
      %459 = sbr.rel (%p457) target = $region44
    $region43: #{cell_dsformer_forward.2} parent=5 // pred_region
      // Predicated region
      $region45: #{cell_dsformer_forward.2} parent=43 // pred_check
        %p460 = pneg %p130
      $region46: #{cell_dsformer_forward.2} parent=43 // pred_check_branch
        %462 = sbr.rel (%p460) target = $region48
      $region47: #{cell_dsformer_forward.2} parent=43 // pred_region
        %p463 = scmp.lt.s32.totalorder %s28, 5
        %s464 = scalar_select %p463, %s28, 5
        %s465 = smul.addr %s464, 4
        %s466 = smul.addr %s465, 4
        %s467 = scalar_lea.vmem %s3, %s466
      $region48: #{cell_dsformer_forward.2} parent=43 // pred_fallthru
        _
      // Predicated region
      $region49: #{cell_dsformer_forward.2} parent=43 // pred_check
        %p468 = pneg %p156
      $region50: #{cell_dsformer_forward.2} parent=43 // pred_check_branch
        %470 = sbr.rel (%p468) target = $region52
      $region51: #{cell_dsformer_forward.2} parent=43 // pred_region
        %p471 = scmp.lt.s32.totalorder %s28, 5
        %s472 = scalar_select %p471, %s28, 5
        %s473 = scalar_lea.vmem %s4, %s472
      $region52: #{cell_dsformer_forward.2} parent=43 // pred_fallthru
        _
      // Predicated region
      $region53: #{cell_dsformer_forward.2} parent=43 // pred_check
        %p474 = pneg %p182
      $region54: #{cell_dsformer_forward.2} parent=43 // pred_check_branch
        %476 = sbr.rel (%p474) target = $region56
      $region55: #{cell_dsformer_forward.2} parent=43 // pred_region
        %p477 = scmp.lt.s32.totalorder %s28, 5
        %s478 = scalar_select %p477, %s28, 5
        %s479 = smul.addr %s478, 4
        %s480 = smul.addr %s479, 4
        %s481 = scalar_lea.vmem %s5, %s480
      $region56: #{cell_dsformer_forward.2} parent=43 // pred_fallthru
        _
      // Predicated region
      $region57: #{cell_dsformer_forward.2} parent=43 // pred_check
        %p482 = pneg %p208
      $region58: #{cell_dsformer_forward.2} parent=43 // pred_check_branch
        %484 = sbr.rel (%p482) target = $region60
      $region59: #{cell_dsformer_forward.2} parent=43 // pred_region
        %p485 = scmp.lt.s32.totalorder %s28, 5
        %s486 = scalar_select %p485, %s28, 5
        %s487 = smul.addr %s486, 4
        %s488 = smul.addr %s487, 4
        %s489 = scalar_lea.vmem %s6, %s488
      $region60: #{cell_dsformer_forward.2} parent=43 // pred_fallthru
        _
      // Predicated region
      $region61: #{cell_dsformer_forward.2} parent=43 // pred_check
        %p490 = pneg %p234
      $region62: #{cell_dsformer_forward.2} parent=43 // pred_check_branch
        %492 = sbr.rel (%p490) target = $region64
      $region63: #{cell_dsformer_forward.2} parent=43 // pred_region
        %p493 = scmp.lt.s32.totalorder %s28, 5
        %s494 = scalar_select %p493, %s28, 5
        %s495 = scalar_lea.vmem %s7, %s494
      $region64: #{cell_dsformer_forward.2} parent=43 // pred_fallthru
        _
      // Predicated region
      $region65: #{cell_dsformer_forward.2} parent=43 // pred_check
        %p496 = pneg %p260
      $region66: #{cell_dsformer_forward.2} parent=43 // pred_check_branch
        %498 = sbr.rel (%p496) target = $region68
      $region67: #{cell_dsformer_forward.2} parent=43 // pred_region
        %p499 = scmp.lt.s32.totalorder %s28, 5
        %s500 = scalar_select %p499, %s28, 5
        %s501 = smul.addr %s500, 8
        %s502 = smul.addr %s501, 4
        %s503 = scalar_lea.vmem %s8, %s502
      $region68: #{cell_dsformer_forward.2} parent=43 // pred_fallthru
        _
      // Predicated region
      $region69: #{cell_dsformer_forward.2} parent=43 // pred_check
        %p504 = pneg %p286
      $region70: #{cell_dsformer_forward.2} parent=43 // pred_check_branch
        %506 = sbr.rel (%p504) target = $region72
      $region71: #{cell_dsformer_forward.2} parent=43 // pred_region
        %p507 = scmp.lt.s32.totalorder %s28, 5
        %s508 = scalar_select %p507, %s28, 5
        %s509 = smul.addr %s508, 8
        %s510 = scalar_lea.vmem %s9, %s509
      $region72: #{cell_dsformer_forward.2} parent=43 // pred_fallthru
        _
    $region44: #{cell_dsformer_forward.2} parent=5 // pred_fallthru
      _
    %p511 = scmp.le.s32.totalorder 1, %s20
    %p512 = scmp.lt.s32.totalorder %s20, 7
    %p513 = pnand %p511, %p512
    %p514 = pneg %p513
    // Predicated region
    $region73: #{cell_dsformer_forward.2} parent=5 // pred_check
      _
    $region74: #{cell_dsformer_forward.2} parent=5 // pred_check_branch
      %516 = sbr.rel (%p513) target = $region76
    $region75: #{cell_dsformer_forward.2} parent=5 // pred_region
      %s517 = ssub.s32 %s20, 1
      %s518 = smul.u32 2, %s29
      %p519 = scmp.lt.s32.totalorder %s518, 1
      %s520 = scalar_select %p519, %s518, 1
      %s521 = smul.addr %s520, 8
      %s522 = scalar_lea.vmem %s0, %s521
      %p523 = pneg %p58
      %p524 = pneg %p55
      %s525 = smul.u32 2, %s29
      %p526 = scmp.lt.s32.totalorder %s525, 1
      %s527 = scalar_select %p526, %s525, 1
      %s528 = smul.addr %s527, 8
      %s529 = scalar_lea.vmem %s1, %s528
      %p530 = pneg %p84
      %p531 = pneg %p81
      %s532 = smul.u32 2, %s29
      %p533 = scmp.lt.s32.totalorder %s532, 1
      %s534 = scalar_select %p533, %s532, 1
      %s535 = smul.addr %s534, 8
      %s536 = scalar_lea.vmem %s2, %s535
      %p537 = pneg %p110
      %p538 = pneg %p107
      %p539 = scmp.lt.s32.totalorder %s30, 5
      %s540 = scalar_select %p539, %s30, 5
      %s541 = smul.addr %s540, 4
      %s542 = smul.addr %s541, 4
      %s543 = scalar_lea.vmem %s3, %s542
      %p544 = pneg %p136
      %p545 = pneg %p133
      %p546 = scmp.lt.s32.totalorder %s30, 5
      %s547 = scalar_select %p546, %s30, 5
      %s548 = scalar_lea.vmem %s4, %s547
      %p549 = pneg %p162
      %p550 = pneg %p159
      %p551 = scmp.lt.s32.totalorder %s30, 5
      %s552 = scalar_select %p551, %s30, 5
      %s553 = smul.addr %s552, 4
      %s554 = smul.addr %s553, 4
      %s555 = scalar_lea.vmem %s5, %s554
      %p556 = pneg %p188
      %p557 = pneg %p185
      %p558 = scmp.lt.s32.totalorder %s30, 5
      %s559 = scalar_select %p558, %s30, 5
      %s560 = smul.addr %s559, 4
      %s561 = smul.addr %s560, 4
      %s562 = scalar_lea.vmem %s6, %s561
      %p563 = pneg %p214
      %p564 = pneg %p211
      %p565 = scmp.lt.s32.totalorder %s30, 5
      %s566 = scalar_select %p565, %s30, 5
      %s567 = scalar_lea.vmem %s7, %s566
      %p568 = pneg %p240
      %p569 = pneg %p237
      %p570 = scmp.lt.s32.totalorder %s30, 5
      %s571 = scalar_select %p570, %s30, 5
      %s572 = smul.addr %s571, 8
      %s573 = smul.addr %s572, 4
      %s574 = scalar_lea.vmem %s8, %s573
      %p575 = pneg %p266
      %p576 = pneg %p263
      %p577 = scmp.lt.s32.totalorder %s30, 5
      %s578 = scalar_select %p577, %s30, 5
      %s579 = smul.addr %s578, 8
      %s580 = scalar_lea.vmem %s9, %s579
      %p581 = pneg %p292
      %p582 = pneg %p289
      %p583 = pneg %p313
      %p584 = pneg %p310
      %p585 = pneg %p334
      %p586 = pneg %p331
      %p587 = pneg %p355
      %p588 = pneg %p352
      %p589 = pneg %p376
      %p590 = pneg %p373
      %p591 = pneg %p402
      %p592 = pneg %p399
      %s593 = smul.u32 2, %s29
      %p594 = scmp.lt.s32.totalorder %s593, 1
      %s595 = scalar_select %p594, %s593, 1
      %s596 = smul.addr %s595, 8
      %s597 = scalar_lea.vmem %s14, %s596
      %s598 = smul.u32 2, %s29
      %p599 = scmp.lt.s32.totalorder %s598, 1
      %s600 = scalar_select %p599, %s598, 1
      %s601 = smul.addr %s600, 8
      %s602 = scalar_lea.vmem %s0, %s601
      %s603 = smul.u32 2, %s29
      %s604 = smul.u32 2, %s29
      %p605 = scmp.lt.s32.totalorder %s604, 1
      %s606 = scalar_select %p605, %s604, 1
      %s607 = smul.addr %s606, 8
      %s608 = scalar_lea.vmem %s1, %s607
      %s609 = smul.u32 2, %s29
      %s610 = smul.u32 2, %s29
      %p611 = scmp.lt.s32.totalorder %s610, 1
      %s612 = scalar_select %p611, %s610, 1
      %s613 = smul.addr %s612, 8
      %s614 = scalar_lea.vmem %s2, %s613
      %s615 = smul.u32 2, %s29
      %p616 = scmp.lt.s32.totalorder %s30, 5
      %s617 = scalar_select %p616, %s30, 5
      %s618 = smul.addr %s617, 4
      %s619 = smul.addr %s618, 4
      %s620 = scalar_lea.vmem %s3, %s619
      %p621 = scmp.lt.s32.totalorder %s30, 5
      %s622 = scalar_select %p621, %s30, 5
      %s623 = scalar_lea.vmem %s4, %s622
      %p624 = scmp.lt.s32.totalorder %s30, 5
      %s625 = scalar_select %p624, %s30, 5
      %s626 = smul.addr %s625, 4
      %s627 = smul.addr %s626, 4
      %s628 = scalar_lea.vmem %s5, %s627
      %p629 = scmp.lt.s32.totalorder %s30, 5
      %s630 = scalar_select %p629, %s30, 5
      %s631 = smul.addr %s630, 4
      %s632 = smul.addr %s631, 4
      %s633 = scalar_lea.vmem %s6, %s632
      %p634 = scmp.lt.s32.totalorder %s30, 5
      %s635 = scalar_select %p634, %s30, 5
      %s636 = scalar_lea.vmem %s7, %s635
      %p637 = scmp.lt.s32.totalorder %s30, 5
      %s638 = scalar_select %p637, %s30, 5
      %s639 = smul.addr %s638, 8
      %s640 = smul.addr %s639, 4
      %s641 = scalar_lea.vmem %s8, %s640
      %p642 = scmp.lt.s32.totalorder %s30, 5
      %s643 = scalar_select %p642, %s30, 5
      %s644 = smul.addr %s643, 8
      %s645 = scalar_lea.vmem %s9, %s644
      %s646 = smul.u32 2, %s29
      %p647 = scmp.lt.s32.totalorder %s646, 1
      %s648 = scalar_select %p647, %s646, 1
      %s649 = smul.addr %s648, 8
      %s650 = scalar_lea.vmem %s14, %s649
      %s651 = smul.u32 2, %s29
      %p653 = scmp.eq.s32.totalorder %s30, 0
      // Predicated region
      $region77: #{cell_dsformer_forward.2} parent=75 // pred_check
        %p654 = pneg %p653
      $region78: #{cell_dsformer_forward.2} parent=75 // pred_check_branch
        %656 = sbr.rel (%p654) target = $region80
      $region79: #{cell_dsformer_forward.2} parent=75 // pred_region
        %v657 = vld [vmem:[%s602] sm:$0xff]
        %v658 = vld [vmem:[%s602 + $0x8] sm:$0xff]
        %vm659 = vcmask 261120
        %660 = vst.msk [vmem:[#allocation2] sm:$0xff] %vm659, %v657
        %661 = vst.msk [vmem:[#allocation2 + $0x8] sm:$0xff] %vm659, %v658
      $region80: #{cell_dsformer_forward.2} parent=75 // pred_fallthru
        _
      %v662 = vld [vmem:[#allocation2] sm:$0xff]
      %v663 = vld [vmem:[#allocation2 + $0x8] sm:$0xff]
      %v664 = vld [vmem:[%s645] sm:$0x3f]
      %v665 = vpack.c.bf16 %v663, %v662
      %v666 = vld [vmem:[%s620] sm:$0xf]
      %v667 = vld [vmem:[%s620 + $0x4] sm:$0xf]
      %v668 = vld [vmem:[%s620 + $0x8] sm:$0xf]
      %v669 = vld [vmem:[%s620 + $0xc] sm:$0xf]
      %v670 = vld [vmem:[%s623] sm:$0x1]
      %v672 = vlaneseq
      %v673 = vshrl.u32 %v672, 7
      %v674 = vsub.s32 0, %v673
      %v675 = vrot.slane %v670, %v674
      %v681 = vunpack.c.l.b16 %v666
      %v682 = vunpack.c.l.b16 %v667
      %v683 = vunpack.c.l.b16 %v668
      %v684 = vunpack.c.l.b16 %v669
      %v685 = vpack.c.b16 %v682, %v681
      %v686 = vpack.c.b16 %v684, %v683
      %vm689 = vcmask 261120
      %v691 = vsel %vm689, %v665, 0
      %693 = vmatprep.subr.bf16.mxu0 0
      %694 = vmatpush1.bf16.msra.mxu0 %v685
      %695 = vmatprep.subr.bf16.mxu0 0
      %696 = vmatpush1.bf16.msra.mxu0 %v686
      %697 = vmatprep.subr.bf16.mxu0 0
      %698 = vmatpush1.bf16.msra.mxu0 0
      %699 = vmatprep.subr.bf16.mxu0 0
      %700 = vmatpush1.bf16.msra.mxu0 0
      %701 = vmatprep.subr.bf16.mxu0 0
      %702 = vmatpush1.bf16.msra.mxu0 0
      %703 = vmatprep.subr.bf16.mxu0 0
      %704 = vmatpush1.bf16.msra.mxu0 0
      %705 = vmatprep.subr.bf16.mxu0 0
      %706 = vmatpush1.bf16.msra.mxu0 0
      %707 = vmatprep.subr.bf16.mxu0 0
      %708 = vmatpush1.bf16.msra.mxu0 0
      %709 = vmatprep.subr.bf16.mxu0 0
      %710 = vmatpush1.bf16.msra.mxu0 0
      %711 = vmatprep.subr.bf16.mxu0 0
      %712 = vmatpush1.bf16.msra.mxu0 0
      %713 = vmatprep.subr.bf16.mxu0 0
      %714 = vmatpush1.bf16.msra.mxu0 0
      %715 = vmatprep.subr.bf16.mxu0 0
      %716 = vmatpush1.bf16.msra.mxu0 0
      %717 = vmatprep.subr.bf16.mxu0 0
      %718 = vmatpush1.bf16.msra.mxu0 0
      %719 = vmatprep.subr.bf16.mxu0 0
      %720 = vmatpush1.bf16.msra.mxu0 0
      %721 = vmatprep.subr.bf16.mxu0 0
      %722 = vmatpush1.bf16.msra.mxu0 0
      %723 = vmatprep.subr.bf16.mxu0 0
      %724 = vmatpush1.bf16.msra.mxu0 0
      %725 = vmatprep.mubr.bf16.mxu0 0
      %726 = vmatmul.mubr.bf16.gmra.mrb[0].mxu0 %v691
      %v727 = vpop.f32.mrb[0].mxu0
      %v728 = vadd.f32 %v675, %v727
      %v729 = vpop.f32.mrb[0].mxu0
      %v730 = vpop.f32.mrb[0].mxu0
      %v731 = vadd.f32 %v675, %v730
      %v732 = vpop.f32.mrb[0].mxu0
      %733 = vdwg.mxu0
      %736 = vrot.lane.b32.xlu0 %v728, 120
      %v737 = vpop.permute.xlu0 %736
      %738 = vrot.lane.b32.xlu0 %v731, 120
      %v739 = vpop.permute.xlu0 %738
      %742 = vrot.lane.b32.xlu0 %v728, 112
      %v743 = vpop.permute.xlu0 %742
      %744 = vrot.lane.b32.xlu0 %v731, 112
      %v745 = vpop.permute.xlu0 %744
      %748 = vrot.lane.b32.xlu0 %v728, 104
      %v749 = vpop.permute.xlu0 %748
      %750 = vrot.lane.b32.xlu0 %v731, 104
      %v751 = vpop.permute.xlu0 %750
      %v754 = vmul.f32 %v728, 0.35355338
      %v755 = vmul.f32 %v731, 0.35355338
      %v756 = vmul.f32 %v737, 0.35355338
      %v757 = vmul.f32 %v739, 0.35355338
      %v758 = vmul.f32 %v743, 0.35355338
      %v759 = vmul.f32 %v745, 0.35355338
      %v760 = vmul.f32 %v749, 0.35355338
      %v761 = vmul.f32 %v751, 0.35355338
      %v762 = vpack.c.bf16 %v754, %v754
      %v763 = vpack.c.bf16 %v755, %v755
      %v764 = vpack.c.bf16 %v756, %v756
      %v765 = vpack.c.bf16 %v757, %v757
      %v766 = vpack.c.bf16 %v758, %v758
      %v767 = vpack.c.bf16 %v759, %v759
      %v768 = vpack.c.bf16 %v760, %v760
      %v769 = vpack.c.bf16 %v761, %v761
      %v770 = vpack.c.bf16 %v728, %v728
      %v771 = vpack.c.bf16 %v731, %v731
      %v772 = vpack.c.bf16 %v737, %v737
      %v773 = vpack.c.bf16 %v739, %v739
      %v774 = vpack.c.bf16 %v743, %v743
      %v775 = vpack.c.bf16 %v745, %v745
      %v776 = vpack.c.bf16 %v749, %v749
      %v777 = vpack.c.bf16 %v751, %v751
      %779 = vrot.lane.b32.xlu0 %v770, 96
      %v780 = vpop.permute.xlu0 %779
      %vm781 = vcmask 64512
      %v783 = vsel %vm781, %v762, 0
      %v786 = vsel %vm781, %v780, 0
      %788 = vmatprep.subr.bf16.mxu0 0
      %789 = vmatpush1.bf16.xpose.msra.mxu0 %v786
      %790 = vmatprep.subr.bf16.mxu0 0
      %791 = vmatpush1.bf16.xpose.msra.mxu0 0
      %792 = vmatprep.subr.bf16.mxu0 0
      %793 = vmatpush1.bf16.xpose.msra.mxu0 0
      %794 = vmatprep.subr.bf16.mxu0 0
      %795 = vmatpush1.bf16.xpose.msra.mxu0 0
      %796 = vmatprep.subr.bf16.mxu0 0
      %797 = vmatpush1.bf16.xpose.msra.mxu0 0
      %798 = vmatprep.subr.bf16.mxu0 0
      %799 = vmatpush1.bf16.xpose.msra.mxu0 0
      %800 = vmatprep.subr.bf16.mxu0 0
      %801 = vmatpush1.bf16.xpose.msra.mxu0 0
      %802 = vmatprep.subr.bf16.mxu0 0
      %803 = vmatpush1.bf16.xpose.msra.mxu0 0
      %804 = vmatprep.subr.bf16.mxu0 0
      %805 = vmatpush1.bf16.xpose.msra.mxu0 0
      %806 = vmatprep.subr.bf16.mxu0 0
      %807 = vmatpush1.bf16.xpose.msra.mxu0 0
      %808 = vmatprep.subr.bf16.mxu0 0
      %809 = vmatpush1.bf16.xpose.msra.mxu0 0
      %810 = vmatprep.subr.bf16.mxu0 0
      %811 = vmatpush1.bf16.xpose.msra.mxu0 0
      %812 = vmatprep.subr.bf16.mxu0 0
      %813 = vmatpush1.bf16.xpose.msra.mxu0 0
      %814 = vmatprep.subr.bf16.mxu0 0
      %815 = vmatpush1.bf16.xpose.msra.mxu0 0
      %816 = vmatprep.subr.bf16.mxu0 0
      %817 = vmatpush1.bf16.xpose.msra.mxu0 0
      %818 = vmatprep.subr.bf16.mxu0 0
      %819 = vmatpush1.bf16.xpose.msra.mxu0 0
      %820 = vmatprep.mubr.bf16.mxu0 0
      %821 = vmatmul.mubr.bf16.gmra.mrb[0].mxu0 %v783
      %v822 = vpop.f32.mrb[0].mxu0
      %v823 = vadd.f32 0.0, %v822
      %v824 = vpop.f32.mrb[0].mxu0
      %v825 = vpop.f32.mrb[0].mxu0
      %v826 = vpop.f32.mrb[0].mxu0
      %827 = vdwg.mxu0
      %829 = vrot.lane.b32.xlu0 %v771, 96
      %v830 = vpop.permute.xlu0 %829
      %v832 = vsel %vm781, %v763, 0
      %v835 = vsel %vm781, %v830, 0
      %837 = vmatprep.subr.bf16.mxu0 0
      %838 = vmatpush1.bf16.xpose.msra.mxu0 %v835
      %839 = vmatprep.subr.bf16.mxu0 0
      %840 = vmatpush1.bf16.xpose.msra.mxu0 0
      %841 = vmatprep.subr.bf16.mxu0 0
      %842 = vmatpush1.bf16.xpose.msra.mxu0 0
      %843 = vmatprep.subr.bf16.mxu0 0
      %844 = vmatpush1.bf16.xpose.msra.mxu0 0
      %845 = vmatprep.subr.bf16.mxu0 0
      %846 = vmatpush1.bf16.xpose.msra.mxu0 0
      %847 = vmatprep.subr.bf16.mxu0 0
      %848 = vmatpush1.bf16.xpose.msra.mxu0 0
      %849 = vmatprep.subr.bf16.mxu0 0
      %850 = vmatpush1.bf16.xpose.msra.mxu0 0
      %851 = vmatprep.subr.bf16.mxu0 0
      %852 = vmatpush1.bf16.xpose.msra.mxu0 0
      %853 = vmatprep.subr.bf16.mxu0 0
      %854 = vmatpush1.bf16.xpose.msra.mxu0 0
      %855 = vmatprep.subr.bf16.mxu0 0
      %856 = vmatpush1.bf16.xpose.msra.mxu0 0
      %857 = vmatprep.subr.bf16.mxu0 0
      %858 = vmatpush1.bf16.xpose.msra.mxu0 0
      %859 = vmatprep.subr.bf16.mxu0 0
      %860 = vmatpush1.bf16.xpose.msra.mxu0 0
      %861 = vmatprep.subr.bf16.mxu0 0
      %862 = vmatpush1.bf16.xpose.msra.mxu0 0
      %863 = vmatprep.subr.bf16.mxu0 0
      %864 = vmatpush1.bf16.xpose.msra.mxu0 0
      %865 = vmatprep.subr.bf16.mxu0 0
      %866 = vmatpush1.bf16.xpose.msra.mxu0 0
      %867 = vmatprep.subr.bf16.mxu0 0
      %868 = vmatpush1.bf16.xpose.msra.mxu0 0
      %869 = vmatprep.mubr.bf16.mxu0 0
      %870 = vmatmul.mubr.bf16.gmra.mrb[0].mxu0 %v832
      %v871 = vpop.f32.mrb[0].mxu0
      %v872 = vadd.f32 0.0, %v871
      %v873 = vpop.f32.mrb[0].mxu0
      %v874 = vpop.f32.mrb[0].mxu0
      %v875 = vpop.f32.mrb[0].mxu0
      %876 = vdwg.mxu0
      %878 = vrot.lane.b32.xlu0 %v772, 96
      %v879 = vpop.permute.xlu0 %878
      %v881 = vsel %vm781, %v764, 0
      %v884 = vsel %vm781, %v879, 0
      %886 = vmatprep.subr.bf16.mxu0 0
      %887 = vmatpush1.bf16.xpose.msra.mxu0 %v884
      %888 = vmatprep.subr.bf16.mxu0 0
      %889 = vmatpush1.bf16.xpose.msra.mxu0 0
      %890 = vmatprep.subr.bf16.mxu0 0
      %891 = vmatpush1.bf16.xpose.msra.mxu0 0
      %892 = vmatprep.subr.bf16.mxu0 0
      %893 = vmatpush1.bf16.xpose.msra.mxu0 0
      %894 = vmatprep.subr.bf16.mxu0 0
      %895 = vmatpush1.bf16.xpose.msra.mxu0 0
      %896 = vmatprep.subr.bf16.mxu0 0
      %897 = vmatpush1.bf16.xpose.msra.mxu0 0
      %898 = vmatprep.subr.bf16.mxu0 0
      %899 = vmatpush1.bf16.xpose.msra.mxu0 0
      %900 = vmatprep.subr.bf16.mxu0 0
      %901 = vmatpush1.bf16.xpose.msra.mxu0 0
      %902 = vmatprep.subr.bf16.mxu0 0
      %903 = vmatpush1.bf16.xpose.msra.mxu0 0
      %904 = vmatprep.subr.bf16.mxu0 0
      %905 = vmatpush1.bf16.xpose.msra.mxu0 0
      %906 = vmatprep.subr.bf16.mxu0 0
      %907 = vmatpush1.bf16.xpose.msra.mxu0 0
      %908 = vmatprep.subr.bf16.mxu0 0
      %909 = vmatpush1.bf16.xpose.msra.mxu0 0
      %910 = vmatprep.subr.bf16.mxu0 0
      %911 = vmatpush1.bf16.xpose.msra.mxu0 0
      %912 = vmatprep.subr.bf16.mxu0 0
      %913 = vmatpush1.bf16.xpose.msra.mxu0 0
      %914 = vmatprep.subr.bf16.mxu0 0
      %915 = vmatpush1.bf16.xpose.msra.mxu0 0
      %916 = vmatprep.subr.bf16.mxu0 0
      %917 = vmatpush1.bf16.xpose.msra.mxu0 0
      %918 = vmatprep.mubr.bf16.mxu0 0
      %919 = vmatmul.mubr.bf16.gmra.mrb[0].mxu0 %v881
      %v920 = vpop.f32.mrb[0].mxu0
      %v921 = vadd.f32 0.0, %v920
      %v922 = vpop.f32.mrb[0].mxu0
      %v923 = vpop.f32.mrb[0].mxu0
      %v924 = vpop.f32.mrb[0].mxu0
      %925 = vdwg.mxu0
      %927 = vrot.lane.b32.xlu0 %v773, 96
      %v928 = vpop.permute.xlu0 %927
      %v930 = vsel %vm781, %v765, 0
      %v933 = vsel %vm781, %v928, 0
      %935 = vmatprep.subr.bf16.mxu0 0
      %936 = vmatpush1.bf16.xpose.msra.mxu0 %v933
      %937 = vmatprep.subr.bf16.mxu0 0
      %938 = vmatpush1.bf16.xpose.msra.mxu0 0
      %939 = vmatprep.subr.bf16.mxu0 0
      %940 = vmatpush1.bf16.xpose.msra.mxu0 0
      %941 = vmatprep.subr.bf16.mxu0 0
      %942 = vmatpush1.bf16.xpose.msra.mxu0 0
      %943 = vmatprep.subr.bf16.mxu0 0
      %944 = vmatpush1.bf16.xpose.msra.mxu0 0
      %945 = vmatprep.subr.bf16.mxu0 0
      %946 = vmatpush1.bf16.xpose.msra.mxu0 0
      %947 = vmatprep.subr.bf16.mxu0 0
      %948 = vmatpush1.bf16.xpose.msra.mxu0 0
      %949 = vmatprep.subr.bf16.mxu0 0
      %950 = vmatpush1.bf16.xpose.msra.mxu0 0
      %951 = vmatprep.subr.bf16.mxu0 0
      %952 = vmatpush1.bf16.xpose.msra.mxu0 0
      %953 = vmatprep.subr.bf16.mxu0 0
      %954 = vmatpush1.bf16.xpose.msra.mxu0 0
      %955 = vmatprep.subr.bf16.mxu0 0
      %956 = vmatpush1.bf16.xpose.msra.mxu0 0
      %957 = vmatprep.subr.bf16.mxu0 0
      %958 = vmatpush1.bf16.xpose.msra.mxu0 0
      %959 = vmatprep.subr.bf16.mxu0 0
      %960 = vmatpush1.bf16.xpose.msra.mxu0 0
      %961 = vmatprep.subr.bf16.mxu0 0
      %962 = vmatpush1.bf16.xpose.msra.mxu0 0
      %963 = vmatprep.subr.bf16.mxu0 0
      %964 = vmatpush1.bf16.xpose.msra.mxu0 0
      %965 = vmatprep.subr.bf16.mxu0 0
      %966 = vmatpush1.bf16.xpose.msra.mxu0 0
      %967 = vmatprep.mubr.bf16.mxu0 0
      %968 = vmatmul.mubr.bf16.gmra.mrb[0].mxu0 %v930
      %v969 = vpop.f32.mrb[0].mxu0
      %v970 = vadd.f32 0.0, %v969
      %v971 = vpop.f32.mrb[0].mxu0
      %v972 = vpop.f32.mrb[0].mxu0
      %v973 = vpop.f32.mrb[0].mxu0
      %974 = vdwg.mxu0
      %976 = vrot.lane.b32.xlu0 %v774, 96
      %v977 = vpop.permute.xlu0 %976
      %v979 = vsel %vm781, %v766, 0
      %v982 = vsel %vm781, %v977, 0
      %984 = vmatprep.subr.bf16.mxu0 0
      %985 = vmatpush1.bf16.xpose.msra.mxu0 %v982
      %986 = vmatprep.subr.bf16.mxu0 0
      %987 = vmatpush1.bf16.xpose.msra.mxu0 0
      %988 = vmatprep.subr.bf16.mxu0 0
      %989 = vmatpush1.bf16.xpose.msra.mxu0 0
      %990 = vmatprep.subr.bf16.mxu0 0
      %991 = vmatpush1.bf16.xpose.msra.mxu0 0
      %992 = vmatprep.subr.bf16.mxu0 0
      %993 = vmatpush1.bf16.xpose.msra.mxu0 0
      %994 = vmatprep.subr.bf16.mxu0 0
      %995 = vmatpush1.bf16.xpose.msra.mxu0 0
      %996 = vmatprep.subr.bf16.mxu0 0
      %997 = vmatpush1.bf16.xpose.msra.mxu0 0
      %998 = vmatprep.subr.bf16.mxu0 0
      %999 = vmatpush1.bf16.xpose.msra.mxu0 0
      %1000 = vmatprep.subr.bf16.mxu0 0
      %1001 = vmatpush1.bf16.xpose.msra.mxu0 0
      %1002 = vmatprep.subr.bf16.mxu0 0
      %1003 = vmatpush1.bf16.xpose.msra.mxu0 0
      %1004 = vmatprep.subr.bf16.mxu0 0
      %1005 = vmatpush1.bf16.xpose.msra.mxu0 0
      %1006 = vmatprep.subr.bf16.mxu0 0
      %1007 = vmatpush1.bf16.xpose.msra.mxu0 0
      %1008 = vmatprep.subr.bf16.mxu0 0
      %1009 = vmatpush1.bf16.xpose.msra.mxu0 0
      %1010 = vmatprep.subr.bf16.mxu0 0
      %1011 = vmatpush1.bf16.xpose.msra.mxu0 0
      %1012 = vmatprep.subr.bf16.mxu0 0
      %1013 = vmatpush1.bf16.xpose.msra.mxu0 0
      %1014 = vmatprep.subr.bf16.mxu0 0
      %1015 = vmatpush1.bf16.xpose.msra.mxu0 0
      %1016 = vmatprep.mubr.bf16.mxu0 0
      %1017 = vmatmul.mubr.bf16.gmra.mrb[0].mxu0 %v979
      %v1018 = vpop.f32.mrb[0].mxu0
      %v1019 = vadd.f32 0.0, %v1018
      %v1020 = vpop.f32.mrb[0].mxu0
      %v1021 = vpop.f32.mrb[0].mxu0
      %v1022 = vpop.f32.mrb[0].mxu0
      %1023 = vdwg.mxu0
      %1025 = vrot.lane.b32.xlu0 %v775, 96
      %v1026 = vpop.permute.xlu0 %1025
      %v1028 = vsel %vm781, %v767, 0
      %v1031 = vsel %vm781, %v1026, 0
      %1033 = vmatprep.subr.bf16.mxu0 0
      %1034 = vmatpush1.bf16.xpose.msra.mxu0 %v1031
      %1035 = vmatprep.subr.bf16.mxu0 0
      %1036 = vmatpush1.bf16.xpose.msra.mxu0 0
      %1037 = vmatprep.subr.bf16.mxu0 0
      %1038 = vmatpush1.bf16.xpose.msra.mxu0 0
      %1039 = vmatprep.subr.bf16.mxu0 0
      %1040 = vmatpush1.bf16.xpose.msra.mxu0 0
      %1041 = vmatprep.subr.bf16.mxu0 0
      %1042 = vmatpush1.bf16.xpose.msra.mxu0 0
      %1043 = vmatprep.subr.bf16.mxu0 0
      %1044 = vmatpush1.bf16.xpose.msra.mxu0 0
      %1045 = vmatprep.subr.bf16.mxu0 0
      %1046 = vmatpush1.bf16.xpose.msra.mxu0 0
      %1047 = vmatprep.subr.bf16.mxu0 0
      %1048 = vmatpush1.bf16.xpose.msra.mxu0 0
      %1049 = vmatprep.subr.bf16.mxu0 0
      %1050 = vmatpush1.bf16.xpose.msra.mxu0 0
      %1051 = vmatprep.subr.bf16.mxu0 0
      %1052 = vmatpush1.bf16.xpose.msra.mxu0 0
      %1053 = vmatprep.subr.bf16.mxu0 0
      %1054 = vmatpush1.bf16.xpose.msra.mxu0 0
      %1055 = vmatprep.subr.bf16.mxu0 0
      %1056 = vmatpush1.bf16.xpose.msra.mxu0 0
      %1057 = vmatprep.subr.bf16.mxu0 0
      %1058 = vmatpush1.bf16.xpose.msra.mxu0 0
      %1059 = vmatprep.subr.bf16.mxu0 0
      %1060 = vmatpush1.bf16.xpose.msra.mxu0 0
      %1061 = vmatprep.subr.bf16.mxu0 0
      %1062 = vmatpush1.bf16.xpose.msra.mxu0 0
      %1063 = vmatprep.subr.bf16.mxu0 0
      %1064 = vmatpush1.bf16.xpose.msra.mxu0 0
      %1065 = vmatprep.mubr.bf16.mxu0 0
      %1066 = vmatmul.mubr.bf16.gmra.mrb[0].mxu0 %v1028
      %v1067 = vpop.f32.mrb[0].mxu0
      %v1068 = vadd.f32 0.0, %v1067
      %v1069 = vpop.f32.mrb[0].mxu0
      %v1070 = vpop.f32.mrb[0].mxu0
      %v1071 = vpop.f32.mrb[0].mxu0
      %1072 = vdwg.mxu0
      %1074 = vrot.lane.b32.xlu0 %v776, 96
      %v1075 = vpop.permute.xlu0 %1074
      %v1077 = vsel %vm781, %v768, 0
      %v1080 = vsel %vm781, %v1075, 0
      %1082 = vmatprep.subr.bf16.mxu0 0
      %1083 = vmatpush1.bf16.xpose.msra.mxu0 %v1080
      %1084 = vmatprep.subr.bf16.mxu0 0
      %1085 = vmatpush1.bf16.xpose.msra.mxu0 0
      %1086 = vmatprep.subr.bf16.mxu0 0
      %1087 = vmatpush1.bf16.xpose.msra.mxu0 0
      %1088 = vmatprep.subr.bf16.mxu0 0
      %1089 = vmatpush1.bf16.xpose.msra.mxu0 0
      %1090 = vmatprep.subr.bf16.mxu0 0
      %1091 = vmatpush1.bf16.xpose.msra.mxu0 0
      %1092 = vmatprep.subr.bf16.mxu0 0
      %1093 = vmatpush1.bf16.xpose.msra.mxu0 0
      %1094 = vmatprep.subr.bf16.mxu0 0
      %1095 = vmatpush1.bf16.xpose.msra.mxu0 0
      %1096 = vmatprep.subr.bf16.mxu0 0
      %1097 = vmatpush1.bf16.xpose.msra.mxu0 0
      %1098 = vmatprep.subr.bf16.mxu0 0
      %1099 = vmatpush1.bf16.xpose.msra.mxu0 0
      %1100 = vmatprep.subr.bf16.mxu0 0
      %1101 = vmatpush1.bf16.xpose.msra.mxu0 0
      %1102 = vmatprep.subr.bf16.mxu0 0
      %1103 = vmatpush1.bf16.xpose.msra.mxu0 0
      %1104 = vmatprep.subr.bf16.mxu0 0
      %1105 = vmatpush1.bf16.xpose.msra.mxu0 0
      %1106 = vmatprep.subr.bf16.mxu0 0
      %1107 = vmatpush1.bf16.xpose.msra.mxu0 0
      %1108 = vmatprep.subr.bf16.mxu0 0
      %1109 = vmatpush1.bf16.xpose.msra.mxu0 0
      %1110 = vmatprep.subr.bf16.mxu0 0
      %1111 = vmatpush1.bf16.xpose.msra.mxu0 0
      %1112 = vmatprep.subr.bf16.mxu0 0
      %1113 = vmatpush1.bf16.xpose.msra.mxu0 0
      %1114 = vmatprep.mubr.bf16.mxu0 0
      %1115 = vmatmul.mubr.bf16.gmra.mrb[0].mxu0 %v1077
      %v1116 = vpop.f32.mrb[0].mxu0
      %v1117 = vadd.f32 0.0, %v1116
      %v1118 = vpop.f32.mrb[0].mxu0
      %v1119 = vpop.f32.mrb[0].mxu0
      %v1120 = vpop.f32.mrb[0].mxu0
      %1121 = vdwg.mxu0
      %1123 = vrot.lane.b32.xlu0 %v777, 96
      %v1124 = vpop.permute.xlu0 %1123
      %v1126 = vsel %vm781, %v769, 0
      %v1129 = vsel %vm781, %v1124, 0
      %1131 = vmatprep.subr.bf16.mxu0 0
      %1132 = vmatpush1.bf16.xpose.msra.mxu0 %v1129
      %1133 = vmatprep.subr.bf16.mxu0 0
      %1134 = vmatpush1.bf16.xpose.msra.mxu0 0
      %1135 = vmatprep.subr.bf16.mxu0 0
      %1136 = vmatpush1.bf16.xpose.msra.mxu0 0
      %1137 = vmatprep.subr.bf16.mxu0 0
      %1138 = vmatpush1.bf16.xpose.msra.mxu0 0
      %1139 = vmatprep.subr.bf16.mxu0 0
      %1140 = vmatpush1.bf16.xpose.msra.mxu0 0
      %1141 = vmatprep.subr.bf16.mxu0 0
      %1142 = vmatpush1.bf16.xpose.msra.mxu0 0
      %1143 = vmatprep.subr.bf16.mxu0 0
      %1144 = vmatpush1.bf16.xpose.msra.mxu0 0
      %1145 = vmatprep.subr.bf16.mxu0 0
      %1146 = vmatpush1.bf16.xpose.msra.mxu0 0
      %1147 = vmatprep.subr.bf16.mxu0 0
      %1148 = vmatpush1.bf16.xpose.msra.mxu0 0
      %1149 = vmatprep.subr.bf16.mxu0 0
      %1150 = vmatpush1.bf16.xpose.msra.mxu0 0
      %1151 = vmatprep.subr.bf16.mxu0 0
      %1152 = vmatpush1.bf16.xpose.msra.mxu0 0
      %1153 = vmatprep.subr.bf16.mxu0 0
      %1154 = vmatpush1.bf16.xpose.msra.mxu0 0
      %1155 = vmatprep.subr.bf16.mxu0 0
      %1156 = vmatpush1.bf16.xpose.msra.mxu0 0
      %1157 = vmatprep.subr.bf16.mxu0 0
      %1158 = vmatpush1.bf16.xpose.msra.mxu0 0
      %1159 = vmatprep.subr.bf16.mxu0 0
      %1160 = vmatpush1.bf16.xpose.msra.mxu0 0
      %1161 = vmatprep.subr.bf16.mxu0 0
      %1162 = vmatpush1.bf16.xpose.msra.mxu0 0
      %1163 = vmatprep.mubr.bf16.mxu0 0
      %1164 = vmatmul.mubr.bf16.gmra.mrb[0].mxu0 %v1126
      %v1165 = vpop.f32.mrb[0].mxu0
      %v1166 = vadd.f32 0.0, %v1165
      %v1167 = vpop.f32.mrb[0].mxu0
      %v1168 = vpop.f32.mrb[0].mxu0
      %v1169 = vpop.f32.mrb[0].mxu0
      %1170 = vdwg.mxu0
      %v1171 = vsel %vm781, %v823, -inf
      %1172 = vmax.xlane.f32.xlu0 %v1171
      %v1173 = vpop.xlane.xlu0 %1172
      %v1174 = vsel %vm781, %v872, -inf
      %1175 = vmax.xlane.f32.xlu0 %v1174
      %v1176 = vpop.xlane.xlu0 %1175
      %v1177 = vsel %vm781, %v921, -inf
      %1178 = vmax.xlane.f32.xlu0 %v1177
      %v1179 = vpop.xlane.xlu0 %1178
      %v1180 = vsel %vm781, %v970, -inf
      %1181 = vmax.xlane.f32.xlu0 %v1180
      %v1182 = vpop.xlane.xlu0 %1181
      %v1183 = vsel %vm781, %v1019, -inf
      %1184 = vmax.xlane.f32.xlu0 %v1183
      %v1185 = vpop.xlane.xlu0 %1184
      %v1186 = vsel %vm781, %v1068, -inf
      %1187 = vmax.xlane.f32.xlu0 %v1186
      %v1188 = vpop.xlane.xlu0 %1187
      %v1189 = vsel %vm781, %v1117, -inf
      %1190 = vmax.xlane.f32.xlu0 %v1189
      %v1191 = vpop.xlane.xlu0 %1190
      %v1192 = vsel %vm781, %v1166, -inf
      %1193 = vmax.xlane.f32.xlu0 %v1192
      %v1194 = vpop.xlane.xlu0 %1193
      %v1195 = vsub.f32 %v823, %v1173
      %v1196 = vsub.f32 %v872, %v1176
      %v1197 = vsub.f32 %v921, %v1179
      %v1198 = vsub.f32 %v970, %v1182
      %v1199 = vsub.f32 %v1019, %v1185
      %v1200 = vsub.f32 %v1068, %v1188
      %v1201 = vsub.f32 %v1117, %v1191
      %v1202 = vsub.f32 %v1166, %v1194
      %v1203 = vmul.f32 %v1195, 1.442695
      %v1204 = vpow.pop %v1203
      %v1205 = vmul.f32 %v1196, 1.442695
      %v1206 = vpow.pop %v1205
      %v1207 = vmul.f32 %v1197, 1.442695
      %v1208 = vpow.pop %v1207
      %v1209 = vmul.f32 %v1198, 1.442695
      %v1210 = vpow.pop %v1209
      %v1211 = vmul.f32 %v1199, 1.442695
      %v1212 = vpow.pop %v1211
      %v1213 = vmul.f32 %v1200, 1.442695
      %v1214 = vpow.pop %v1213
      %v1215 = vmul.f32 %v1201, 1.442695
      %v1216 = vpow.pop %v1215
      %v1217 = vmul.f32 %v1202, 1.442695
      %v1218 = vpow.pop %v1217
      %v1219 = vsel %vm781, %v1204, 0.0
      %1220 = vadd.xlane.f32.xlu0 %v1219
      %v1221 = vpop.xlane.xlu0 %1220
      %v1222 = vsel %vm781, %v1206, 0.0
      %1223 = vadd.xlane.f32.xlu0 %v1222
      %v1224 = vpop.xlane.xlu0 %1223
      %v1225 = vsel %vm781, %v1208, 0.0
      %1226 = vadd.xlane.f32.xlu0 %v1225
      %v1227 = vpop.xlane.xlu0 %1226
      %v1228 = vsel %vm781, %v1210, 0.0
      %1229 = vadd.xlane.f32.xlu0 %v1228
      %v1230 = vpop.xlane.xlu0 %1229
      %v1231 = vsel %vm781, %v1212, 0.0
      %1232 = vadd.xlane.f32.xlu0 %v1231
      %v1233 = vpop.xlane.xlu0 %1232
      %v1234 = vsel %vm781, %v1214, 0.0
      %1235 = vadd.xlane.f32.xlu0 %v1234
      %v1236 = vpop.xlane.xlu0 %1235
      %v1237 = vsel %vm781, %v1216, 0.0
      %1238 = vadd.xlane.f32.xlu0 %v1237
      %v1239 = vpop.xlane.xlu0 %1238
      %v1240 = vsel %vm781, %v1218, 0.0
      %1241 = vadd.xlane.f32.xlu0 %v1240
      %v1242 = vpop.xlane.xlu0 %1241
      %v1243 = vrcp.pop %v1221
      %v1244 = vrcp.pop %v1224
      %v1245 = vrcp.pop %v1227
      %v1246 = vrcp.pop %v1230
      %v1247 = vrcp.pop %v1233
      %v1248 = vrcp.pop %v1236
      %v1249 = vrcp.pop %v1239
      %v1250 = vrcp.pop %v1242
      %v1251 = vmul.f32 %v1204, %v1243
      %v1252 = vmul.f32 %v1206, %v1244
      %v1253 = vmul.f32 %v1208, %v1245
      %v1254 = vmul.f32 %v1210, %v1246
      %v1255 = vmul.f32 %v1212, %v1247
      %v1256 = vmul.f32 %v1214, %v1248
      %v1257 = vmul.f32 %v1216, %v1249
      %v1258 = vmul.f32 %v1218, %v1250
      %v1259 = vpack.c.bf16 %v1251, %v1251
      %v1260 = vpack.c.bf16 %v1252, %v1252
      %v1261 = vpack.c.bf16 %v1253, %v1253
      %v1262 = vpack.c.bf16 %v1254, %v1254
      %v1263 = vpack.c.bf16 %v1255, %v1255
      %v1264 = vpack.c.bf16 %v1256, %v1256
      %v1265 = vpack.c.bf16 %v1257, %v1257
      %v1266 = vpack.c.bf16 %v1258, %v1258
      %1267 = vrot.lane.b32.xlu0 %v770, 64
      %v1268 = vpop.permute.xlu0 %1267
      %v1270 = vsel %vm781, %v1259, 0
      %vm1272 = vcmask 1043456
      %v1274 = vsel %vm1272, %v1268, 0
      %1276 = vmatprep.subr.bf16.mxu0 0
      %1277 = vmatpush1.bf16.msra.mxu0 %v1274
      %1278 = vmatprep.subr.bf16.mxu0 0
      %1279 = vmatpush1.bf16.msra.mxu0 0
      %1280 = vmatprep.subr.bf16.mxu0 0
      %1281 = vmatpush1.bf16.msra.mxu0 0
      %1282 = vmatprep.subr.bf16.mxu0 0
      %1283 = vmatpush1.bf16.msra.mxu0 0
      %1284 = vmatprep.subr.bf16.mxu0 0
      %1285 = vmatpush1.bf16.msra.mxu0 0
      %1286 = vmatprep.subr.bf16.mxu0 0
      %1287 = vmatpush1.bf16.msra.mxu0 0
      %1288 = vmatprep.subr.bf16.mxu0 0
      %1289 = vmatpush1.bf16.msra.mxu0 0
      %1290 = vmatprep.subr.bf16.mxu0 0
      %1291 = vmatpush1.bf16.msra.mxu0 0
      %1292 = vmatprep.subr.bf16.mxu0 0
      %1293 = vmatpush1.bf16.msra.mxu0 0
      %1294 = vmatprep.subr.bf16.mxu0 0
      %1295 = vmatpush1.bf16.msra.mxu0 0
      %1296 = vmatprep.subr.bf16.mxu0 0
      %1297 = vmatpush1.bf16.msra.mxu0 0
      %1298 = vmatprep.subr.bf16.mxu0 0
      %1299 = vmatpush1.bf16.msra.mxu0 0
      %1300 = vmatprep.subr.bf16.mxu0 0
      %1301 = vmatpush1.bf16.msra.mxu0 0
      %1302 = vmatprep.subr.bf16.mxu0 0
      %1303 = vmatpush1.bf16.msra.mxu0 0
      %1304 = vmatprep.subr.bf16.mxu0 0
      %1305 = vmatpush1.bf16.msra.mxu0 0
      %1306 = vmatprep.subr.bf16.mxu0 0
      %1307 = vmatpush1.bf16.msra.mxu0 0
      %1308 = vmatprep.mubr.bf16.mxu0 0
      %1309 = vmatmul.mubr.bf16.gmra.mrb[0].mxu0 %v1270
      %v1310 = vpop.f32.mrb[0].mxu0
      %v1311 = vadd.f32 0.0, %v1310
      %v1312 = vpop.f32.mrb[0].mxu0
      %v1313 = vpop.f32.mrb[0].mxu0
      %v1314 = vpop.f32.mrb[0].mxu0
      %1315 = vdwg.mxu0
      %1316 = vrot.lane.b32.xlu0 %v771, 64
      %v1317 = vpop.permute.xlu0 %1316
      %v1319 = vsel %vm781, %v1260, 0
      %v1322 = vsel %vm1272, %v1317, 0
      %1324 = vmatprep.subr.bf16.mxu0 0
      %1325 = vmatpush1.bf16.msra.mxu0 %v1322
      %1326 = vmatprep.subr.bf16.mxu0 0
      %1327 = vmatpush1.bf16.msra.mxu0 0
      %1328 = vmatprep.subr.bf16.mxu0 0
      %1329 = vmatpush1.bf16.msra.mxu0 0
      %1330 = vmatprep.subr.bf16.mxu0 0
      %1331 = vmatpush1.bf16.msra.mxu0 0
      %1332 = vmatprep.subr.bf16.mxu0 0
      %1333 = vmatpush1.bf16.msra.mxu0 0
      %1334 = vmatprep.subr.bf16.mxu0 0
      %1335 = vmatpush1.bf16.msra.mxu0 0
      %1336 = vmatprep.subr.bf16.mxu0 0
      %1337 = vmatpush1.bf16.msra.mxu0 0
      %1338 = vmatprep.subr.bf16.mxu0 0
      %1339 = vmatpush1.bf16.msra.mxu0 0
      %1340 = vmatprep.subr.bf16.mxu0 0
      %1341 = vmatpush1.bf16.msra.mxu0 0
      %1342 = vmatprep.subr.bf16.mxu0 0
      %1343 = vmatpush1.bf16.msra.mxu0 0
      %1344 = vmatprep.subr.bf16.mxu0 0
      %1345 = vmatpush1.bf16.msra.mxu0 0
      %1346 = vmatprep.subr.bf16.mxu0 0
      %1347 = vmatpush1.bf16.msra.mxu0 0
      %1348 = vmatprep.subr.bf16.mxu0 0
      %1349 = vmatpush1.bf16.msra.mxu0 0
      %1350 = vmatprep.subr.bf16.mxu0 0
      %1351 = vmatpush1.bf16.msra.mxu0 0
      %1352 = vmatprep.subr.bf16.mxu0 0
      %1353 = vmatpush1.bf16.msra.mxu0 0
      %1354 = vmatprep.subr.bf16.mxu0 0
      %1355 = vmatpush1.bf16.msra.mxu0 0
      %1356 = vmatprep.mubr.bf16.mxu0 0
      %1357 = vmatmul.mubr.bf16.gmra.mrb[0].mxu0 %v1319
      %v1358 = vpop.f32.mrb[0].mxu0
      %v1359 = vadd.f32 0.0, %v1358
      %v1360 = vpop.f32.mrb[0].mxu0
      %v1361 = vpop.f32.mrb[0].mxu0
      %v1362 = vpop.f32.mrb[0].mxu0
      %1363 = vdwg.mxu0
      %1364 = vrot.lane.b32.xlu0 %v772, 64
      %v1365 = vpop.permute.xlu0 %1364
      %v1367 = vsel %vm781, %v1261, 0
      %v1370 = vsel %vm1272, %v1365, 0
      %1372 = vmatprep.subr.bf16.mxu0 0
      %1373 = vmatpush1.bf16.msra.mxu0 %v1370
      %1374 = vmatprep.subr.bf16.mxu0 0
      %1375 = vmatpush1.bf16.msra.mxu0 0
      %1376 = vmatprep.subr.bf16.mxu0 0
      %1377 = vmatpush1.bf16.msra.mxu0 0
      %1378 = vmatprep.subr.bf16.mxu0 0
      %1379 = vmatpush1.bf16.msra.mxu0 0
      %1380 = vmatprep.subr.bf16.mxu0 0
      %1381 = vmatpush1.bf16.msra.mxu0 0
      %1382 = vmatprep.subr.bf16.mxu0 0
      %1383 = vmatpush1.bf16.msra.mxu0 0
      %1384 = vmatprep.subr.bf16.mxu0 0
      %1385 = vmatpush1.bf16.msra.mxu0 0
      %1386 = vmatprep.subr.bf16.mxu0 0
      %1387 = vmatpush1.bf16.msra.mxu0 0
      %1388 = vmatprep.subr.bf16.mxu0 0
      %1389 = vmatpush1.bf16.msra.mxu0 0
      %1390 = vmatprep.subr.bf16.mxu0 0
      %1391 = vmatpush1.bf16.msra.mxu0 0
      %1392 = vmatprep.subr.bf16.mxu0 0
      %1393 = vmatpush1.bf16.msra.mxu0 0
      %1394 = vmatprep.subr.bf16.mxu0 0
      %1395 = vmatpush1.bf16.msra.mxu0 0
      %1396 = vmatprep.subr.bf16.mxu0 0
      %1397 = vmatpush1.bf16.msra.mxu0 0
      %1398 = vmatprep.subr.bf16.mxu0 0
      %1399 = vmatpush1.bf16.msra.mxu0 0
      %1400 = vmatprep.subr.bf16.mxu0 0
      %1401 = vmatpush1.bf16.msra.mxu0 0
      %1402 = vmatprep.subr.bf16.mxu0 0
      %1403 = vmatpush1.bf16.msra.mxu0 0
      %1404 = vmatprep.mubr.bf16.mxu0 0
      %1405 = vmatmul.mubr.bf16.gmra.mrb[0].mxu0 %v1367
      %v1406 = vpop.f32.mrb[0].mxu0
      %v1407 = vadd.f32 0.0, %v1406
      %v1408 = vpop.f32.mrb[0].mxu0
      %v1409 = vpop.f32.mrb[0].mxu0
      %v1410 = vpop.f32.mrb[0].mxu0
      %1411 = vdwg.mxu0
      %1412 = vrot.lane.b32.xlu0 %v773, 64
      %v1413 = vpop.permute.xlu0 %1412
      %v1415 = vsel %vm781, %v1262, 0
      %v1418 = vsel %vm1272, %v1413, 0
      %1420 = vmatprep.subr.bf16.mxu0 0
      %1421 = vmatpush1.bf16.msra.mxu0 %v1418
      %1422 = vmatprep.subr.bf16.mxu0 0
      %1423 = vmatpush1.bf16.msra.mxu0 0
      %1424 = vmatprep.subr.bf16.mxu0 0
      %1425 = vmatpush1.bf16.msra.mxu0 0
      %1426 = vmatprep.subr.bf16.mxu0 0
      %1427 = vmatpush1.bf16.msra.mxu0 0
      %1428 = vmatprep.subr.bf16.mxu0 0
      %1429 = vmatpush1.bf16.msra.mxu0 0
      %1430 = vmatprep.subr.bf16.mxu0 0
      %1431 = vmatpush1.bf16.msra.mxu0 0
      %1432 = vmatprep.subr.bf16.mxu0 0
      %1433 = vmatpush1.bf16.msra.mxu0 0
      %1434 = vmatprep.subr.bf16.mxu0 0
      %1435 = vmatpush1.bf16.msra.mxu0 0
      %1436 = vmatprep.subr.bf16.mxu0 0
      %1437 = vmatpush1.bf16.msra.mxu0 0
      %1438 = vmatprep.subr.bf16.mxu0 0
      %1439 = vmatpush1.bf16.msra.mxu0 0
      %1440 = vmatprep.subr.bf16.mxu0 0
      %1441 = vmatpush1.bf16.msra.mxu0 0
      %1442 = vmatprep.subr.bf16.mxu0 0
      %1443 = vmatpush1.bf16.msra.mxu0 0
      %1444 = vmatprep.subr.bf16.mxu0 0
      %1445 = vmatpush1.bf16.msra.mxu0 0
      %1446 = vmatprep.subr.bf16.mxu0 0
      %1447 = vmatpush1.bf16.msra.mxu0 0
      %1448 = vmatprep.subr.bf16.mxu0 0
      %1449 = vmatpush1.bf16.msra.mxu0 0
      %1450 = vmatprep.subr.bf16.mxu0 0
      %1451 = vmatpush1.bf16.msra.mxu0 0
      %1452 = vmatprep.mubr.bf16.mxu0 0
      %1453 = vmatmul.mubr.bf16.gmra.mrb[0].mxu0 %v1415
      %v1454 = vpop.f32.mrb[0].mxu0
      %v1455 = vadd.f32 0.0, %v1454
      %v1456 = vpop.f32.mrb[0].mxu0
      %v1457 = vpop.f32.mrb[0].mxu0
      %v1458 = vpop.f32.mrb[0].mxu0
      %1459 = vdwg.mxu0
      %1460 = vrot.lane.b32.xlu0 %v774, 64
      %v1461 = vpop.permute.xlu0 %1460
      %v1463 = vsel %vm781, %v1263, 0
      %v1466 = vsel %vm1272, %v1461, 0
      %1468 = vmatprep.subr.bf16.mxu0 0
      %1469 = vmatpush1.bf16.msra.mxu0 %v1466
      %1470 = vmatprep.subr.bf16.mxu0 0
      %1471 = vmatpush1.bf16.msra.mxu0 0
      %1472 = vmatprep.subr.bf16.mxu0 0
      %1473 = vmatpush1.bf16.msra.mxu0 0
      %1474 = vmatprep.subr.bf16.mxu0 0
      %1475 = vmatpush1.bf16.msra.mxu0 0
      %1476 = vmatprep.subr.bf16.mxu0 0
      %1477 = vmatpush1.bf16.msra.mxu0 0
      %1478 = vmatprep.subr.bf16.mxu0 0
      %1479 = vmatpush1.bf16.msra.mxu0 0
      %1480 = vmatprep.subr.bf16.mxu0 0
      %1481 = vmatpush1.bf16.msra.mxu0 0
      %1482 = vmatprep.subr.bf16.mxu0 0
      %1483 = vmatpush1.bf16.msra.mxu0 0
      %1484 = vmatprep.subr.bf16.mxu0 0
      %1485 = vmatpush1.bf16.msra.mxu0 0
      %1486 = vmatprep.subr.bf16.mxu0 0
      %1487 = vmatpush1.bf16.msra.mxu0 0
      %1488 = vmatprep.subr.bf16.mxu0 0
      %1489 = vmatpush1.bf16.msra.mxu0 0
      %1490 = vmatprep.subr.bf16.mxu0 0
      %1491 = vmatpush1.bf16.msra.mxu0 0
      %1492 = vmatprep.subr.bf16.mxu0 0
      %1493 = vmatpush1.bf16.msra.mxu0 0
      %1494 = vmatprep.subr.bf16.mxu0 0
      %1495 = vmatpush1.bf16.msra.mxu0 0
      %1496 = vmatprep.subr.bf16.mxu0 0
      %1497 = vmatpush1.bf16.msra.mxu0 0
      %1498 = vmatprep.subr.bf16.mxu0 0
      %1499 = vmatpush1.bf16.msra.mxu0 0
      %1500 = vmatprep.mubr.bf16.mxu0 0
      %1501 = vmatmul.mubr.bf16.gmra.mrb[0].mxu0 %v1463
      %v1502 = vpop.f32.mrb[0].mxu0
      %v1503 = vadd.f32 0.0, %v1502
      %v1504 = vpop.f32.mrb[0].mxu0
      %v1505 = vpop.f32.mrb[0].mxu0
      %v1506 = vpop.f32.mrb[0].mxu0
      %1507 = vdwg.mxu0
      %1508 = vrot.lane.b32.xlu0 %v775, 64
      %v1509 = vpop.permute.xlu0 %1508
      %v1511 = vsel %vm781, %v1264, 0
      %v1514 = vsel %vm1272, %v1509, 0
      %1516 = vmatprep.subr.bf16.mxu0 0
      %1517 = vmatpush1.bf16.msra.mxu0 %v1514
      %1518 = vmatprep.subr.bf16.mxu0 0
      %1519 = vmatpush1.bf16.msra.mxu0 0
      %1520 = vmatprep.subr.bf16.mxu0 0
      %1521 = vmatpush1.bf16.msra.mxu0 0
      %1522 = vmatprep.subr.bf16.mxu0 0
      %1523 = vmatpush1.bf16.msra.mxu0 0
      %1524 = vmatprep.subr.bf16.mxu0 0
      %1525 = vmatpush1.bf16.msra.mxu0 0
      %1526 = vmatprep.subr.bf16.mxu0 0
      %1527 = vmatpush1.bf16.msra.mxu0 0
      %1528 = vmatprep.subr.bf16.mxu0 0
      %1529 = vmatpush1.bf16.msra.mxu0 0
      %1530 = vmatprep.subr.bf16.mxu0 0
      %1531 = vmatpush1.bf16.msra.mxu0 0
      %1532 = vmatprep.subr.bf16.mxu0 0
      %1533 = vmatpush1.bf16.msra.mxu0 0
      %1534 = vmatprep.subr.bf16.mxu0 0
      %1535 = vmatpush1.bf16.msra.mxu0 0
      %1536 = vmatprep.subr.bf16.mxu0 0
      %1537 = vmatpush1.bf16.msra.mxu0 0
      %1538 = vmatprep.subr.bf16.mxu0 0
      %1539 = vmatpush1.bf16.msra.mxu0 0
      %1540 = vmatprep.subr.bf16.mxu0 0
      %1541 = vmatpush1.bf16.msra.mxu0 0
      %1542 = vmatprep.subr.bf16.mxu0 0
      %1543 = vmatpush1.bf16.msra.mxu0 0
      %1544 = vmatprep.subr.bf16.mxu0 0
      %1545 = vmatpush1.bf16.msra.mxu0 0
      %1546 = vmatprep.subr.bf16.mxu0 0
      %1547 = vmatpush1.bf16.msra.mxu0 0
      %1548 = vmatprep.mubr.bf16.mxu0 0
      %1549 = vmatmul.mubr.bf16.gmra.mrb[0].mxu0 %v1511
      %v1550 = vpop.f32.mrb[0].mxu0
      %v1551 = vadd.f32 0.0, %v1550
      %v1552 = vpop.f32.mrb[0].mxu0
      %v1553 = vpop.f32.mrb[0].mxu0
      %v1554 = vpop.f32.mrb[0].mxu0
      %1555 = vdwg.mxu0
      %1556 = vrot.lane.b32.xlu0 %v776, 64
      %v1557 = vpop.permute.xlu0 %1556
      %v1559 = vsel %vm781, %v1265, 0
      %v1562 = vsel %vm1272, %v1557, 0
      %1564 = vmatprep.subr.bf16.mxu0 0
      %1565 = vmatpush1.bf16.msra.mxu0 %v1562
      %1566 = vmatprep.subr.bf16.mxu0 0
      %1567 = vmatpush1.bf16.msra.mxu0 0
      %1568 = vmatprep.subr.bf16.mxu0 0
      %1569 = vmatpush1.bf16.msra.mxu0 0
      %1570 = vmatprep.subr.bf16.mxu0 0
      %1571 = vmatpush1.bf16.msra.mxu0 0
      %1572 = vmatprep.subr.bf16.mxu0 0
      %1573 = vmatpush1.bf16.msra.mxu0 0
      %1574 = vmatprep.subr.bf16.mxu0 0
      %1575 = vmatpush1.bf16.msra.mxu0 0
      %1576 = vmatprep.subr.bf16.mxu0 0
      %1577 = vmatpush1.bf16.msra.mxu0 0
      %1578 = vmatprep.subr.bf16.mxu0 0
      %1579 = vmatpush1.bf16.msra.mxu0 0
      %1580 = vmatprep.subr.bf16.mxu0 0
      %1581 = vmatpush1.bf16.msra.mxu0 0
      %1582 = vmatprep.subr.bf16.mxu0 0
      %1583 = vmatpush1.bf16.msra.mxu0 0
      %1584 = vmatprep.subr.bf16.mxu0 0
      %1585 = vmatpush1.bf16.msra.mxu0 0
      %1586 = vmatprep.subr.bf16.mxu0 0
      %1587 = vmatpush1.bf16.msra.mxu0 0
      %1588 = vmatprep.subr.bf16.mxu0 0
      %1589 = vmatpush1.bf16.msra.mxu0 0
      %1590 = vmatprep.subr.bf16.mxu0 0
      %1591 = vmatpush1.bf16.msra.mxu0 0
      %1592 = vmatprep.subr.bf16.mxu0 0
      %1593 = vmatpush1.bf16.msra.mxu0 0
      %1594 = vmatprep.subr.bf16.mxu0 0
      %1595 = vmatpush1.bf16.msra.mxu0 0
      %1596 = vmatprep.mubr.bf16.mxu0 0
      %1597 = vmatmul.mubr.bf16.gmra.mrb[0].mxu0 %v1559
      %v1598 = vpop.f32.mrb[0].mxu0
      %v1599 = vadd.f32 0.0, %v1598
      %v1600 = vpop.f32.mrb[0].mxu0
      %v1601 = vpop.f32.mrb[0].mxu0
      %v1602 = vpop.f32.mrb[0].mxu0
      %1603 = vdwg.mxu0
      %1604 = vrot.lane.b32.xlu0 %v777, 64
      %v1605 = vpop.permute.xlu0 %1604
      %v1607 = vsel %vm781, %v1266, 0
      %v1610 = vsel %vm1272, %v1605, 0
      %1612 = vmatprep.subr.bf16.mxu0 0
      %1613 = vmatpush1.bf16.msra.mxu0 %v1610
      %1614 = vmatprep.subr.bf16.mxu0 0
      %1615 = vmatpush1.bf16.msra.mxu0 0
      %1616 = vmatprep.subr.bf16.mxu0 0
      %1617 = vmatpush1.bf16.msra.mxu0 0
      %1618 = vmatprep.subr.bf16.mxu0 0
      %1619 = vmatpush1.bf16.msra.mxu0 0
      %1620 = vmatprep.subr.bf16.mxu0 0
      %1621 = vmatpush1.bf16.msra.mxu0 0
      %1622 = vmatprep.subr.bf16.mxu0 0
      %1623 = vmatpush1.bf16.msra.mxu0 0
      %1624 = vmatprep.subr.bf16.mxu0 0
      %1625 = vmatpush1.bf16.msra.mxu0 0
      %1626 = vmatprep.subr.bf16.mxu0 0
      %1627 = vmatpush1.bf16.msra.mxu0 0
      %1628 = vmatprep.subr.bf16.mxu0 0
      %1629 = vmatpush1.bf16.msra.mxu0 0
      %1630 = vmatprep.subr.bf16.mxu0 0
      %1631 = vmatpush1.bf16.msra.mxu0 0
      %1632 = vmatprep.subr.bf16.mxu0 0
      %1633 = vmatpush1.bf16.msra.mxu0 0
      %1634 = vmatprep.subr.bf16.mxu0 0
      %1635 = vmatpush1.bf16.msra.mxu0 0
      %1636 = vmatprep.subr.bf16.mxu0 0
      %1637 = vmatpush1.bf16.msra.mxu0 0
      %1638 = vmatprep.subr.bf16.mxu0 0
      %1639 = vmatpush1.bf16.msra.mxu0 0
      %1640 = vmatprep.subr.bf16.mxu0 0
      %1641 = vmatpush1.bf16.msra.mxu0 0
      %1642 = vmatprep.subr.bf16.mxu0 0
      %1643 = vmatpush1.bf16.msra.mxu0 0
      %1644 = vmatprep.mubr.bf16.mxu0 0
      %1645 = vmatmul.mubr.bf16.gmra.mrb[0].mxu0 %v1607
      %v1646 = vpop.f32.mrb[0].mxu0
      %v1647 = vadd.f32 0.0, %v1646
      %v1648 = vpop.f32.mrb[0].mxu0
      %v1649 = vpop.f32.mrb[0].mxu0
      %v1650 = vpop.f32.mrb[0].mxu0
      %1651 = vdwg.mxu0
      %1654 = vrot.lane.b32.xlu0 %v1407, 8
      %v1655 = vpop.permute.xlu0 %1654
      %1656 = vrot.lane.b32.xlu0 %v1455, 8
      %v1657 = vpop.permute.xlu0 %1656
      %1662 = vrot.lane.b32.xlu0 %v1503, 16
      %v1663 = vpop.permute.xlu0 %1662
      %1664 = vrot.lane.b32.xlu0 %v1551, 16
      %v1665 = vpop.permute.xlu0 %1664
      %1670 = vrot.lane.b32.xlu0 %v1599, 24
      %v1671 = vpop.permute.xlu0 %1670
      %1672 = vrot.lane.b32.xlu0 %v1647, 24
      %v1673 = vpop.permute.xlu0 %1672
      %v1676 = vsel %vm781, %v1311, %v1655
      %v1677 = vsel %vm781, %v1359, %v1657
      %vm1678 = vcmask 130048
      %v1679 = vsel %vm1678, %v1676, %v1663
      %v1680 = vsel %vm1678, %v1677, %v1665
      %vm1681 = vcmask 195584
      %v1682 = vsel %vm1681, %v1679, %v1671
      %v1683 = vsel %vm1681, %v1680, %v1673
      %v1684 = vpack.c.bf16 %v1683, %v1682
      %v1685 = vld [vmem:[%s628] sm:$0xf]
      %v1686 = vld [vmem:[%s628 + $0x4] sm:$0xf]
      %v1687 = vld [vmem:[%s628 + $0x8] sm:$0xf]
      %v1688 = vld [vmem:[%s628 + $0xc] sm:$0xf]
      %v1689 = vlaneseq
      %v1690 = vshrl.u32 %v1689, 7
      %v1691 = vsub.s32 0, %v1690
      %v1692 = vrot.slane %v664, %v1691
      %v1697 = vunpack.c.l.b16 %v1685
      %v1698 = vunpack.c.l.b16 %v1686
      %v1699 = vunpack.c.l.b16 %v1687
      %v1700 = vunpack.c.l.b16 %v1688
      %v1701 = vpack.c.b16 %v1698, %v1697
      %v1702 = vpack.c.b16 %v1700, %v1699
      %v1706 = vsel %vm689, %v1684, 0
      %1708 = vmatprep.subr.bf16.mxu0 0
      %1709 = vmatpush1.bf16.msra.mxu0 %v1701
      %1710 = vmatprep.subr.bf16.mxu0 0
      %1711 = vmatpush1.bf16.msra.mxu0 %v1702
      %1712 = vmatprep.subr.bf16.mxu0 0
      %1713 = vmatpush1.bf16.msra.mxu0 0
      %1714 = vmatprep.subr.bf16.mxu0 0
      %1715 = vmatpush1.bf16.msra.mxu0 0
      %1716 = vmatprep.subr.bf16.mxu0 0
      %1717 = vmatpush1.bf16.msra.mxu0 0
      %1718 = vmatprep.subr.bf16.mxu0 0
      %1719 = vmatpush1.bf16.msra.mxu0 0
      %1720 = vmatprep.subr.bf16.mxu0 0
      %1721 = vmatpush1.bf16.msra.mxu0 0
      %1722 = vmatprep.subr.bf16.mxu0 0
      %1723 = vmatpush1.bf16.msra.mxu0 0
      %1724 = vmatprep.subr.bf16.mxu0 0
      %1725 = vmatpush1.bf16.msra.mxu0 0
      %1726 = vmatprep.subr.bf16.mxu0 0
      %1727 = vmatpush1.bf16.msra.mxu0 0
      %1728 = vmatprep.subr.bf16.mxu0 0
      %1729 = vmatpush1.bf16.msra.mxu0 0
      %1730 = vmatprep.subr.bf16.mxu0 0
      %1731 = vmatpush1.bf16.msra.mxu0 0
      %1732 = vmatprep.subr.bf16.mxu0 0
      %1733 = vmatpush1.bf16.msra.mxu0 0
      %1734 = vmatprep.subr.bf16.mxu0 0
      %1735 = vmatpush1.bf16.msra.mxu0 0
      %1736 = vmatprep.subr.bf16.mxu0 0
      %1737 = vmatpush1.bf16.msra.mxu0 0
      %1738 = vmatprep.subr.bf16.mxu0 0
      %1739 = vmatpush1.bf16.msra.mxu0 0
      %1740 = vmatprep.mubr.bf16.mxu0 0
      %1741 = vmatmul.mubr.bf16.gmra.mrb[0].mxu0 %v1706
      %v1742 = vpop.f32.mrb[0].mxu0
      %v1743 = vadd.f32 %v1692, %v1742
      %v1744 = vpop.f32.mrb[0].mxu0
      %v1745 = vpop.f32.mrb[0].mxu0
      %v1746 = vadd.f32 %v1692, %v1745
      %v1747 = vpop.f32.mrb[0].mxu0
      %1748 = vdwg.mxu0
      %v1749 = vadd.f32 %v662, %v1743
      %v1750 = vadd.f32 %v663, %v1746
      %v1751 = vsel %vm689, %v1749, 0.0
      %1752 = vadd.xlane.f32.xlu0 %v1751
      %v1753 = vpop.xlane.xlu0 %1752
      %v1754 = vsel %vm689, %v1750, 0.0
      %1755 = vadd.xlane.f32.xlu0 %v1754
      %v1756 = vpop.xlane.xlu0 %1755
      %v1757 = vrcp.pop 32.0
      %v1758 = vmul.f32 %v1753, %v1757
      %v1759 = vmul.f32 %v1756, %v1757
      %v1760 = vsub.f32 %v1749, %v1758
      %v1761 = vsub.f32 %v1750, %v1759
      %v1762 = vmul.f32 %v1760, %v1760
      %v1763 = vmul.f32 %v1761, %v1761
      %v1764 = vsel %vm689, %v1762, 0.0
      %1765 = vadd.xlane.f32.xlu0 %v1764
      %v1766 = vpop.xlane.xlu0 %1765
      %v1767 = vsel %vm689, %v1763, 0.0
      %1768 = vadd.xlane.f32.xlu0 %v1767
      %v1769 = vpop.xlane.xlu0 %1768
      %v1770 = vmul.f32 %v1766, %v1757
      %v1771 = vmul.f32 %v1769, %v1757
      %v1772 = vadd.f32 %v1770, 1e-05
      %v1773 = vadd.f32 %v1771, 1e-05
      %v1774 = vrsqrt.pop %v1772
      %v1775 = vrsqrt.pop %v1773
      %v1776 = vmul.f32 %v1760, %v1774
      %v1777 = vmul.f32 %v1761, %v1775
      %v1778 = vlaneseq
      %v1779 = vshrl.u32 %v1778, 7
      %v1780 = vsub.s32 1, %v1779
      %v1781 = vrot.slane %v664, %v1780
      %v1782 = vmul.f32 %v1776, %v1781
      %v1783 = vmul.f32 %v1777, %v1781
      %v1784 = vlaneseq
      %v1785 = vshrl.u32 %v1784, 7
      %v1786 = vsub.s32 2, %v1785
      %v1787 = vrot.slane %v664, %v1786
      %v1788 = vadd.f32 %v1782, %v1787
      %v1789 = vadd.f32 %v1783, %v1787
      %v1790 = vpack.c.bf16 %v1789, %v1788
      %v1791 = vld [vmem:[%s633] sm:$0xf]
      %v1792 = vld [vmem:[%s633 + $0x4] sm:$0xf]
      %v1793 = vld [vmem:[%s633 + $0x8] sm:$0xf]
      %v1794 = vld [vmem:[%s633 + $0xc] sm:$0xf]
      %v1795 = vld [vmem:[%s636] sm:$0x1]
      %v1797 = vlaneseq
      %v1798 = vshrl.u32 %v1797, 7
      %v1799 = vsub.s32 0, %v1798
      %v1800 = vrot.slane %v1795, %v1799
      %v1806 = vunpack.c.l.b16 %v1791
      %v1807 = vunpack.c.l.b16 %v1792
      %v1808 = vunpack.c.l.b16 %v1793
      %v1809 = vunpack.c.l.b16 %v1794
      %v1810 = vpack.c.b16 %v1807, %v1806
      %v1811 = vpack.c.b16 %v1809, %v1808
      %v1815 = vsel %vm689, %v1790, 0
      %1817 = vmatprep.subr.bf16.mxu0 0
      %1818 = vmatpush1.bf16.msra.mxu0 %v1810
      %1819 = vmatprep.subr.bf16.mxu0 0
      %1820 = vmatpush1.bf16.msra.mxu0 %v1811
      %1821 = vmatprep.subr.bf16.mxu0 0
      %1822 = vmatpush1.bf16.msra.mxu0 0
      %1823 = vmatprep.subr.bf16.mxu0 0
      %1824 = vmatpush1.bf16.msra.mxu0 0
      %1825 = vmatprep.subr.bf16.mxu0 0
      %1826 = vmatpush1.bf16.msra.mxu0 0
      %1827 = vmatprep.subr.bf16.mxu0 0
      %1828 = vmatpush1.bf16.msra.mxu0 0
      %1829 = vmatprep.subr.bf16.mxu0 0
      %1830 = vmatpush1.bf16.msra.mxu0 0
      %1831 = vmatprep.subr.bf16.mxu0 0
      %1832 = vmatpush1.bf16.msra.mxu0 0
      %1833 = vmatprep.subr.bf16.mxu0 0
      %1834 = vmatpush1.bf16.msra.mxu0 0
      %1835 = vmatprep.subr.bf16.mxu0 0
      %1836 = vmatpush1.bf16.msra.mxu0 0
      %1837 = vmatprep.subr.bf16.mxu0 0
      %1838 = vmatpush1.bf16.msra.mxu0 0
      %1839 = vmatprep.subr.bf16.mxu0 0
      %1840 = vmatpush1.bf16.msra.mxu0 0
      %1841 = vmatprep.subr.bf16.mxu0 0
      %1842 = vmatpush1.bf16.msra.mxu0 0
      %1843 = vmatprep.subr.bf16.mxu0 0
      %1844 = vmatpush1.bf16.msra.mxu0 0
      %1845 = vmatprep.subr.bf16.mxu0 0
      %1846 = vmatpush1.bf16.msra.mxu0 0
      %1847 = vmatprep.subr.bf16.mxu0 0
      %1848 = vmatpush1.bf16.msra.mxu0 0
      %1849 = vmatprep.mubr.bf16.mxu0 0
      %1850 = vmatmul.mubr.bf16.gmra.mrb[0].mxu0 %v1815
      %v1851 = vpop.f32.mrb[0].mxu0
      %v1852 = vadd.f32 %v1800, %v1851
      %v1853 = vpop.f32.mrb[0].mxu0
      %v1854 = vpop.f32.mrb[0].mxu0
      %v1855 = vadd.f32 %v1800, %v1854
      %v1856 = vpop.f32.mrb[0].mxu0
      %1857 = vdwg.mxu0
      %v1858 = vmax.f32 %v1852, 0.0
      %v1859 = vmax.f32 %v1855, 0.0
      %v1860 = vpack.c.bf16 %v1859, %v1858
      %v1861 = vld [vmem:[%s641] sm:$0xf]
      %v1862 = vld [vmem:[%s641 + $0x4] sm:$0xf]
      %v1863 = vld [vmem:[%s641 + $0x8] sm:$0xf]
      %v1864 = vld [vmem:[%s641 + $0xc] sm:$0xf]
      %v1865 = vld [vmem:[%s641 + $0x10] sm:$0xf]
      %v1866 = vld [vmem:[%s641 + $0x14] sm:$0xf]
      %v1867 = vld [vmem:[%s641 + $0x18] sm:$0xf]
      %v1868 = vld [vmem:[%s641 + $0x1c] sm:$0xf]
      %v1869 = vlaneseq
      %v1870 = vshrl.u32 %v1869, 7
      %v1871 = vsub.s32 3, %v1870
      %v1872 = vrot.slane %v664, %v1871
      %v1881 = vunpack.c.l.b16 %v1861
      %v1882 = vunpack.c.l.b16 %v1862
      %v1883 = vunpack.c.l.b16 %v1863
      %v1884 = vunpack.c.l.b16 %v1864
      %v1885 = vunpack.c.l.b16 %v1865
      %v1886 = vunpack.c.l.b16 %v1866
      %v1887 = vunpack.c.l.b16 %v1867
      %v1888 = vunpack.c.l.b16 %v1868
      %v1889 = vpack.c.b16 %v1882, %v1881
      %v1890 = vpack.c.b16 %v1884, %v1883
      %v1891 = vpack.c.b16 %v1886, %v1885
      %v1892 = vpack.c.b16 %v1888, %v1887
      %vm1897 = vcmask 523264
      %v1899 = vsel %vm1897, %v1860, 0
      %1901 = vmatprep.subr.bf16.mxu0 0
      %1902 = vmatpush1.bf16.msra.mxu0 %v1889
      %1903 = vmatprep.subr.bf16.mxu0 0
      %1904 = vmatpush1.bf16.msra.mxu0 %v1890
      %1905 = vmatprep.subr.bf16.mxu0 0
      %1906 = vmatpush1.bf16.msra.mxu0 %v1891
      %1907 = vmatprep.subr.bf16.mxu0 0
      %1908 = vmatpush1.bf16.msra.mxu0 %v1892
      %1909 = vmatprep.subr.bf16.mxu0 0
      %1910 = vmatpush1.bf16.msra.mxu0 0
      %1911 = vmatprep.subr.bf16.mxu0 0
      %1912 = vmatpush1.bf16.msra.mxu0 0
      %1913 = vmatprep.subr.bf16.mxu0 0
      %1914 = vmatpush1.bf16.msra.mxu0 0
      %1915 = vmatprep.subr.bf16.mxu0 0
      %1916 = vmatpush1.bf16.msra.mxu0 0
      %1917 = vmatprep.subr.bf16.mxu0 0
      %1918 = vmatpush1.bf16.msra.mxu0 0
      %1919 = vmatprep.subr.bf16.mxu0 0
      %1920 = vmatpush1.bf16.msra.mxu0 0
      %1921 = vmatprep.subr.bf16.mxu0 0
      %1922 = vmatpush1.bf16.msra.mxu0 0
      %1923 = vmatprep.subr.bf16.mxu0 0
      %1924 = vmatpush1.bf16.msra.mxu0 0
      %1925 = vmatprep.subr.bf16.mxu0 0
      %1926 = vmatpush1.bf16.msra.mxu0 0
      %1927 = vmatprep.subr.bf16.mxu0 0
      %1928 = vmatpush1.bf16.msra.mxu0 0
      %1929 = vmatprep.subr.bf16.mxu0 0
      %1930 = vmatpush1.bf16.msra.mxu0 0
      %1931 = vmatprep.subr.bf16.mxu0 0
      %1932 = vmatpush1.bf16.msra.mxu0 0
      %1933 = vmatprep.mubr.bf16.mxu0 0
      %1934 = vmatmul.mubr.bf16.gmra.mrb[0].mxu0 %v1899
      %v1935 = vpop.f32.mrb[0].mxu0
      %v1936 = vadd.f32 %v1872, %v1935
      %v1937 = vpop.f32.mrb[0].mxu0
      %v1938 = vpop.f32.mrb[0].mxu0
      %v1939 = vadd.f32 %v1872, %v1938
      %v1940 = vpop.f32.mrb[0].mxu0
      %1941 = vdwg.mxu0
      %v1942 = vadd.f32 %v1788, %v1936
      %v1943 = vadd.f32 %v1789, %v1939
      %v1944 = vsel %vm689, %v1942, 0.0
      %1945 = vadd.xlane.f32.xlu0 %v1944
      %v1946 = vpop.xlane.xlu0 %1945
      %v1947 = vsel %vm689, %v1943, 0.0
      %1948 = vadd.xlane.f32.xlu0 %v1947
      %v1949 = vpop.xlane.xlu0 %1948
      %v1950 = vmul.f32 %v1946, %v1757
      %v1951 = vmul.f32 %v1949, %v1757
      %v1952 = vsub.f32 %v1942, %v1950
      %v1953 = vsub.f32 %v1943, %v1951
      %v1954 = vmul.f32 %v1952, %v1952
      %v1955 = vmul.f32 %v1953, %v1953
      %v1956 = vsel %vm689, %v1954, 0.0
      %1957 = vadd.xlane.f32.xlu0 %v1956
      %v1958 = vpop.xlane.xlu0 %1957
      %v1959 = vsel %vm689, %v1955, 0.0
      %1960 = vadd.xlane.f32.xlu0 %v1959
      %v1961 = vpop.xlane.xlu0 %1960
      %v1962 = vmul.f32 %v1958, %v1757
      %v1963 = vmul.f32 %v1961, %v1757
      %v1964 = vadd.f32 %v1962, 1e-05
      %v1965 = vadd.f32 %v1963, 1e-05
      %v1966 = vrsqrt.pop %v1964
      %v1967 = vrsqrt.pop %v1965
      %v1968 = vmul.f32 %v1952, %v1966
      %v1969 = vmul.f32 %v1953, %v1967
      %v1970 = vlaneseq
      %v1971 = vshrl.u32 %v1970, 7
      %v1972 = vsub.s32 4, %v1971
      %v1973 = vrot.slane %v664, %v1972
      %v1974 = vmul.f32 %v1968, %v1973
      %v1975 = vmul.f32 %v1969, %v1973
      %v1976 = vlaneseq
      %v1977 = vshrl.u32 %v1976, 7
      %v1978 = vsub.s32 5, %v1977
      %v1979 = vrot.slane %v664, %v1978
      %v1980 = vadd.f32 %v1974, %v1979
      %v1981 = vadd.f32 %v1975, %v1979
      // Predicated region
      $region81: #{cell_dsformer_forward.2} parent=75 // pred_check
        %p1982 = pneg %p653
      $region82: #{cell_dsformer_forward.2} parent=75 // pred_check_branch
        %1984 = sbr.rel (%p1982) target = $region84
      $region83: #{cell_dsformer_forward.2} parent=75 // pred_region
        %v1985 = vld [vmem:[%s608] sm:$0xff]
        %v1986 = vld [vmem:[%s608 + $0x8] sm:$0xff]
        %1989 = vrot.lane.b32.xlu0 %v1985, 32
        %v1990 = vpop.permute.xlu0 %1989
        %1991 = vrot.lane.b32.xlu0 %v1986, 32
        %v1992 = vpop.permute.xlu0 %1991
        %v1995 = vsel %vm689, %v1980, %v1990
        %v1996 = vsel %vm689, %v1981, %v1992
        %v1997 = vpack.c.bf16 %v1996, %v1995
        %v1998 = vld [vmem:[%s10] sm:$0xf]
        %v1999 = vld [vmem:[%s10 + $0x4] sm:$0xf]
        %v2000 = vld [vmem:[%s10 + $0x8] sm:$0xf]
        %v2001 = vld [vmem:[%s10 + $0xc] sm:$0xf]
        %v2002 = vld [vmem:[%s10 + $0x10] sm:$0xf]
        %v2003 = vld [vmem:[%s10 + $0x14] sm:$0xf]
        %v2004 = vld [vmem:[%s10 + $0x18] sm:$0xf]
        %v2005 = vld [vmem:[%s10 + $0x1c] sm:$0xf]
        %v2006 = vld [vmem:[%s11] sm:$0x1]
        %v2008 = vlaneseq
        %v2009 = vshrl.u32 %v2008, 7
        %v2010 = vsub.s32 0, %v2009
        %v2011 = vrot.slane %v2006, %v2010
        %v2021 = vunpack.c.l.b16 %v1998
        %v2022 = vunpack.c.l.b16 %v1999
        %v2023 = vunpack.c.l.b16 %v2000
        %v2024 = vunpack.c.l.b16 %v2001
        %v2025 = vunpack.c.l.b16 %v2002
        %v2026 = vunpack.c.l.b16 %v2003
        %v2027 = vunpack.c.l.b16 %v2004
        %v2028 = vunpack.c.l.b16 %v2005
        %v2029 = vpack.c.b16 %v2022, %v2021
        %v2030 = vpack.c.b16 %v2024, %v2023
        %v2031 = vpack.c.b16 %v2026, %v2025
        %v2032 = vpack.c.b16 %v2028, %v2027
        %v2038 = vsel %vm1897, %v1997, 0
        %2040 = vmatprep.subr.bf16.mxu0 0
        %2041 = vmatpush1.bf16.msra.mxu0 %v2029
        %2042 = vmatprep.subr.bf16.mxu0 0
        %2043 = vmatpush1.bf16.msra.mxu0 %v2030
        %2044 = vmatprep.subr.bf16.mxu0 0
        %2045 = vmatpush1.bf16.msra.mxu0 %v2031
        %2046 = vmatprep.subr.bf16.mxu0 0
        %2047 = vmatpush1.bf16.msra.mxu0 %v2032
        %2048 = vmatprep.subr.bf16.mxu0 0
        %2049 = vmatpush1.bf16.msra.mxu0 0
        %2050 = vmatprep.subr.bf16.mxu0 0
        %2051 = vmatpush1.bf16.msra.mxu0 0
        %2052 = vmatprep.subr.bf16.mxu0 0
        %2053 = vmatpush1.bf16.msra.mxu0 0
        %2054 = vmatprep.subr.bf16.mxu0 0
        %2055 = vmatpush1.bf16.msra.mxu0 0
        %2056 = vmatprep.subr.bf16.mxu0 0
        %2057 = vmatpush1.bf16.msra.mxu0 0
        %2058 = vmatprep.subr.bf16.mxu0 0
        %2059 = vmatpush1.bf16.msra.mxu0 0
        %2060 = vmatprep.subr.bf16.mxu0 0
        %2061 = vmatpush1.bf16.msra.mxu0 0
        %2062 = vmatprep.subr.bf16.mxu0 0
        %2063 = vmatpush1.bf16.msra.mxu0 0
        %2064 = vmatprep.subr.bf16.mxu0 0
        %2065 = vmatpush1.bf16.msra.mxu0 0
        %2066 = vmatprep.subr.bf16.mxu0 0
        %2067 = vmatpush1.bf16.msra.mxu0 0
        %2068 = vmatprep.subr.bf16.mxu0 0
        %2069 = vmatpush1.bf16.msra.mxu0 0
        %2070 = vmatprep.subr.bf16.mxu0 0
        %2071 = vmatpush1.bf16.msra.mxu0 0
        %2072 = vmatprep.mubr.bf16.mxu0 0
        %2073 = vmatmul.mubr.bf16.gmra.mrb[0].mxu0 %v2038
        %v2074 = vpop.f32.mrb[0].mxu0
        %v2075 = vadd.f32 %v2011, %v2074
        %v2076 = vpop.f32.mrb[0].mxu0
        %v2077 = vpop.f32.mrb[0].mxu0
        %v2078 = vadd.f32 %v2011, %v2077
        %v2079 = vpop.f32.mrb[0].mxu0
        %2080 = vdwg.mxu0
        %v2081 = vmax.f32 %v2075, 0.0
        %v2082 = vmax.f32 %v2078, 0.0
        %2083 = vst.msk [vmem:[#allocation2] sm:$0xff] %vm689, %v2081
        %2084 = vst.msk [vmem:[#allocation2 + $0x8] sm:$0xff] %vm689, %v2082
      $region84: #{cell_dsformer_forward.2} parent=75 // pred_fallthru
        _
      %p2085 = scmp.gt.s32.totalorder %s30, 0
      // Predicated region
      $region85: #{cell_dsformer_forward.2} parent=75 // pred_check
        %p2086 = pneg %p2085
      $region86: #{cell_dsformer_forward.2} parent=75 // pred_check_branch
        %2088 = sbr.rel (%p2086) target = $region88
      $region87: #{cell_dsformer_forward.2} parent=75 // pred_region
        %2089 = vst.msk [vmem:[#allocation2] sm:$0xff] %vm689, %v1980
        %2090 = vst.msk [vmem:[#allocation2 + $0x8] sm:$0xff] %vm689, %v1981
      $region88: #{cell_dsformer_forward.2} parent=75 // pred_fallthru
        _
      %p2091 = scmp.eq.s32.totalorder %s30, 5
      // Predicated region
      $region89: #{cell_dsformer_forward.2} parent=75 // pred_check
        %p2092 = pneg %p2091
      $region90: #{cell_dsformer_forward.2} parent=75 // pred_check_branch
        %2094 = sbr.rel (%p2092) target = $region92
      $region91: #{cell_dsformer_forward.2} parent=75 // pred_region
        %v2095 = vld [vmem:[%s614] sm:$0xff]
        %v2096 = vld [vmem:[%s614 + $0x8] sm:$0xff]
        %2099 = vrot.lane.b32.xlu0 %v2095, 32
        %v2100 = vpop.permute.xlu0 %2099
        %2101 = vrot.lane.b32.xlu0 %v2096, 32
        %v2102 = vpop.permute.xlu0 %2101
        %v2105 = vsel %vm689, %v1980, %v2100
        %v2106 = vsel %vm689, %v1981, %v2102
        %v2107 = vpack.c.bf16 %v2106, %v2105
        %v2108 = vld [vmem:[%s12] sm:$0xf]
        %v2109 = vld [vmem:[%s12 + $0x4] sm:$0xf]
        %v2110 = vld [vmem:[%s12 + $0x8] sm:$0xf]
        %v2111 = vld [vmem:[%s12 + $0xc] sm:$0xf]
        %v2112 = vld [vmem:[%s12 + $0x10] sm:$0xf]
        %v2113 = vld [vmem:[%s12 + $0x14] sm:$0xf]
        %v2114 = vld [vmem:[%s12 + $0x18] sm:$0xf]
        %v2115 = vld [vmem:[%s12 + $0x1c] sm:$0xf]
        %v2116 = vld [vmem:[%s13] sm:$0x1]
        %v2118 = vlaneseq
        %v2119 = vshrl.u32 %v2118, 7
        %v2120 = vsub.s32 0, %v2119
        %v2121 = vrot.slane %v2116, %v2120
        %v2131 = vunpack.c.l.b16 %v2108
        %v2132 = vunpack.c.l.b16 %v2109
        %v2133 = vunpack.c.l.b16 %v2110
        %v2134 = vunpack.c.l.b16 %v2111
        %v2135 = vunpack.c.l.b16 %v2112
        %v2136 = vunpack.c.l.b16 %v2113
        %v2137 = vunpack.c.l.b16 %v2114
        %v2138 = vunpack.c.l.b16 %v2115
        %v2139 = vpack.c.b16 %v2132, %v2131
        %v2140 = vpack.c.b16 %v2134, %v2133
        %v2141 = vpack.c.b16 %v2136, %v2135
        %v2142 = vpack.c.b16 %v2138, %v2137
        %v2148 = vsel %vm1897, %v2107, 0
        %2150 = vmatprep.subr.bf16.mxu0 0
        %2151 = vmatpush1.bf16.msra.mxu0 %v2139
        %2152 = vmatprep.subr.bf16.mxu0 0
        %2153 = vmatpush1.bf16.msra.mxu0 %v2140
        %2154 = vmatprep.subr.bf16.mxu0 0
        %2155 = vmatpush1.bf16.msra.mxu0 %v2141
        %2156 = vmatprep.subr.bf16.mxu0 0
        %2157 = vmatpush1.bf16.msra.mxu0 %v2142
        %2158 = vmatprep.subr.bf16.mxu0 0
        %2159 = vmatpush1.bf16.msra.mxu0 0
        %2160 = vmatprep.subr.bf16.mxu0 0
        %2161 = vmatpush1.bf16.msra.mxu0 0
        %2162 = vmatprep.subr.bf16.mxu0 0
        %2163 = vmatpush1.bf16.msra.mxu0 0
        %2164 = vmatprep.subr.bf16.mxu0 0
        %2165 = vmatpush1.bf16.msra.mxu0 0
        %2166 = vmatprep.subr.bf16.mxu0 0
        %2167 = vmatpush1.bf16.msra.mxu0 0
        %2168 = vmatprep.subr.bf16.mxu0 0
        %2169 = vmatpush1.bf16.msra.mxu0 0
        %2170 = vmatprep.subr.bf16.mxu0 0
        %2171 = vmatpush1.bf16.msra.mxu0 0
        %2172 = vmatprep.subr.bf16.mxu0 0
        %2173 = vmatpush1.bf16.msra.mxu0 0
        %2174 = vmatprep.subr.bf16.mxu0 0
        %2175 = vmatpush1.bf16.msra.mxu0 0
        %2176 = vmatprep.subr.bf16.mxu0 0
        %2177 = vmatpush1.bf16.msra.mxu0 0
        %2178 = vmatprep.subr.bf16.mxu0 0
        %2179 = vmatpush1.bf16.msra.mxu0 0
        %2180 = vmatprep.subr.bf16.mxu0 0
        %2181 = vmatpush1.bf16.msra.mxu0 0
        %2182 = vmatprep.mubr.bf16.mxu0 0
        %2183 = vmatmul.mubr.bf16.gmra.mrb[0].mxu0 %v2148
        %v2184 = vpop.f32.mrb[0].mxu0
        %v2185 = vadd.f32 %v2121, %v2184
        %v2186 = vpop.f32.mrb[0].mxu0
        %v2187 = vpop.f32.mrb[0].mxu0
        %v2188 = vadd.f32 %v2121, %v2187
        %v2189 = vpop.f32.mrb[0].mxu0
        %2190 = vdwg.mxu0
        %v2191 = vmax.f32 %v2185, 0.0
        %v2192 = vmax.f32 %v2188, 0.0
        %2193 = vst.msk [vmem:[%s650] sm:$0xff] %vm689, %v2191
        %2194 = vst.msk [vmem:[%s650 + $0x8] sm:$0xff] %vm689, %v2192
      $region92: #{cell_dsformer_forward.2} parent=75 // pred_fallthru
        _
      %s2195 = smul.u32 2, %s29
      %p2196 = scmp.lt.s32.totalorder %s2195, 1
      %s2197 = scalar_select %p2196, %s2195, 1
      %s2198 = smul.addr %s2197, 8
      %s2199 = scalar_lea.vmem %s14, %s2198
      // Predicated region
      $region93: #{cell_dsformer_forward.2} parent=75 // pred_check
        %p2200 = pneg %p399
      $region94: #{cell_dsformer_forward.2} parent=75 // pred_check_branch
        %2202 = sbr.rel (%p2200) target = $region96
      $region95: #{cell_dsformer_forward.2} parent=75 // pred_region
        %s2203 = smul.u32 2, %s29
      $region96: #{cell_dsformer_forward.2} parent=75 // pred_fallthru
        _
      // Predicated region
      $region97: #{cell_dsformer_forward.2} parent=75 // pred_check
        %p2204 = pneg %p399
      $region98: #{cell_dsformer_forward.2} parent=75 // pred_check_branch
        %2206 = sbr.rel (%p2204) target = $region100
      $region99: #{cell_dsformer_forward.2} parent=75 // pred_region
        %s2207 = smul.u32 2, %s29
        %p2208 = scmp.lt.s32.totalorder %s2207, 1
        %s2209 = scalar_select %p2208, %s2207, 1
        %s2210 = smul.addr %s2209, 8
        %s2211 = scalar_lea.vmem %s14, %s2210
      $region100: #{cell_dsformer_forward.2} parent=75 // pred_fallthru
        _
    $region76: #{cell_dsformer_forward.2} parent=5 // pred_fallthru
      _
    %p2212 = scmp.le.s32.totalorder 2, %s20
    // Predicated region
    $region101: #{cell_dsformer_forward.2} parent=5 // pred_check
      %p2213 = pneg %p2212
    $region102: #{cell_dsformer_forward.2} parent=5 // pred_check_branch
      %2215 = sbr.rel (%p2213) target = $region104
    $region103: #{cell_dsformer_forward.2} parent=5 // pred_region
      %s2216 = ssub.s32 %s20, 2
    $region104: #{cell_dsformer_forward.2} parent=5 // pred_fallthru
      _
  $region6: #{cell_dsformer_forward.2} parent=0 // loop_footer
    %s24 = sadd.s32 1, %s20
  $region7: #{cell_dsformer_forward.2} parent=0 // loop_footer_branch
    %19 = sbr.rel target = $region3
  $region8: #{cell_dsformer_forward.2} parent=0 // loop_exit
    _

</llo_original>
